<compile_context>
chip_gen: v5e
topology: v5e:2x2
jax: 0.10.0
libtpu: 0.0.40
codegen_flags: <defaults>
</compile_context>

<pallas_src>
import functools

import jax
import jax.numpy as jnp
from jax.experimental import pallas as pl
from jax.experimental.pallas import tpu as pltpu

# ----------------------- small, self-consistent config ----------------------
LATENT_DIM = 32          # latent_dim
VOCAB_SIZE = 26          # vocab_size
HIDDEN = 32              # hidden_size
INTERMEDIATE = 64        # intermediate_size
NUM_LAYERS = 2           # num_hidden_layers
NUM_HEADS = 4            # num_attention_heads
HEAD_DIM = HIDDEN // NUM_HEADS
RMS_EPS = 1e-6           # LlamaConfig default rms_norm_eps
ROPE_THETA = 10000.0     # LlamaConfig default rope_theta
N_HEAD_OUT = 3 + 2 + 21  # node_type(3) + continuous(2) + connectivity(21)
OUT_LANES = 128          # lane-dense fused output width

VMEM = pl.BlockSpec(memory_space=pltpu.MemorySpace.VMEM)


# ------------------------------ fused kernel ---------------------------------
def _fused_decoder_kernel(x_ref, rope_ref, mask_ref, w_attn_ref, w_mlp_ref,
                          norms_ref, w_out_ref, out_ref,
                          *, num_layers, num_heads, eps, exact_softmax):
    f32 = jnp.float32
    H = x_ref.shape[-1]

    def mm(a, b):
        return jnp.dot(a, b, preferred_element_type=f32)

    def mm_bt(a, b):  # a @ b.T  via dot_general contracting last dims (no transpose)
        return jax.lax.dot_general(a, b, (((1,), (1,)), ((), ())),
                                   preferred_element_type=f32)

    def rmsnorm(x, w):
        var = jnp.mean(x * x, axis=-1, keepdims=True)
        return x * jax.lax.rsqrt(var + eps) * w

    x = x_ref[...]             # (N, H)   pre-assembled input, batch flattened into rows
    cos = rope_ref[0]          # (N, Dh)
    sin = rope_ref[1]          # (N, Dh)  rotate_half sign already folded in
    mask = mask_ref[...]       # (N, N)   additive block-diag causal + padding mask

    for layer in range(num_layers):
        # ----------------------- self-attention -----------------------
        h = rmsnorm(x, norms_ref[2 * layer])
        attn = jnp.zeros_like(x)
        for hd in range(num_heads):                 # static, fully unrolled
            base = (layer * num_heads + hd) * 6
            q = mm(h, w_attn_ref[base + 0])         # (N, Dh)   1/sqrt(Dh) pre-folded
            qr = mm(h, w_attn_ref[base + 1])        # (N, Dh)   rotate_half pre-folded
            k = mm(h, w_attn_ref[base + 2])
            kr = mm(h, w_attn_ref[base + 3])
            v = mm(h, w_attn_ref[base + 4])
            qe = q * cos + qr * sin                 # RoPE
            ke = k * cos + kr * sin
            s = mm_bt(qe, ke) + mask                # (N, N)   scale already in weights
            s = s - jnp.max(s, axis=-1, keepdims=True)
            p = jnp.exp(s)
            denom = jnp.sum(p, axis=-1, keepdims=True)
            if exact_softmax:
                p = p / denom
            else:
                p = p * pl.reciprocal(denom, approx=True)
            o = mm(p, v)                            # (N, Dh)
            attn = attn + mm_bt(o, w_attn_ref[base + 5])   # o @ wo_h  -> (N, H)
        x = x + attn

        # -------------------------- SwiGLU MLP -------------------------
        h = rmsnorm(x, norms_ref[2 * layer + 1])
        g = mm(h, w_mlp_ref[3 * layer + 0])         # (N, I)
        u = mm(h, w_mlp_ref[3 * layer + 1])         # (N, I)
        d = g * jax.nn.sigmoid(g) * u
        x = x + mm_bt(d, w_mlp_ref[3 * layer + 2])  # d @ wd  -> (N, H)

    # -------- final norm + fused lane-dense output: [ hidden | head logits | 0 ] -----
    xn = rmsnorm(x, norms_ref[2 * num_layers])
    out_ref[...] = mm(xn, w_out_ref[0:H, :]) + w_out_ref[H:H + 1, :]


# --------------------------- pack-time weight fusion --------------------------
def pack_decoder_params(params):
    f32 = jnp.float32
    H, Dh, nH = HIDDEN, HEAD_DIM, NUM_HEADS
    scale = 1.0 / (Dh ** 0.5)
    perm = (jnp.arange(Dh) + Dh // 2) % Dh      # unsigned rotate_half permutation

    def split_head_cols(w):                     # (H, H) -> (nH, H, Dh)  per-head columns
        return jnp.transpose(w.astype(f32).reshape(H, nH, Dh), (1, 0, 2))

    attn_slabs, mlp_slabs, norm_rows = [], [], []
    for lp in params["layers"]:
        wq_h = split_head_cols(lp["wq"]) * scale          # scale folded into q
        wk_h = split_head_cols(lp["wk"])
        wv_h = split_head_cols(lp["wv"])
        wq_rot_h = wq_h[:, :, perm]                       # rotate_half folded (sign in sin)
        wk_rot_h = wk_h[:, :, perm]
        wo_hT = jnp.transpose(lp["wo"].astype(f32).reshape(nH, Dh, H), (0, 2, 1))
        slab = jnp.stack([wq_h, wq_rot_h, wk_h, wk_rot_h, wv_h, wo_hT], axis=1)
        attn_slabs.append(slab.reshape(nH * 6, H, Dh))    # row = hd*6 + j
        mlp_slabs.append(jnp.stack([lp["wg"].astype(f32), lp["wu"].astype(f32),
                                    lp["wd"].astype(f32).T], axis=0))   # (3, H, I)
        norm_rows += [lp["ln1"].astype(f32), lp["ln2"].astype(f32)]
    norm_rows.append(params["final_norm"].astype(f32))
    while len(norm_rows) % 8:
        norm_rows.append(jnp.zeros((H,), f32))

    w_attn = jnp.concatenate(attn_slabs, axis=0)          # (NL*nH*6, H, Dh)
    w_mlp = jnp.concatenate(mlp_slabs, axis=0)            # (NL*3,    H, I)
    norms = jnp.stack(norm_rows, axis=0)[:, None, :]      # (8, 1, H)

    head_w = jnp.concatenate([params["node_w"], params["contmlp_w"],
                              params["conn_w"]], axis=1).astype(f32)    # (H, 26)
    head_b = jnp.concatenate([params["node_b"], params["contmlp_b"],
                              params["conn_b"]]).astype(f32)            # (26,)
    w_out = jnp.zeros((H + 8, OUT_LANES), f32)
    w_out = w_out.at[0:H, 0:H].set(jnp.eye(H, dtype=f32))               # hidden passthrough
    w_out = w_out.at[0:H, H:H + N_HEAD_OUT].set(head_w)                 # fused head weights
    w_out = w_out.at[H, H:H + N_HEAD_OUT].set(head_b)                   # fused head bias row

    return {
        "w_attn": w_attn, "w_mlp": w_mlp, "norms": norms, "w_out": w_out,
        # input-assembly weights stay separate — used only in plain-JAX glue:
        "embed": params["embed"].astype(f32),
        "latent_w": params["latent_w"].astype(f32),
        "latent_b": params["latent_b"].astype(f32),
        "cont_w": params["cont_w"].astype(f32),
        "cont_b": params["cont_b"].astype(f32),
        "SOS": params["SOS"].astype(f32),
    }


# ------------------------------ model forward --------------------------------
def link_decoder_forward(packed, latent, input_ids, positions, mask,
                         *, exact_softmax=False):
    f32 = jnp.float32
    B, S = input_ids.shape
    L = S + 2
    Lp = ((L + 7) // 8) * 8          # pad sequence 18 -> 24 (sublane multiple)
    N = B * Lp
    H, Dh = HIDDEN, HEAD_DIM

    # ---- JAX glue: pre-assemble x0 (embedding gather, latent/pose/SOS placement) ----
    tok = packed["embed"][input_ids]                                        # (B,S,H)
    pose = positions.astype(f32) @ packed["cont_w"] + packed["cont_b"]      # (B,S/4,H)
    seq = tok.at[:, 1::4, :].set(pose)
    lat = latent.astype(f32) @ packed["latent_w"] + packed["latent_b"]      # (B,H)
    sos = jnp.broadcast_to(packed["SOS"].reshape(1, 1, H), (B, 1, H))
    x0 = jnp.concatenate([lat[:, None, :], sos, seq], axis=1)               # (B,L,H)
    x0 = jnp.pad(x0, ((0, 0), (0, Lp - L), (0, 0))).reshape(N, H)           # (N,H)

    # ---- block-diagonal additive mask over the flattened batch (causal + padding) ----
    key_ok = jnp.concatenate(
        [jnp.ones((B, 2), f32), mask.astype(f32), jnp.zeros((B, Lp - L), f32)],
        axis=1).reshape(N)
    rows = jnp.arange(N)
    b_idx, l_idx = rows // Lp, rows % Lp
    allowed = ((b_idx[:, None] == b_idx[None, :])
               & (l_idx[:, None] >= l_idx[None, :])
               & (key_ok[None, :] > 0.5))
    add_mask = jnp.where(allowed, 0.0, jnp.finfo(f32).min).astype(f32)      # (N,N)

    # ---- RoPE tables (per-head-dim; rotate_half sign folded into sin) ----
    inv_freq = 1.0 / (ROPE_THETA ** (jnp.arange(0, Dh, 2, dtype=f32) / Dh))
    freqs = jnp.arange(Lp, dtype=f32)[:, None] * inv_freq[None, :]          # (Lp,Dh/2)
    cos = jnp.tile(jnp.concatenate([jnp.cos(freqs), jnp.cos(freqs)], -1), (B, 1))
    sin = jnp.tile(jnp.concatenate([-jnp.sin(freqs), jnp.sin(freqs)], -1), (B, 1))
    rope = jnp.stack([cos, sin], axis=0)                                    # (2,N,Dh)

    kernel = functools.partial(
        _fused_decoder_kernel, num_layers=NUM_LAYERS, num_heads=NUM_HEADS,
        eps=RMS_EPS, exact_softmax=exact_softmax)

    out = pl.pallas_call(
        kernel,
        out_shape=jax.ShapeDtypeStruct((N, OUT_LANES), f32),
        in_specs=[VMEM] * 7,
        out_specs=VMEM,
    )(x0, rope, add_mask, packed["w_attn"], packed["w_mlp"],
      packed["norms"], packed["w_out"])

    # ---- strided output slicing (pure indexing) stays in JAX ----
    out = out.reshape(B, Lp, OUT_LANES)
    hid = out[:, :L, :H]                              # final-norm hidden state (B,L,H)
    heads = out[:, :L, H:H + N_HEAD_OUT]              # fused head logits     (B,L,26)
    node_types = heads[:, 1::4, 0:3][:, :-1, :]
    continious = heads[:, 2::4, 3:5]
    connectivity_1 = heads[:, 3::4, 5:26]
    connectivity_2 = heads[:, 4::4, 5:26]
    return (hid, node_types, continious, connectivity_1, connectivity_2)


# ------------------------------- parameters ----------------------------------
def init_params(key):
    keys = iter(jax.random.split(key, 64))

    def nrm(shape):
        return 0.02 * jax.random.normal(next(keys), shape, jnp.float32)

    params = {
        "latent_w": nrm((LATENT_DIM, HIDDEN)), "latent_b": nrm((HIDDEN,)),
        "cont_w": nrm((2, HIDDEN)), "cont_b": nrm((HIDDEN,)),
        "embed": nrm((VOCAB_SIZE, HIDDEN)),
        "SOS": jax.random.normal(next(keys), (1, 1, HIDDEN), jnp.float32),
        "final_norm": jnp.ones((HIDDEN,), jnp.float32),
        "node_w": nrm((HIDDEN, 3)), "node_b": nrm((3,)),
        "contmlp_w": nrm((HIDDEN, 2)), "contmlp_b": nrm((2,)),
        "conn_w": nrm((HIDDEN, 21)), "conn_b": nrm((21,)),
        "layers": [],
    }
    for _ in range(NUM_LAYERS):
        params["layers"].append({
            "ln1": jnp.ones((HIDDEN,), jnp.float32),
            "wq": nrm((HIDDEN, HIDDEN)), "wk": nrm((HIDDEN, HIDDEN)),
            "wv": nrm((HIDDEN, HIDDEN)), "wo": nrm((HIDDEN, HIDDEN)),
            "ln2": jnp.ones((HIDDEN,), jnp.float32),
            "wg": nrm((HIDDEN, INTERMEDIATE)), "wu": nrm((HIDDEN, INTERMEDIATE)),
            "wd": nrm((INTERMEDIATE, HIDDEN)),
        })
    return params


# ---------------------------------- main --------------------------------------
if __name__ == "__main__":
    key = jax.random.PRNGKey(0)
    pkey, lkey, ikey, poskey = jax.random.split(key, 4)

    params = init_params(pkey)
    packed = pack_decoder_params(params)

    B, S = 2, 16                                # S multiple of 4 (pose slots 1::4)
    latent = jax.random.normal(lkey, (B, LATENT_DIM), jnp.float32)
    input_ids = jax.random.randint(ikey, (B, S), 0, VOCAB_SIZE)
    positions = jax.random.normal(poskey, (B, S // 4, 2), jnp.float32)
    mask = jnp.ones((B, S), jnp.bool_)

    fwd = jax.jit(link_decoder_forward)
    outs = fwd(packed, latent, input_ids, positions, mask)
    jax.block_until_ready(outs)

    assert outs[0].shape == (B, S + 2, HIDDEN)
    assert outs[1].shape == (B, 4, 3)
    assert outs[2].shape == (B, 4, 2)
    assert outs[3].shape == (B, 4, 21)
    assert outs[4].shape == (B, 4, 21)
    assert all(bool(jnp.all(jnp.isfinite(o))) for o in outs)

    print("KERNEL_OK")
</pallas_src>

<mosaic_0001>
module attributes {stable_mosaic.version = 11 : i64} {
  func.func @_fused_decoder_kernel(%arg0: memref<48x32xf32, #tpu.memory_space<vmem>>, %arg1: memref<2x48x8xf32, #tpu.memory_space<vmem>>, %arg2: memref<48x48xf32, #tpu.memory_space<vmem>>, %arg3: memref<48x32x8xf32, #tpu.memory_space<vmem>>, %arg4: memref<6x32x64xf32, #tpu.memory_space<vmem>>, %arg5: memref<8x1x32xf32, #tpu.memory_space<vmem>>, %arg6: memref<40x128xf32, #tpu.memory_space<vmem>>, %arg7: memref<48x128xf32, #tpu.memory_space<vmem>>) attributes {dimension_semantics = [], scalar_prefetch = 0 : i64, scratch_operands = 0 : i64, tpu.core_type = #tpu.core_type<tc>} {
    %c0 = arith.constant 0 : index
    %c0_0 = arith.constant 0 : index
    %0 = vector.load %arg0[%c0, %c0_0] : memref<48x32xf32, #tpu.memory_space<vmem>>, vector<48x32xf32>
    %c0_1 = arith.constant 0 : index
    %c0_2 = arith.constant 0 : index
    %c0_3 = arith.constant 0 : index
    %1 = vector.load %arg1[%c0_1, %c0_2, %c0_3] : memref<2x48x8xf32, #tpu.memory_space<vmem>>, vector<1x48x8xf32>
    %2 = vector.shape_cast %1 : vector<1x48x8xf32> to vector<48x8xf32>
    %c1 = arith.constant 1 : index
    %c0_4 = arith.constant 0 : index
    %c0_5 = arith.constant 0 : index
    %3 = vector.load %arg1[%c1, %c0_4, %c0_5] : memref<2x48x8xf32, #tpu.memory_space<vmem>>, vector<1x48x8xf32>
    %4 = vector.shape_cast %3 : vector<1x48x8xf32> to vector<48x8xf32>
    %c0_6 = arith.constant 0 : index
    %c0_7 = arith.constant 0 : index
    %5 = vector.load %arg2[%c0_6, %c0_7] : memref<48x48xf32, #tpu.memory_space<vmem>>, vector<48x48xf32>
    %c0_8 = arith.constant 0 : index
    %c0_9 = arith.constant 0 : index
    %c0_10 = arith.constant 0 : index
    %6 = vector.load %arg5[%c0_8, %c0_9, %c0_10] : memref<8x1x32xf32, #tpu.memory_space<vmem>>, vector<1x1x32xf32>
    %7 = vector.shape_cast %6 : vector<1x1x32xf32> to vector<1x32xf32>
    %8 = arith.mulf %0, %0 : vector<48x32xf32>
    %cst = arith.constant dense<0.000000e+00> : vector<48xf32>
    %9 = vector.multi_reduction <add>, %8, %cst [1] : vector<48x32xf32> to vector<48xf32>
    %10 = vector.shape_cast %9 : vector<48xf32> to vector<48x1xf32>
    %cst_11 = arith.constant 3.200000e+01 : f32
    %11 = vector.broadcast %cst_11 : f32 to vector<48x1xf32>
    %12 = arith.divf %10, %11 : vector<48x1xf32>
    %cst_12 = arith.constant 9.99999997E-7 : f32
    %13 = vector.broadcast %cst_12 : f32 to vector<48x1xf32>
    %14 = arith.addf %12, %13 : vector<48x1xf32>
    %15 = math.rsqrt %14 : vector<48x1xf32>
    %16 = vector.broadcast %15 : vector<48x1xf32> to vector<48x32xf32>
    %17 = arith.mulf %0, %16 : vector<48x32xf32>
    %18 = vector.broadcast %7 : vector<1x32xf32> to vector<48x32xf32>
    %19 = arith.mulf %17, %18 : vector<48x32xf32>
    %cst_13 = arith.constant 0.000000e+00 : f32
    %20 = vector.broadcast %cst_13 : f32 to vector<48x32xf32>
    %c0_14 = arith.constant 0 : index
    %c0_15 = arith.constant 0 : index
    %c0_16 = arith.constant 0 : index
    %21 = vector.load %arg3[%c0_14, %c0_15, %c0_16] : memref<48x32x8xf32, #tpu.memory_space<vmem>>, vector<1x32x8xf32>
    %22 = vector.shape_cast %21 : vector<1x32x8xf32> to vector<32x8xf32>
    %cst_17 = arith.constant dense<0.000000e+00> : vector<48x8xf32>
    %23 = tpu.matmul %19, %22, %cst_17 {dimension_numbers = #tpu.dot_dimension_numbers<[1], [0], [0], [1], [0, 0, 1, 1], [], []>} : vector<48x32xf32>, vector<32x8xf32>, vector<48x8xf32> -> vector<48x8xf32>
    %c1_18 = arith.constant 1 : index
    %c0_19 = arith.constant 0 : index
    %c0_20 = arith.constant 0 : index
    %24 = vector.load %arg3[%c1_18, %c0_19, %c0_20] : memref<48x32x8xf32, #tpu.memory_space<vmem>>, vector<1x32x8xf32>
    %25 = vector.shape_cast %24 : vector<1x32x8xf32> to vector<32x8xf32>
    %cst_21 = arith.constant dense<0.000000e+00> : vector<48x8xf32>
    %26 = tpu.matmul %19, %25, %cst_21 {dimension_numbers = #tpu.dot_dimension_numbers<[1], [0], [0], [1], [0, 0, 1, 1], [], []>} : vector<48x32xf32>, vector<32x8xf32>, vector<48x8xf32> -> vector<48x8xf32>
    %c2 = arith.constant 2 : index
    %c0_22 = arith.constant 0 : index
    %c0_23 = arith.constant 0 : index
    %27 = vector.load %arg3[%c2, %c0_22, %c0_23] : memref<48x32x8xf32, #tpu.memory_space<vmem>>, vector<1x32x8xf32>
    %28 = vector.shape_cast %27 : vector<1x32x8xf32> to vector<32x8xf32>
    %cst_24 = arith.constant dense<0.000000e+00> : vector<48x8xf32>
    %29 = tpu.matmul %19, %28, %cst_24 {dimension_numbers = #tpu.dot_dimension_numbers<[1], [0], [0], [1], [0, 0, 1, 1], [], []>} : vector<48x32xf32>, vector<32x8xf32>, vector<48x8xf32> -> vector<48x8xf32>
    %c3 = arith.constant 3 : index
    %c0_25 = arith.constant 0 : index
    %c0_26 = arith.constant 0 : index
    %30 = vector.load %arg3[%c3, %c0_25, %c0_26] : memref<48x32x8xf32, #tpu.memory_space<vmem>>, vector<1x32x8xf32>
    %31 = vector.shape_cast %30 : vector<1x32x8xf32> to vector<32x8xf32>
    %cst_27 = arith.constant dense<0.000000e+00> : vector<48x8xf32>
    %32 = tpu.matmul %19, %31, %cst_27 {dimension_numbers = #tpu.dot_dimension_numbers<[1], [0], [0], [1], [0, 0, 1, 1], [], []>} : vector<48x32xf32>, vector<32x8xf32>, vector<48x8xf32> -> vector<48x8xf32>
    %c4 = arith.constant 4 : index
    %c0_28 = arith.constant 0 : index
    %c0_29 = arith.constant 0 : index
    %33 = vector.load %arg3[%c4, %c0_28, %c0_29] : memref<48x32x8xf32, #tpu.memory_space<vmem>>, vector<1x32x8xf32>
    %34 = vector.shape_cast %33 : vector<1x32x8xf32> to vector<32x8xf32>
    %cst_30 = arith.constant dense<0.000000e+00> : vector<48x8xf32>
    %35 = tpu.matmul %19, %34, %cst_30 {dimension_numbers = #tpu.dot_dimension_numbers<[1], [0], [0], [1], [0, 0, 1, 1], [], []>} : vector<48x32xf32>, vector<32x8xf32>, vector<48x8xf32> -> vector<48x8xf32>
    %36 = arith.mulf %23, %2 : vector<48x8xf32>
    %37 = arith.mulf %26, %4 : vector<48x8xf32>
    %38 = arith.addf %36, %37 : vector<48x8xf32>
    %39 = arith.mulf %29, %2 : vector<48x8xf32>
    %40 = arith.mulf %32, %4 : vector<48x8xf32>
    %41 = arith.addf %39, %40 : vector<48x8xf32>
    %cst_31 = arith.constant dense<0.000000e+00> : vector<48x48xf32>
    %42 = tpu.matmul %38, %41, %cst_31 {dimension_numbers = #tpu.dot_dimension_numbers<[1], [1], [0], [0], [0, 0, 1, 0], [], []>} : vector<48x8xf32>, vector<48x8xf32>, vector<48x48xf32> -> vector<48x48xf32>
    %43 = arith.addf %42, %5 : vector<48x48xf32>
    %cst_32 = arith.constant dense<0xFF800000> : vector<48xf32>
    %44 = vector.multi_reduction <maximumf>, %43, %cst_32 [1] : vector<48x48xf32> to vector<48xf32>
    %45 = vector.shape_cast %44 : vector<48xf32> to vector<48x1xf32>
    %46 = vector.broadcast %45 : vector<48x1xf32> to vector<48x48xf32>
    %47 = arith.subf %43, %46 : vector<48x48xf32>
    %48 = math.exp %47 : vector<48x48xf32>
    %cst_33 = arith.constant dense<0.000000e+00> : vector<48xf32>
    %49 = vector.multi_reduction <add>, %48, %cst_33 [1] : vector<48x48xf32> to vector<48xf32>
    %50 = vector.shape_cast %49 : vector<48xf32> to vector<48x1xf32>
    %51 = tpu.reciprocal %50 {approx = true} : vector<48x1xf32> -> vector<48x1xf32>
    %52 = vector.broadcast %51 : vector<48x1xf32> to vector<48x48xf32>
    %53 = arith.mulf %48, %52 : vector<48x48xf32>
    %cst_34 = arith.constant dense<0.000000e+00> : vector<48x8xf32>
    %54 = tpu.matmul %53, %35, %cst_34 {dimension_numbers = #tpu.dot_dimension_numbers<[1], [0], [0], [1], [0, 0, 1, 1], [], []>} : vector<48x48xf32>, vector<48x8xf32>, vector<48x8xf32> -> vector<48x8xf32>
    %c5 = arith.constant 5 : index
    %c0_35 = arith.constant 0 : index
    %c0_36 = arith.constant 0 : index
    %55 = vector.load %arg3[%c5, %c0_35, %c0_36] : memref<48x32x8xf32, #tpu.memory_space<vmem>>, vector<1x32x8xf32>
    %56 = vector.shape_cast %55 : vector<1x32x8xf32> to vector<32x8xf32>
    %cst_37 = arith.constant dense<0.000000e+00> : vector<48x32xf32>
    %57 = tpu.matmul %54, %56, %cst_37 {dimension_numbers = #tpu.dot_dimension_numbers<[1], [1], [0], [0], [0, 0, 1, 0], [], []>} : vector<48x8xf32>, vector<32x8xf32>, vector<48x32xf32> -> vector<48x32xf32>
    %58 = arith.addf %20, %57 : vector<48x32xf32>
    %c6 = arith.constant 6 : index
    %c0_38 = arith.constant 0 : index
    %c0_39 = arith.constant 0 : index
    %59 = vector.load %arg3[%c6, %c0_38, %c0_39] : memref<48x32x8xf32, #tpu.memory_space<vmem>>, vector<1x32x8xf32>
    %60 = vector.shape_cast %59 : vector<1x32x8xf32> to vector<32x8xf32>
    %cst_40 = arith.constant dense<0.000000e+00> : vector<48x8xf32>
    %61 = tpu.matmul %19, %60, %cst_40 {dimension_numbers = #tpu.dot_dimension_numbers<[1], [0], [0], [1], [0, 0, 1, 1], [], []>} : vector<48x32xf32>, vector<32x8xf32>, vector<48x8xf32> -> vector<48x8xf32>
    %c7 = arith.constant 7 : index
    %c0_41 = arith.constant 0 : index
    %c0_42 = arith.constant 0 : index
    %62 = vector.load %arg3[%c7, %c0_41, %c0_42] : memref<48x32x8xf32, #tpu.memory_space<vmem>>, vector<1x32x8xf32>
    %63 = vector.shape_cast %62 : vector<1x32x8xf32> to vector<32x8xf32>
    %cst_43 = arith.constant dense<0.000000e+00> : vector<48x8xf32>
    %64 = tpu.matmul %19, %63, %cst_43 {dimension_numbers = #tpu.dot_dimension_numbers<[1], [0], [0], [1], [0, 0, 1, 1], [], []>} : vector<48x32xf32>, vector<32x8xf32>, vector<48x8xf32> -> vector<48x8xf32>
    %c8 = arith.constant 8 : index
    %c0_44 = arith.constant 0 : index
    %c0_45 = arith.constant 0 : index
    %65 = vector.load %arg3[%c8, %c0_44, %c0_45] : memref<48x32x8xf32, #tpu.memory_space<vmem>>, vector<1x32x8xf32>
    %66 = vector.shape_cast %65 : vector<1x32x8xf32> to vector<32x8xf32>
    %cst_46 = arith.constant dense<0.000000e+00> : vector<48x8xf32>
    %67 = tpu.matmul %19, %66, %cst_46 {dimension_numbers = #tpu.dot_dimension_numbers<[1], [0], [0], [1], [0, 0, 1, 1], [], []>} : vector<48x32xf32>, vector<32x8xf32>, vector<48x8xf32> -> vector<48x8xf32>
    %c9 = arith.constant 9 : index
    %c0_47 = arith.constant 0 : index
    %c0_48 = arith.constant 0 : index
    %68 = vector.load %arg3[%c9, %c0_47, %c0_48] : memref<48x32x8xf32, #tpu.memory_space<vmem>>, vector<1x32x8xf32>
    %69 = vector.shape_cast %68 : vector<1x32x8xf32> to vector<32x8xf32>
    %cst_49 = arith.constant dense<0.000000e+00> : vector<48x8xf32>
    %70 = tpu.matmul %19, %69, %cst_49 {dimension_numbers = #tpu.dot_dimension_numbers<[1], [0], [0], [1], [0, 0, 1, 1], [], []>} : vector<48x32xf32>, vector<32x8xf32>, vector<48x8xf32> -> vector<48x8xf32>
    %c10 = arith.constant 10 : index
    %c0_50 = arith.constant 0 : index
    %c0_51 = arith.constant 0 : index
    %71 = vector.load %arg3[%c10, %c0_50, %c0_51] : memref<48x32x8xf32, #tpu.memory_space<vmem>>, vector<1x32x8xf32>
    %72 = vector.shape_cast %71 : vector<1x32x8xf32> to vector<32x8xf32>
    %cst_52 = arith.constant dense<0.000000e+00> : vector<48x8xf32>
    %73 = tpu.matmul %19, %72, %cst_52 {dimension_numbers = #tpu.dot_dimension_numbers<[1], [0], [0], [1], [0, 0, 1, 1], [], []>} : vector<48x32xf32>, vector<32x8xf32>, vector<48x8xf32> -> vector<48x8xf32>
    %74 = arith.mulf %61, %2 : vector<48x8xf32>
    %75 = arith.mulf %64, %4 : vector<48x8xf32>
    %76 = arith.addf %74, %75 : vector<48x8xf32>
    %77 = arith.mulf %67, %2 : vector<48x8xf32>
    %78 = arith.mulf %70, %4 : vector<48x8xf32>
    %79 = arith.addf %77, %78 : vector<48x8xf32>
    %cst_53 = arith.constant dense<0.000000e+00> : vector<48x48xf32>
    %80 = tpu.matmul %76, %79, %cst_53 {dimension_numbers = #tpu.dot_dimension_numbers<[1], [1], [0], [0], [0, 0, 1, 0], [], []>} : vector<48x8xf32>, vector<48x8xf32>, vector<48x48xf32> -> vector<48x48xf32>
    %81 = arith.addf %80, %5 : vector<48x48xf32>
    %cst_54 = arith.constant dense<0xFF800000> : vector<48xf32>
    %82 = vector.multi_reduction <maximumf>, %81, %cst_54 [1] : vector<48x48xf32> to vector<48xf32>
    %83 = vector.shape_cast %82 : vector<48xf32> to vector<48x1xf32>
    %84 = vector.broadcast %83 : vector<48x1xf32> to vector<48x48xf32>
    %85 = arith.subf %81, %84 : vector<48x48xf32>
    %86 = math.exp %85 : vector<48x48xf32>
    %cst_55 = arith.constant dense<0.000000e+00> : vector<48xf32>
    %87 = vector.multi_reduction <add>, %86, %cst_55 [1] : vector<48x48xf32> to vector<48xf32>
    %88 = vector.shape_cast %87 : vector<48xf32> to vector<48x1xf32>
    %89 = tpu.reciprocal %88 {approx = true} : vector<48x1xf32> -> vector<48x1xf32>
    %90 = vector.broadcast %89 : vector<48x1xf32> to vector<48x48xf32>
    %91 = arith.mulf %86, %90 : vector<48x48xf32>
    %cst_56 = arith.constant dense<0.000000e+00> : vector<48x8xf32>
    %92 = tpu.matmul %91, %73, %cst_56 {dimension_numbers = #tpu.dot_dimension_numbers<[1], [0], [0], [1], [0, 0, 1, 1], [], []>} : vector<48x48xf32>, vector<48x8xf32>, vector<48x8xf32> -> vector<48x8xf32>
    %c11 = arith.constant 11 : index
    %c0_57 = arith.constant 0 : index
    %c0_58 = arith.constant 0 : index
    %93 = vector.load %arg3[%c11, %c0_57, %c0_58] : memref<48x32x8xf32, #tpu.memory_space<vmem>>, vector<1x32x8xf32>
    %94 = vector.shape_cast %93 : vector<1x32x8xf32> to vector<32x8xf32>
    %cst_59 = arith.constant dense<0.000000e+00> : vector<48x32xf32>
    %95 = tpu.matmul %92, %94, %cst_59 {dimension_numbers = #tpu.dot_dimension_numbers<[1], [1], [0], [0], [0, 0, 1, 0], [], []>} : vector<48x8xf32>, vector<32x8xf32>, vector<48x32xf32> -> vector<48x32xf32>
    %96 = arith.addf %58, %95 : vector<48x32xf32>
    %c12 = arith.constant 12 : index
    %c0_60 = arith.constant 0 : index
    %c0_61 = arith.constant 0 : index
    %97 = vector.load %arg3[%c12, %c0_60, %c0_61] : memref<48x32x8xf32, #tpu.memory_space<vmem>>, vector<1x32x8xf32>
    %98 = vector.shape_cast %97 : vector<1x32x8xf32> to vector<32x8xf32>
    %cst_62 = arith.constant dense<0.000000e+00> : vector<48x8xf32>
    %99 = tpu.matmul %19, %98, %cst_62 {dimension_numbers = #tpu.dot_dimension_numbers<[1], [0], [0], [1], [0, 0, 1, 1], [], []>} : vector<48x32xf32>, vector<32x8xf32>, vector<48x8xf32> -> vector<48x8xf32>
    %c13 = arith.constant 13 : index
    %c0_63 = arith.constant 0 : index
    %c0_64 = arith.constant 0 : index
    %100 = vector.load %arg3[%c13, %c0_63, %c0_64] : memref<48x32x8xf32, #tpu.memory_space<vmem>>, vector<1x32x8xf32>
    %101 = vector.shape_cast %100 : vector<1x32x8xf32> to vector<32x8xf32>
    %cst_65 = arith.constant dense<0.000000e+00> : vector<48x8xf32>
    %102 = tpu.matmul %19, %101, %cst_65 {dimension_numbers = #tpu.dot_dimension_numbers<[1], [0], [0], [1], [0, 0, 1, 1], [], []>} : vector<48x32xf32>, vector<32x8xf32>, vector<48x8xf32> -> vector<48x8xf32>
    %c14 = arith.constant 14 : index
    %c0_66 = arith.constant 0 : index
    %c0_67 = arith.constant 0 : index
    %103 = vector.load %arg3[%c14, %c0_66, %c0_67] : memref<48x32x8xf32, #tpu.memory_space<vmem>>, vector<1x32x8xf32>
    %104 = vector.shape_cast %103 : vector<1x32x8xf32> to vector<32x8xf32>
    %cst_68 = arith.constant dense<0.000000e+00> : vector<48x8xf32>
    %105 = tpu.matmul %19, %104, %cst_68 {dimension_numbers = #tpu.dot_dimension_numbers<[1], [0], [0], [1], [0, 0, 1, 1], [], []>} : vector<48x32xf32>, vector<32x8xf32>, vector<48x8xf32> -> vector<48x8xf32>
    %c15 = arith.constant 15 : index
    %c0_69 = arith.constant 0 : index
    %c0_70 = arith.constant 0 : index
    %106 = vector.load %arg3[%c15, %c0_69, %c0_70] : memref<48x32x8xf32, #tpu.memory_space<vmem>>, vector<1x32x8xf32>
    %107 = vector.shape_cast %106 : vector<1x32x8xf32> to vector<32x8xf32>
    %cst_71 = arith.constant dense<0.000000e+00> : vector<48x8xf32>
    %108 = tpu.matmul %19, %107, %cst_71 {dimension_numbers = #tpu.dot_dimension_numbers<[1], [0], [0], [1], [0, 0, 1, 1], [], []>} : vector<48x32xf32>, vector<32x8xf32>, vector<48x8xf32> -> vector<48x8xf32>
    %c16 = arith.constant 16 : index
    %c0_72 = arith.constant 0 : index
    %c0_73 = arith.constant 0 : index
    %109 = vector.load %arg3[%c16, %c0_72, %c0_73] : memref<48x32x8xf32, #tpu.memory_space<vmem>>, vector<1x32x8xf32>
    %110 = vector.shape_cast %109 : vector<1x32x8xf32> to vector<32x8xf32>
    %cst_74 = arith.constant dense<0.000000e+00> : vector<48x8xf32>
    %111 = tpu.matmul %19, %110, %cst_74 {dimension_numbers = #tpu.dot_dimension_numbers<[1], [0], [0], [1], [0, 0, 1, 1], [], []>} : vector<48x32xf32>, vector<32x8xf32>, vector<48x8xf32> -> vector<48x8xf32>
    %112 = arith.mulf %99, %2 : vector<48x8xf32>
    %113 = arith.mulf %102, %4 : vector<48x8xf32>
    %114 = arith.addf %112, %113 : vector<48x8xf32>
    %115 = arith.mulf %105, %2 : vector<48x8xf32>
    %116 = arith.mulf %108, %4 : vector<48x8xf32>
    %117 = arith.addf %115, %116 : vector<48x8xf32>
    %cst_75 = arith.constant dense<0.000000e+00> : vector<48x48xf32>
    %118 = tpu.matmul %114, %117, %cst_75 {dimension_numbers = #tpu.dot_dimension_numbers<[1], [1], [0], [0], [0, 0, 1, 0], [], []>} : vector<48x8xf32>, vector<48x8xf32>, vector<48x48xf32> -> vector<48x48xf32>
    %119 = arith.addf %118, %5 : vector<48x48xf32>
    %cst_76 = arith.constant dense<0xFF800000> : vector<48xf32>
    %120 = vector.multi_reduction <maximumf>, %119, %cst_76 [1] : vector<48x48xf32> to vector<48xf32>
    %121 = vector.shape_cast %120 : vector<48xf32> to vector<48x1xf32>
    %122 = vector.broadcast %121 : vector<48x1xf32> to vector<48x48xf32>
    %123 = arith.subf %119, %122 : vector<48x48xf32>
    %124 = math.exp %123 : vector<48x48xf32>
    %cst_77 = arith.constant dense<0.000000e+00> : vector<48xf32>
    %125 = vector.multi_reduction <add>, %124, %cst_77 [1] : vector<48x48xf32> to vector<48xf32>
    %126 = vector.shape_cast %125 : vector<48xf32> to vector<48x1xf32>
    %127 = tpu.reciprocal %126 {approx = true} : vector<48x1xf32> -> vector<48x1xf32>
    %128 = vector.broadcast %127 : vector<48x1xf32> to vector<48x48xf32>
    %129 = arith.mulf %124, %128 : vector<48x48xf32>
    %cst_78 = arith.constant dense<0.000000e+00> : vector<48x8xf32>
    %130 = tpu.matmul %129, %111, %cst_78 {dimension_numbers = #tpu.dot_dimension_numbers<[1], [0], [0], [1], [0, 0, 1, 1], [], []>} : vector<48x48xf32>, vector<48x8xf32>, vector<48x8xf32> -> vector<48x8xf32>
    %c17 = arith.constant 17 : index
    %c0_79 = arith.constant 0 : index
    %c0_80 = arith.constant 0 : index
    %131 = vector.load %arg3[%c17, %c0_79, %c0_80] : memref<48x32x8xf32, #tpu.memory_space<vmem>>, vector<1x32x8xf32>
    %132 = vector.shape_cast %131 : vector<1x32x8xf32> to vector<32x8xf32>
    %cst_81 = arith.constant dense<0.000000e+00> : vector<48x32xf32>
    %133 = tpu.matmul %130, %132, %cst_81 {dimension_numbers = #tpu.dot_dimension_numbers<[1], [1], [0], [0], [0, 0, 1, 0], [], []>} : vector<48x8xf32>, vector<32x8xf32>, vector<48x32xf32> -> vector<48x32xf32>
    %134 = arith.addf %96, %133 : vector<48x32xf32>
    %c18 = arith.constant 18 : index
    %c0_82 = arith.constant 0 : index
    %c0_83 = arith.constant 0 : index
    %135 = vector.load %arg3[%c18, %c0_82, %c0_83] : memref<48x32x8xf32, #tpu.memory_space<vmem>>, vector<1x32x8xf32>
    %136 = vector.shape_cast %135 : vector<1x32x8xf32> to vector<32x8xf32>
    %cst_84 = arith.constant dense<0.000000e+00> : vector<48x8xf32>
    %137 = tpu.matmul %19, %136, %cst_84 {dimension_numbers = #tpu.dot_dimension_numbers<[1], [0], [0], [1], [0, 0, 1, 1], [], []>} : vector<48x32xf32>, vector<32x8xf32>, vector<48x8xf32> -> vector<48x8xf32>
    %c19 = arith.constant 19 : index
    %c0_85 = arith.constant 0 : index
    %c0_86 = arith.constant 0 : index
    %138 = vector.load %arg3[%c19, %c0_85, %c0_86] : memref<48x32x8xf32, #tpu.memory_space<vmem>>, vector<1x32x8xf32>
    %139 = vector.shape_cast %138 : vector<1x32x8xf32> to vector<32x8xf32>
    %cst_87 = arith.constant dense<0.000000e+00> : vector<48x8xf32>
    %140 = tpu.matmul %19, %139, %cst_87 {dimension_numbers = #tpu.dot_dimension_numbers<[1], [0], [0], [1], [0, 0, 1, 1], [], []>} : vector<48x32xf32>, vector<32x8xf32>, vector<48x8xf32> -> vector<48x8xf32>
    %c20 = arith.constant 20 : index
    %c0_88 = arith.constant 0 : index
    %c0_89 = arith.constant 0 : index
    %141 = vector.load %arg3[%c20, %c0_88, %c0_89] : memref<48x32x8xf32, #tpu.memory_space<vmem>>, vector<1x32x8xf32>
    %142 = vector.shape_cast %141 : vector<1x32x8xf32> to vector<32x8xf32>
    %cst_90 = arith.constant dense<0.000000e+00> : vector<48x8xf32>
    %143 = tpu.matmul %19, %142, %cst_90 {dimension_numbers = #tpu.dot_dimension_numbers<[1], [0], [0], [1], [0, 0, 1, 1], [], []>} : vector<48x32xf32>, vector<32x8xf32>, vector<48x8xf32> -> vector<48x8xf32>
    %c21 = arith.constant 21 : index
    %c0_91 = arith.constant 0 : index
    %c0_92 = arith.constant 0 : index
    %144 = vector.load %arg3[%c21, %c0_91, %c0_92] : memref<48x32x8xf32, #tpu.memory_space<vmem>>, vector<1x32x8xf32>
    %145 = vector.shape_cast %144 : vector<1x32x8xf32> to vector<32x8xf32>
    %cst_93 = arith.constant dense<0.000000e+00> : vector<48x8xf32>
    %146 = tpu.matmul %19, %145, %cst_93 {dimension_numbers = #tpu.dot_dimension_numbers<[1], [0], [0], [1], [0, 0, 1, 1], [], []>} : vector<48x32xf32>, vector<32x8xf32>, vector<48x8xf32> -> vector<48x8xf32>
    %c22 = arith.constant 22 : index
    %c0_94 = arith.constant 0 : index
    %c0_95 = arith.constant 0 : index
    %147 = vector.load %arg3[%c22, %c0_94, %c0_95] : memref<48x32x8xf32, #tpu.memory_space<vmem>>, vector<1x32x8xf32>
    %148 = vector.shape_cast %147 : vector<1x32x8xf32> to vector<32x8xf32>
    %cst_96 = arith.constant dense<0.000000e+00> : vector<48x8xf32>
    %149 = tpu.matmul %19, %148, %cst_96 {dimension_numbers = #tpu.dot_dimension_numbers<[1], [0], [0], [1], [0, 0, 1, 1], [], []>} : vector<48x32xf32>, vector<32x8xf32>, vector<48x8xf32> -> vector<48x8xf32>
    %150 = arith.mulf %137, %2 : vector<48x8xf32>
    %151 = arith.mulf %140, %4 : vector<48x8xf32>
    %152 = arith.addf %150, %151 : vector<48x8xf32>
    %153 = arith.mulf %143, %2 : vector<48x8xf32>
    %154 = arith.mulf %146, %4 : vector<48x8xf32>
    %155 = arith.addf %153, %154 : vector<48x8xf32>
    %cst_97 = arith.constant dense<0.000000e+00> : vector<48x48xf32>
    %156 = tpu.matmul %152, %155, %cst_97 {dimension_numbers = #tpu.dot_dimension_numbers<[1], [1], [0], [0], [0, 0, 1, 0], [], []>} : vector<48x8xf32>, vector<48x8xf32>, vector<48x48xf32> -> vector<48x48xf32>
    %157 = arith.addf %156, %5 : vector<48x48xf32>
    %cst_98 = arith.constant dense<0xFF800000> : vector<48xf32>
    %158 = vector.multi_reduction <maximumf>, %157, %cst_98 [1] : vector<48x48xf32> to vector<48xf32>
    %159 = vector.shape_cast %158 : vector<48xf32> to vector<48x1xf32>
    %160 = vector.broadcast %159 : vector<48x1xf32> to vector<48x48xf32>
    %161 = arith.subf %157, %160 : vector<48x48xf32>
    %162 = math.exp %161 : vector<48x48xf32>
    %cst_99 = arith.constant dense<0.000000e+00> : vector<48xf32>
    %163 = vector.multi_reduction <add>, %162, %cst_99 [1] : vector<48x48xf32> to vector<48xf32>
    %164 = vector.shape_cast %163 : vector<48xf32> to vector<48x1xf32>
    %165 = tpu.reciprocal %164 {approx = true} : vector<48x1xf32> -> vector<48x1xf32>
    %166 = vector.broadcast %165 : vector<48x1xf32> to vector<48x48xf32>
    %167 = arith.mulf %162, %166 : vector<48x48xf32>
    %cst_100 = arith.constant dense<0.000000e+00> : vector<48x8xf32>
    %168 = tpu.matmul %167, %149, %cst_100 {dimension_numbers = #tpu.dot_dimension_numbers<[1], [0], [0], [1], [0, 0, 1, 1], [], []>} : vector<48x48xf32>, vector<48x8xf32>, vector<48x8xf32> -> vector<48x8xf32>
    %c23 = arith.constant 23 : index
    %c0_101 = arith.constant 0 : index
    %c0_102 = arith.constant 0 : index
    %169 = vector.load %arg3[%c23, %c0_101, %c0_102] : memref<48x32x8xf32, #tpu.memory_space<vmem>>, vector<1x32x8xf32>
    %170 = vector.shape_cast %169 : vector<1x32x8xf32> to vector<32x8xf32>
    %cst_103 = arith.constant dense<0.000000e+00> : vector<48x32xf32>
    %171 = tpu.matmul %168, %170, %cst_103 {dimension_numbers = #tpu.dot_dimension_numbers<[1], [1], [0], [0], [0, 0, 1, 0], [], []>} : vector<48x8xf32>, vector<32x8xf32>, vector<48x32xf32> -> vector<48x32xf32>
    %172 = arith.addf %134, %171 : vector<48x32xf32>
    %173 = arith.addf %0, %172 : vector<48x32xf32>
    %c1_104 = arith.constant 1 : index
    %c0_105 = arith.constant 0 : index
    %c0_106 = arith.constant 0 : index
    %174 = vector.load %arg5[%c1_104, %c0_105, %c0_106] : memref<8x1x32xf32, #tpu.memory_space<vmem>>, vector<1x1x32xf32>
    %175 = vector.shape_cast %174 : vector<1x1x32xf32> to vector<1x32xf32>
    %176 = arith.mulf %173, %173 : vector<48x32xf32>
    %cst_107 = arith.constant dense<0.000000e+00> : vector<48xf32>
    %177 = vector.multi_reduction <add>, %176, %cst_107 [1] : vector<48x32xf32> to vector<48xf32>
    %178 = vector.shape_cast %177 : vector<48xf32> to vector<48x1xf32>
    %cst_108 = arith.constant 3.200000e+01 : f32
    %179 = vector.broadcast %cst_108 : f32 to vector<48x1xf32>
    %180 = arith.divf %178, %179 : vector<48x1xf32>
    %cst_109 = arith.constant 9.99999997E-7 : f32
    %181 = vector.broadcast %cst_109 : f32 to vector<48x1xf32>
    %182 = arith.addf %180, %181 : vector<48x1xf32>
    %183 = math.rsqrt %182 : vector<48x1xf32>
    %184 = vector.broadcast %183 : vector<48x1xf32> to vector<48x32xf32>
    %185 = arith.mulf %173, %184 : vector<48x32xf32>
    %186 = vector.broadcast %175 : vector<1x32xf32> to vector<48x32xf32>
    %187 = arith.mulf %185, %186 : vector<48x32xf32>
    %c0_110 = arith.constant 0 : index
    %c0_111 = arith.constant 0 : index
    %c0_112 = arith.constant 0 : index
    %188 = vector.load %arg4[%c0_110, %c0_111, %c0_112] : memref<6x32x64xf32, #tpu.memory_space<vmem>>, vector<1x32x64xf32>
    %189 = vector.shape_cast %188 : vector<1x32x64xf32> to vector<32x64xf32>
    %cst_113 = arith.constant dense<0.000000e+00> : vector<48x64xf32>
    %190 = tpu.matmul %187, %189, %cst_113 {dimension_numbers = #tpu.dot_dimension_numbers<[1], [0], [0], [1], [0, 0, 1, 1], [], []>} : vector<48x32xf32>, vector<32x64xf32>, vector<48x64xf32> -> vector<48x64xf32>
    %c1_114 = arith.constant 1 : index
    %c0_115 = arith.constant 0 : index
    %c0_116 = arith.constant 0 : index
    %191 = vector.load %arg4[%c1_114, %c0_115, %c0_116] : memref<6x32x64xf32, #tpu.memory_space<vmem>>, vector<1x32x64xf32>
    %192 = vector.shape_cast %191 : vector<1x32x64xf32> to vector<32x64xf32>
    %cst_117 = arith.constant dense<0.000000e+00> : vector<48x64xf32>
    %193 = tpu.matmul %187, %192, %cst_117 {dimension_numbers = #tpu.dot_dimension_numbers<[1], [0], [0], [1], [0, 0, 1, 1], [], []>} : vector<48x32xf32>, vector<32x64xf32>, vector<48x64xf32> -> vector<48x64xf32>
    %194 = arith.negf %190 : vector<48x64xf32>
    %195 = math.exp %194 : vector<48x64xf32>
    %cst_118 = arith.constant 1.000000e+00 : f32
    %196 = vector.broadcast %cst_118 : f32 to vector<48x64xf32>
    %197 = arith.addf %196, %195 : vector<48x64xf32>
    %198 = arith.divf %196, %197 : vector<48x64xf32>
    %199 = arith.mulf %190, %198 : vector<48x64xf32>
    %200 = arith.mulf %199, %193 : vector<48x64xf32>
    %c2_119 = arith.constant 2 : index
    %c0_120 = arith.constant 0 : index
    %c0_121 = arith.constant 0 : index
    %201 = vector.load %arg4[%c2_119, %c0_120, %c0_121] : memref<6x32x64xf32, #tpu.memory_space<vmem>>, vector<1x32x64xf32>
    %202 = vector.shape_cast %201 : vector<1x32x64xf32> to vector<32x64xf32>
    %cst_122 = arith.constant dense<0.000000e+00> : vector<48x32xf32>
    %203 = tpu.matmul %200, %202, %cst_122 {dimension_numbers = #tpu.dot_dimension_numbers<[1], [1], [0], [0], [0, 0, 1, 0], [], []>} : vector<48x64xf32>, vector<32x64xf32>, vector<48x32xf32> -> vector<48x32xf32>
    %204 = arith.addf %173, %203 : vector<48x32xf32>
    %c2_123 = arith.constant 2 : index
    %c0_124 = arith.constant 0 : index
    %c0_125 = arith.constant 0 : index
    %205 = vector.load %arg5[%c2_123, %c0_124, %c0_125] : memref<8x1x32xf32, #tpu.memory_space<vmem>>, vector<1x1x32xf32>
    %206 = vector.shape_cast %205 : vector<1x1x32xf32> to vector<1x32xf32>
    %207 = arith.mulf %204, %204 : vector<48x32xf32>
    %cst_126 = arith.constant dense<0.000000e+00> : vector<48xf32>
    %208 = vector.multi_reduction <add>, %207, %cst_126 [1] : vector<48x32xf32> to vector<48xf32>
    %209 = vector.shape_cast %208 : vector<48xf32> to vector<48x1xf32>
    %cst_127 = arith.constant 3.200000e+01 : f32
    %210 = vector.broadcast %cst_127 : f32 to vector<48x1xf32>
    %211 = arith.divf %209, %210 : vector<48x1xf32>
    %cst_128 = arith.constant 9.99999997E-7 : f32
    %212 = vector.broadcast %cst_128 : f32 to vector<48x1xf32>
    %213 = arith.addf %211, %212 : vector<48x1xf32>
    %214 = math.rsqrt %213 : vector<48x1xf32>
    %215 = vector.broadcast %214 : vector<48x1xf32> to vector<48x32xf32>
    %216 = arith.mulf %204, %215 : vector<48x32xf32>
    %217 = vector.broadcast %206 : vector<1x32xf32> to vector<48x32xf32>
    %218 = arith.mulf %216, %217 : vector<48x32xf32>
    %cst_129 = arith.constant 0.000000e+00 : f32
    %219 = vector.broadcast %cst_129 : f32 to vector<48x32xf32>
    %c24 = arith.constant 24 : index
    %c0_130 = arith.constant 0 : index
    %c0_131 = arith.constant 0 : index
    %220 = vector.load %arg3[%c24, %c0_130, %c0_131] : memref<48x32x8xf32, #tpu.memory_space<vmem>>, vector<1x32x8xf32>
    %221 = vector.shape_cast %220 : vector<1x32x8xf32> to vector<32x8xf32>
    %cst_132 = arith.constant dense<0.000000e+00> : vector<48x8xf32>
    %222 = tpu.matmul %218, %221, %cst_132 {dimension_numbers = #tpu.dot_dimension_numbers<[1], [0], [0], [1], [0, 0, 1, 1], [], []>} : vector<48x32xf32>, vector<32x8xf32>, vector<48x8xf32> -> vector<48x8xf32>
    %c25 = arith.constant 25 : index
    %c0_133 = arith.constant 0 : index
    %c0_134 = arith.constant 0 : index
    %223 = vector.load %arg3[%c25, %c0_133, %c0_134] : memref<48x32x8xf32, #tpu.memory_space<vmem>>, vector<1x32x8xf32>
    %224 = vector.shape_cast %223 : vector<1x32x8xf32> to vector<32x8xf32>
    %cst_135 = arith.constant dense<0.000000e+00> : vector<48x8xf32>
    %225 = tpu.matmul %218, %224, %cst_135 {dimension_numbers = #tpu.dot_dimension_numbers<[1], [0], [0], [1], [0, 0, 1, 1], [], []>} : vector<48x32xf32>, vector<32x8xf32>, vector<48x8xf32> -> vector<48x8xf32>
    %c26 = arith.constant 26 : index
    %c0_136 = arith.constant 0 : index
    %c0_137 = arith.constant 0 : index
    %226 = vector.load %arg3[%c26, %c0_136, %c0_137] : memref<48x32x8xf32, #tpu.memory_space<vmem>>, vector<1x32x8xf32>
    %227 = vector.shape_cast %226 : vector<1x32x8xf32> to vector<32x8xf32>
    %cst_138 = arith.constant dense<0.000000e+00> : vector<48x8xf32>
    %228 = tpu.matmul %218, %227, %cst_138 {dimension_numbers = #tpu.dot_dimension_numbers<[1], [0], [0], [1], [0, 0, 1, 1], [], []>} : vector<48x32xf32>, vector<32x8xf32>, vector<48x8xf32> -> vector<48x8xf32>
    %c27 = arith.constant 27 : index
    %c0_139 = arith.constant 0 : index
    %c0_140 = arith.constant 0 : index
    %229 = vector.load %arg3[%c27, %c0_139, %c0_140] : memref<48x32x8xf32, #tpu.memory_space<vmem>>, vector<1x32x8xf32>
    %230 = vector.shape_cast %229 : vector<1x32x8xf32> to vector<32x8xf32>
    %cst_141 = arith.constant dense<0.000000e+00> : vector<48x8xf32>
    %231 = tpu.matmul %218, %230, %cst_141 {dimension_numbers = #tpu.dot_dimension_numbers<[1], [0], [0], [1], [0, 0, 1, 1], [], []>} : vector<48x32xf32>, vector<32x8xf32>, vector<48x8xf32> -> vector<48x8xf32>
    %c28 = arith.constant 28 : index
    %c0_142 = arith.constant 0 : index
    %c0_143 = arith.constant 0 : index
    %232 = vector.load %arg3[%c28, %c0_142, %c0_143] : memref<48x32x8xf32, #tpu.memory_space<vmem>>, vector<1x32x8xf32>
    %233 = vector.shape_cast %232 : vector<1x32x8xf32> to vector<32x8xf32>
    %cst_144 = arith.constant dense<0.000000e+00> : vector<48x8xf32>
    %234 = tpu.matmul %218, %233, %cst_144 {dimension_numbers = #tpu.dot_dimension_numbers<[1], [0], [0], [1], [0, 0, 1, 1], [], []>} : vector<48x32xf32>, vector<32x8xf32>, vector<48x8xf32> -> vector<48x8xf32>
    %235 = arith.mulf %222, %2 : vector<48x8xf32>
    %236 = arith.mulf %225, %4 : vector<48x8xf32>
    %237 = arith.addf %235, %236 : vector<48x8xf32>
    %238 = arith.mulf %228, %2 : vector<48x8xf32>
    %239 = arith.mulf %231, %4 : vector<48x8xf32>
    %240 = arith.addf %238, %239 : vector<48x8xf32>
    %cst_145 = arith.constant dense<0.000000e+00> : vector<48x48xf32>
    %241 = tpu.matmul %237, %240, %cst_145 {dimension_numbers = #tpu.dot_dimension_numbers<[1], [1], [0], [0], [0, 0, 1, 0], [], []>} : vector<48x8xf32>, vector<48x8xf32>, vector<48x48xf32> -> vector<48x48xf32>
    %242 = arith.addf %241, %5 : vector<48x48xf32>
    %cst_146 = arith.constant dense<0xFF800000> : vector<48xf32>
    %243 = vector.multi_reduction <maximumf>, %242, %cst_146 [1] : vector<48x48xf32> to vector<48xf32>
    %244 = vector.shape_cast %243 : vector<48xf32> to vector<48x1xf32>
    %245 = vector.broadcast %244 : vector<48x1xf32> to vector<48x48xf32>
    %246 = arith.subf %242, %245 : vector<48x48xf32>
    %247 = math.exp %246 : vector<48x48xf32>
    %cst_147 = arith.constant dense<0.000000e+00> : vector<48xf32>
    %248 = vector.multi_reduction <add>, %247, %cst_147 [1] : vector<48x48xf32> to vector<48xf32>
    %249 = vector.shape_cast %248 : vector<48xf32> to vector<48x1xf32>
    %250 = tpu.reciprocal %249 {approx = true} : vector<48x1xf32> -> vector<48x1xf32>
    %251 = vector.broadcast %250 : vector<48x1xf32> to vector<48x48xf32>
    %252 = arith.mulf %247, %251 : vector<48x48xf32>
    %cst_148 = arith.constant dense<0.000000e+00> : vector<48x8xf32>
    %253 = tpu.matmul %252, %234, %cst_148 {dimension_numbers = #tpu.dot_dimension_numbers<[1], [0], [0], [1], [0, 0, 1, 1], [], []>} : vector<48x48xf32>, vector<48x8xf32>, vector<48x8xf32> -> vector<48x8xf32>
    %c29 = arith.constant 29 : index
    %c0_149 = arith.constant 0 : index
    %c0_150 = arith.constant 0 : index
    %254 = vector.load %arg3[%c29, %c0_149, %c0_150] : memref<48x32x8xf32, #tpu.memory_space<vmem>>, vector<1x32x8xf32>
    %255 = vector.shape_cast %254 : vector<1x32x8xf32> to vector<32x8xf32>
    %cst_151 = arith.constant dense<0.000000e+00> : vector<48x32xf32>
    %256 = tpu.matmul %253, %255, %cst_151 {dimension_numbers = #tpu.dot_dimension_numbers<[1], [1], [0], [0], [0, 0, 1, 0], [], []>} : vector<48x8xf32>, vector<32x8xf32>, vector<48x32xf32> -> vector<48x32xf32>
    %257 = arith.addf %219, %256 : vector<48x32xf32>
    %c30 = arith.constant 30 : index
    %c0_152 = arith.constant 0 : index
    %c0_153 = arith.constant 0 : index
    %258 = vector.load %arg3[%c30, %c0_152, %c0_153] : memref<48x32x8xf32, #tpu.memory_space<vmem>>, vector<1x32x8xf32>
    %259 = vector.shape_cast %258 : vector<1x32x8xf32> to vector<32x8xf32>
    %cst_154 = arith.constant dense<0.000000e+00> : vector<48x8xf32>
    %260 = tpu.matmul %218, %259, %cst_154 {dimension_numbers = #tpu.dot_dimension_numbers<[1], [0], [0], [1], [0, 0, 1, 1], [], []>} : vector<48x32xf32>, vector<32x8xf32>, vector<48x8xf32> -> vector<48x8xf32>
    %c31 = arith.constant 31 : index
    %c0_155 = arith.constant 0 : index
    %c0_156 = arith.constant 0 : index
    %261 = vector.load %arg3[%c31, %c0_155, %c0_156] : memref<48x32x8xf32, #tpu.memory_space<vmem>>, vector<1x32x8xf32>
    %262 = vector.shape_cast %261 : vector<1x32x8xf32> to vector<32x8xf32>
    %cst_157 = arith.constant dense<0.000000e+00> : vector<48x8xf32>
    %263 = tpu.matmul %218, %262, %cst_157 {dimension_numbers = #tpu.dot_dimension_numbers<[1], [0], [0], [1], [0, 0, 1, 1], [], []>} : vector<48x32xf32>, vector<32x8xf32>, vector<48x8xf32> -> vector<48x8xf32>
    %c32 = arith.constant 32 : index
    %c0_158 = arith.constant 0 : index
    %c0_159 = arith.constant 0 : index
    %264 = vector.load %arg3[%c32, %c0_158, %c0_159] : memref<48x32x8xf32, #tpu.memory_space<vmem>>, vector<1x32x8xf32>
    %265 = vector.shape_cast %264 : vector<1x32x8xf32> to vector<32x8xf32>
    %cst_160 = arith.constant dense<0.000000e+00> : vector<48x8xf32>
    %266 = tpu.matmul %218, %265, %cst_160 {dimension_numbers = #tpu.dot_dimension_numbers<[1], [0], [0], [1], [0, 0, 1, 1], [], []>} : vector<48x32xf32>, vector<32x8xf32>, vector<48x8xf32> -> vector<48x8xf32>
    %c33 = arith.constant 33 : index
    %c0_161 = arith.constant 0 : index
    %c0_162 = arith.constant 0 : index
    %267 = vector.load %arg3[%c33, %c0_161, %c0_162] : memref<48x32x8xf32, #tpu.memory_space<vmem>>, vector<1x32x8xf32>
    %268 = vector.shape_cast %267 : vector<1x32x8xf32> to vector<32x8xf32>
    %cst_163 = arith.constant dense<0.000000e+00> : vector<48x8xf32>
    %269 = tpu.matmul %218, %268, %cst_163 {dimension_numbers = #tpu.dot_dimension_numbers<[1], [0], [0], [1], [0, 0, 1, 1], [], []>} : vector<48x32xf32>, vector<32x8xf32>, vector<48x8xf32> -> vector<48x8xf32>
    %c34 = arith.constant 34 : index
    %c0_164 = arith.constant 0 : index
    %c0_165 = arith.constant 0 : index
    %270 = vector.load %arg3[%c34, %c0_164, %c0_165] : memref<48x32x8xf32, #tpu.memory_space<vmem>>, vector<1x32x8xf32>
    %271 = vector.shape_cast %270 : vector<1x32x8xf32> to vector<32x8xf32>
    %cst_166 = arith.constant dense<0.000000e+00> : vector<48x8xf32>
    %272 = tpu.matmul %218, %271, %cst_166 {dimension_numbers = #tpu.dot_dimension_numbers<[1], [0], [0], [1], [0, 0, 1, 1], [], []>} : vector<48x32xf32>, vector<32x8xf32>, vector<48x8xf32> -> vector<48x8xf32>
    %273 = arith.mulf %260, %2 : vector<48x8xf32>
    %274 = arith.mulf %263, %4 : vector<48x8xf32>
    %275 = arith.addf %273, %274 : vector<48x8xf32>
    %276 = arith.mulf %266, %2 : vector<48x8xf32>
    %277 = arith.mulf %269, %4 : vector<48x8xf32>
    %278 = arith.addf %276, %277 : vector<48x8xf32>
    %cst_167 = arith.constant dense<0.000000e+00> : vector<48x48xf32>
    %279 = tpu.matmul %275, %278, %cst_167 {dimension_numbers = #tpu.dot_dimension_numbers<[1], [1], [0], [0], [0, 0, 1, 0], [], []>} : vector<48x8xf32>, vector<48x8xf32>, vector<48x48xf32> -> vector<48x48xf32>
    %280 = arith.addf %279, %5 : vector<48x48xf32>
    %cst_168 = arith.constant dense<0xFF800000> : vector<48xf32>
    %281 = vector.multi_reduction <maximumf>, %280, %cst_168 [1] : vector<48x48xf32> to vector<48xf32>
    %282 = vector.shape_cast %281 : vector<48xf32> to vector<48x1xf32>
    %283 = vector.broadcast %282 : vector<48x1xf32> to vector<48x48xf32>
    %284 = arith.subf %280, %283 : vector<48x48xf32>
    %285 = math.exp %284 : vector<48x48xf32>
    %cst_169 = arith.constant dense<0.000000e+00> : vector<48xf32>
    %286 = vector.multi_reduction <add>, %285, %cst_169 [1] : vector<48x48xf32> to vector<48xf32>
    %287 = vector.shape_cast %286 : vector<48xf32> to vector<48x1xf32>
    %288 = tpu.reciprocal %287 {approx = true} : vector<48x1xf32> -> vector<48x1xf32>
    %289 = vector.broadcast %288 : vector<48x1xf32> to vector<48x48xf32>
    %290 = arith.mulf %285, %289 : vector<48x48xf32>
    %cst_170 = arith.constant dense<0.000000e+00> : vector<48x8xf32>
    %291 = tpu.matmul %290, %272, %cst_170 {dimension_numbers = #tpu.dot_dimension_numbers<[1], [0], [0], [1], [0, 0, 1, 1], [], []>} : vector<48x48xf32>, vector<48x8xf32>, vector<48x8xf32> -> vector<48x8xf32>
    %c35 = arith.constant 35 : index
    %c0_171 = arith.constant 0 : index
    %c0_172 = arith.constant 0 : index
    %292 = vector.load %arg3[%c35, %c0_171, %c0_172] : memref<48x32x8xf32, #tpu.memory_space<vmem>>, vector<1x32x8xf32>
    %293 = vector.shape_cast %292 : vector<1x32x8xf32> to vector<32x8xf32>
    %cst_173 = arith.constant dense<0.000000e+00> : vector<48x32xf32>
    %294 = tpu.matmul %291, %293, %cst_173 {dimension_numbers = #tpu.dot_dimension_numbers<[1], [1], [0], [0], [0, 0, 1, 0], [], []>} : vector<48x8xf32>, vector<32x8xf32>, vector<48x32xf32> -> vector<48x32xf32>
    %295 = arith.addf %257, %294 : vector<48x32xf32>
    %c36 = arith.constant 36 : index
    %c0_174 = arith.constant 0 : index
    %c0_175 = arith.constant 0 : index
    %296 = vector.load %arg3[%c36, %c0_174, %c0_175] : memref<48x32x8xf32, #tpu.memory_space<vmem>>, vector<1x32x8xf32>
    %297 = vector.shape_cast %296 : vector<1x32x8xf32> to vector<32x8xf32>
    %cst_176 = arith.constant dense<0.000000e+00> : vector<48x8xf32>
    %298 = tpu.matmul %218, %297, %cst_176 {dimension_numbers = #tpu.dot_dimension_numbers<[1], [0], [0], [1], [0, 0, 1, 1], [], []>} : vector<48x32xf32>, vector<32x8xf32>, vector<48x8xf32> -> vector<48x8xf32>
    %c37 = arith.constant 37 : index
    %c0_177 = arith.constant 0 : index
    %c0_178 = arith.constant 0 : index
    %299 = vector.load %arg3[%c37, %c0_177, %c0_178] : memref<48x32x8xf32, #tpu.memory_space<vmem>>, vector<1x32x8xf32>
    %300 = vector.shape_cast %299 : vector<1x32x8xf32> to vector<32x8xf32>
    %cst_179 = arith.constant dense<0.000000e+00> : vector<48x8xf32>
    %301 = tpu.matmul %218, %300, %cst_179 {dimension_numbers = #tpu.dot_dimension_numbers<[1], [0], [0], [1], [0, 0, 1, 1], [], []>} : vector<48x32xf32>, vector<32x8xf32>, vector<48x8xf32> -> vector<48x8xf32>
    %c38 = arith.constant 38 : index
    %c0_180 = arith.constant 0 : index
    %c0_181 = arith.constant 0 : index
    %302 = vector.load %arg3[%c38, %c0_180, %c0_181] : memref<48x32x8xf32, #tpu.memory_space<vmem>>, vector<1x32x8xf32>
    %303 = vector.shape_cast %302 : vector<1x32x8xf32> to vector<32x8xf32>
    %cst_182 = arith.constant dense<0.000000e+00> : vector<48x8xf32>
    %304 = tpu.matmul %218, %303, %cst_182 {dimension_numbers = #tpu.dot_dimension_numbers<[1], [0], [0], [1], [0, 0, 1, 1], [], []>} : vector<48x32xf32>, vector<32x8xf32>, vector<48x8xf32> -> vector<48x8xf32>
    %c39 = arith.constant 39 : index
    %c0_183 = arith.constant 0 : index
    %c0_184 = arith.constant 0 : index
    %305 = vector.load %arg3[%c39, %c0_183, %c0_184] : memref<48x32x8xf32, #tpu.memory_space<vmem>>, vector<1x32x8xf32>
    %306 = vector.shape_cast %305 : vector<1x32x8xf32> to vector<32x8xf32>
    %cst_185 = arith.constant dense<0.000000e+00> : vector<48x8xf32>
    %307 = tpu.matmul %218, %306, %cst_185 {dimension_numbers = #tpu.dot_dimension_numbers<[1], [0], [0], [1], [0, 0, 1, 1], [], []>} : vector<48x32xf32>, vector<32x8xf32>, vector<48x8xf32> -> vector<48x8xf32>
    %c40 = arith.constant 40 : index
    %c0_186 = arith.constant 0 : index
    %c0_187 = arith.constant 0 : index
    %308 = vector.load %arg3[%c40, %c0_186, %c0_187] : memref<48x32x8xf32, #tpu.memory_space<vmem>>, vector<1x32x8xf32>
    %309 = vector.shape_cast %308 : vector<1x32x8xf32> to vector<32x8xf32>
    %cst_188 = arith.constant dense<0.000000e+00> : vector<48x8xf32>
    %310 = tpu.matmul %218, %309, %cst_188 {dimension_numbers = #tpu.dot_dimension_numbers<[1], [0], [0], [1], [0, 0, 1, 1], [], []>} : vector<48x32xf32>, vector<32x8xf32>, vector<48x8xf32> -> vector<48x8xf32>
    %311 = arith.mulf %298, %2 : vector<48x8xf32>
    %312 = arith.mulf %301, %4 : vector<48x8xf32>
    %313 = arith.addf %311, %312 : vector<48x8xf32>
    %314 = arith.mulf %304, %2 : vector<48x8xf32>
    %315 = arith.mulf %307, %4 : vector<48x8xf32>
    %316 = arith.addf %314, %315 : vector<48x8xf32>
    %cst_189 = arith.constant dense<0.000000e+00> : vector<48x48xf32>
    %317 = tpu.matmul %313, %316, %cst_189 {dimension_numbers = #tpu.dot_dimension_numbers<[1], [1], [0], [0], [0, 0, 1, 0], [], []>} : vector<48x8xf32>, vector<48x8xf32>, vector<48x48xf32> -> vector<48x48xf32>
    %318 = arith.addf %317, %5 : vector<48x48xf32>
    %cst_190 = arith.constant dense<0xFF800000> : vector<48xf32>
    %319 = vector.multi_reduction <maximumf>, %318, %cst_190 [1] : vector<48x48xf32> to vector<48xf32>
    %320 = vector.shape_cast %319 : vector<48xf32> to vector<48x1xf32>
    %321 = vector.broadcast %320 : vector<48x1xf32> to vector<48x48xf32>
    %322 = arith.subf %318, %321 : vector<48x48xf32>
    %323 = math.exp %322 : vector<48x48xf32>
    %cst_191 = arith.constant dense<0.000000e+00> : vector<48xf32>
    %324 = vector.multi_reduction <add>, %323, %cst_191 [1] : vector<48x48xf32> to vector<48xf32>
    %325 = vector.shape_cast %324 : vector<48xf32> to vector<48x1xf32>
    %326 = tpu.reciprocal %325 {approx = true} : vector<48x1xf32> -> vector<48x1xf32>
    %327 = vector.broadcast %326 : vector<48x1xf32> to vector<48x48xf32>
    %328 = arith.mulf %323, %327 : vector<48x48xf32>
    %cst_192 = arith.constant dense<0.000000e+00> : vector<48x8xf32>
    %329 = tpu.matmul %328, %310, %cst_192 {dimension_numbers = #tpu.dot_dimension_numbers<[1], [0], [0], [1], [0, 0, 1, 1], [], []>} : vector<48x48xf32>, vector<48x8xf32>, vector<48x8xf32> -> vector<48x8xf32>
    %c41 = arith.constant 41 : index
    %c0_193 = arith.constant 0 : index
    %c0_194 = arith.constant 0 : index
    %330 = vector.load %arg3[%c41, %c0_193, %c0_194] : memref<48x32x8xf32, #tpu.memory_space<vmem>>, vector<1x32x8xf32>
    %331 = vector.shape_cast %330 : vector<1x32x8xf32> to vector<32x8xf32>
    %cst_195 = arith.constant dense<0.000000e+00> : vector<48x32xf32>
    %332 = tpu.matmul %329, %331, %cst_195 {dimension_numbers = #tpu.dot_dimension_numbers<[1], [1], [0], [0], [0, 0, 1, 0], [], []>} : vector<48x8xf32>, vector<32x8xf32>, vector<48x32xf32> -> vector<48x32xf32>
    %333 = arith.addf %295, %332 : vector<48x32xf32>
    %c42 = arith.constant 42 : index
    %c0_196 = arith.constant 0 : index
    %c0_197 = arith.constant 0 : index
    %334 = vector.load %arg3[%c42, %c0_196, %c0_197] : memref<48x32x8xf32, #tpu.memory_space<vmem>>, vector<1x32x8xf32>
    %335 = vector.shape_cast %334 : vector<1x32x8xf32> to vector<32x8xf32>
    %cst_198 = arith.constant dense<0.000000e+00> : vector<48x8xf32>
    %336 = tpu.matmul %218, %335, %cst_198 {dimension_numbers = #tpu.dot_dimension_numbers<[1], [0], [0], [1], [0, 0, 1, 1], [], []>} : vector<48x32xf32>, vector<32x8xf32>, vector<48x8xf32> -> vector<48x8xf32>
    %c43 = arith.constant 43 : index
    %c0_199 = arith.constant 0 : index
    %c0_200 = arith.constant 0 : index
    %337 = vector.load %arg3[%c43, %c0_199, %c0_200] : memref<48x32x8xf32, #tpu.memory_space<vmem>>, vector<1x32x8xf32>
    %338 = vector.shape_cast %337 : vector<1x32x8xf32> to vector<32x8xf32>
    %cst_201 = arith.constant dense<0.000000e+00> : vector<48x8xf32>
    %339 = tpu.matmul %218, %338, %cst_201 {dimension_numbers = #tpu.dot_dimension_numbers<[1], [0], [0], [1], [0, 0, 1, 1], [], []>} : vector<48x32xf32>, vector<32x8xf32>, vector<48x8xf32> -> vector<48x8xf32>
    %c44 = arith.constant 44 : index
    %c0_202 = arith.constant 0 : index
    %c0_203 = arith.constant 0 : index
    %340 = vector.load %arg3[%c44, %c0_202, %c0_203] : memref<48x32x8xf32, #tpu.memory_space<vmem>>, vector<1x32x8xf32>
    %341 = vector.shape_cast %340 : vector<1x32x8xf32> to vector<32x8xf32>
    %cst_204 = arith.constant dense<0.000000e+00> : vector<48x8xf32>
    %342 = tpu.matmul %218, %341, %cst_204 {dimension_numbers = #tpu.dot_dimension_numbers<[1], [0], [0], [1], [0, 0, 1, 1], [], []>} : vector<48x32xf32>, vector<32x8xf32>, vector<48x8xf32> -> vector<48x8xf32>
    %c45 = arith.constant 45 : index
    %c0_205 = arith.constant 0 : index
    %c0_206 = arith.constant 0 : index
    %343 = vector.load %arg3[%c45, %c0_205, %c0_206] : memref<48x32x8xf32, #tpu.memory_space<vmem>>, vector<1x32x8xf32>
    %344 = vector.shape_cast %343 : vector<1x32x8xf32> to vector<32x8xf32>
    %cst_207 = arith.constant dense<0.000000e+00> : vector<48x8xf32>
    %345 = tpu.matmul %218, %344, %cst_207 {dimension_numbers = #tpu.dot_dimension_numbers<[1], [0], [0], [1], [0, 0, 1, 1], [], []>} : vector<48x32xf32>, vector<32x8xf32>, vector<48x8xf32> -> vector<48x8xf32>
    %c46 = arith.constant 46 : index
    %c0_208 = arith.constant 0 : index
    %c0_209 = arith.constant 0 : index
    %346 = vector.load %arg3[%c46, %c0_208, %c0_209] : memref<48x32x8xf32, #tpu.memory_space<vmem>>, vector<1x32x8xf32>
    %347 = vector.shape_cast %346 : vector<1x32x8xf32> to vector<32x8xf32>
    %cst_210 = arith.constant dense<0.000000e+00> : vector<48x8xf32>
    %348 = tpu.matmul %218, %347, %cst_210 {dimension_numbers = #tpu.dot_dimension_numbers<[1], [0], [0], [1], [0, 0, 1, 1], [], []>} : vector<48x32xf32>, vector<32x8xf32>, vector<48x8xf32> -> vector<48x8xf32>
    %349 = arith.mulf %336, %2 : vector<48x8xf32>
    %350 = arith.mulf %339, %4 : vector<48x8xf32>
    %351 = arith.addf %349, %350 : vector<48x8xf32>
    %352 = arith.mulf %342, %2 : vector<48x8xf32>
    %353 = arith.mulf %345, %4 : vector<48x8xf32>
    %354 = arith.addf %352, %353 : vector<48x8xf32>
    %cst_211 = arith.constant dense<0.000000e+00> : vector<48x48xf32>
    %355 = tpu.matmul %351, %354, %cst_211 {dimension_numbers = #tpu.dot_dimension_numbers<[1], [1], [0], [0], [0, 0, 1, 0], [], []>} : vector<48x8xf32>, vector<48x8xf32>, vector<48x48xf32> -> vector<48x48xf32>
    %356 = arith.addf %355, %5 : vector<48x48xf32>
    %cst_212 = arith.constant dense<0xFF800000> : vector<48xf32>
    %357 = vector.multi_reduction <maximumf>, %356, %cst_212 [1] : vector<48x48xf32> to vector<48xf32>
    %358 = vector.shape_cast %357 : vector<48xf32> to vector<48x1xf32>
    %359 = vector.broadcast %358 : vector<48x1xf32> to vector<48x48xf32>
    %360 = arith.subf %356, %359 : vector<48x48xf32>
    %361 = math.exp %360 : vector<48x48xf32>
    %cst_213 = arith.constant dense<0.000000e+00> : vector<48xf32>
    %362 = vector.multi_reduction <add>, %361, %cst_213 [1] : vector<48x48xf32> to vector<48xf32>
    %363 = vector.shape_cast %362 : vector<48xf32> to vector<48x1xf32>
    %364 = tpu.reciprocal %363 {approx = true} : vector<48x1xf32> -> vector<48x1xf32>
    %365 = vector.broadcast %364 : vector<48x1xf32> to vector<48x48xf32>
    %366 = arith.mulf %361, %365 : vector<48x48xf32>
    %cst_214 = arith.constant dense<0.000000e+00> : vector<48x8xf32>
    %367 = tpu.matmul %366, %348, %cst_214 {dimension_numbers = #tpu.dot_dimension_numbers<[1], [0], [0], [1], [0, 0, 1, 1], [], []>} : vector<48x48xf32>, vector<48x8xf32>, vector<48x8xf32> -> vector<48x8xf32>
    %c47 = arith.constant 47 : index
    %c0_215 = arith.constant 0 : index
    %c0_216 = arith.constant 0 : index
    %368 = vector.load %arg3[%c47, %c0_215, %c0_216] : memref<48x32x8xf32, #tpu.memory_space<vmem>>, vector<1x32x8xf32>
    %369 = vector.shape_cast %368 : vector<1x32x8xf32> to vector<32x8xf32>
    %cst_217 = arith.constant dense<0.000000e+00> : vector<48x32xf32>
    %370 = tpu.matmul %367, %369, %cst_217 {dimension_numbers = #tpu.dot_dimension_numbers<[1], [1], [0], [0], [0, 0, 1, 0], [], []>} : vector<48x8xf32>, vector<32x8xf32>, vector<48x32xf32> -> vector<48x32xf32>
    %371 = arith.addf %333, %370 : vector<48x32xf32>
    %372 = arith.addf %204, %371 : vector<48x32xf32>
    %c3_218 = arith.constant 3 : index
    %c0_219 = arith.constant 0 : index
    %c0_220 = arith.constant 0 : index
    %373 = vector.load %arg5[%c3_218, %c0_219, %c0_220] : memref<8x1x32xf32, #tpu.memory_space<vmem>>, vector<1x1x32xf32>
    %374 = vector.shape_cast %373 : vector<1x1x32xf32> to vector<1x32xf32>
    %375 = arith.mulf %372, %372 : vector<48x32xf32>
    %cst_221 = arith.constant dense<0.000000e+00> : vector<48xf32>
    %376 = vector.multi_reduction <add>, %375, %cst_221 [1] : vector<48x32xf32> to vector<48xf32>
    %377 = vector.shape_cast %376 : vector<48xf32> to vector<48x1xf32>
    %cst_222 = arith.constant 3.200000e+01 : f32
    %378 = vector.broadcast %cst_222 : f32 to vector<48x1xf32>
    %379 = arith.divf %377, %378 : vector<48x1xf32>
    %cst_223 = arith.constant 9.99999997E-7 : f32
    %380 = vector.broadcast %cst_223 : f32 to vector<48x1xf32>
    %381 = arith.addf %379, %380 : vector<48x1xf32>
    %382 = math.rsqrt %381 : vector<48x1xf32>
    %383 = vector.broadcast %382 : vector<48x1xf32> to vector<48x32xf32>
    %384 = arith.mulf %372, %383 : vector<48x32xf32>
    %385 = vector.broadcast %374 : vector<1x32xf32> to vector<48x32xf32>
    %386 = arith.mulf %384, %385 : vector<48x32xf32>
    %c3_224 = arith.constant 3 : index
    %c0_225 = arith.constant 0 : index
    %c0_226 = arith.constant 0 : index
    %387 = vector.load %arg4[%c3_224, %c0_225, %c0_226] : memref<6x32x64xf32, #tpu.memory_space<vmem>>, vector<1x32x64xf32>
    %388 = vector.shape_cast %387 : vector<1x32x64xf32> to vector<32x64xf32>
    %cst_227 = arith.constant dense<0.000000e+00> : vector<48x64xf32>
    %389 = tpu.matmul %386, %388, %cst_227 {dimension_numbers = #tpu.dot_dimension_numbers<[1], [0], [0], [1], [0, 0, 1, 1], [], []>} : vector<48x32xf32>, vector<32x64xf32>, vector<48x64xf32> -> vector<48x64xf32>
    %c4_228 = arith.constant 4 : index
    %c0_229 = arith.constant 0 : index
    %c0_230 = arith.constant 0 : index
    %390 = vector.load %arg4[%c4_228, %c0_229, %c0_230] : memref<6x32x64xf32, #tpu.memory_space<vmem>>, vector<1x32x64xf32>
    %391 = vector.shape_cast %390 : vector<1x32x64xf32> to vector<32x64xf32>
    %cst_231 = arith.constant dense<0.000000e+00> : vector<48x64xf32>
    %392 = tpu.matmul %386, %391, %cst_231 {dimension_numbers = #tpu.dot_dimension_numbers<[1], [0], [0], [1], [0, 0, 1, 1], [], []>} : vector<48x32xf32>, vector<32x64xf32>, vector<48x64xf32> -> vector<48x64xf32>
    %393 = arith.negf %389 : vector<48x64xf32>
    %394 = math.exp %393 : vector<48x64xf32>
    %cst_232 = arith.constant 1.000000e+00 : f32
    %395 = vector.broadcast %cst_232 : f32 to vector<48x64xf32>
    %396 = arith.addf %395, %394 : vector<48x64xf32>
    %397 = arith.divf %395, %396 : vector<48x64xf32>
    %398 = arith.mulf %389, %397 : vector<48x64xf32>
    %399 = arith.mulf %398, %392 : vector<48x64xf32>
    %c5_233 = arith.constant 5 : index
    %c0_234 = arith.constant 0 : index
    %c0_235 = arith.constant 0 : index
    %400 = vector.load %arg4[%c5_233, %c0_234, %c0_235] : memref<6x32x64xf32, #tpu.memory_space<vmem>>, vector<1x32x64xf32>
    %401 = vector.shape_cast %400 : vector<1x32x64xf32> to vector<32x64xf32>
    %cst_236 = arith.constant dense<0.000000e+00> : vector<48x32xf32>
    %402 = tpu.matmul %399, %401, %cst_236 {dimension_numbers = #tpu.dot_dimension_numbers<[1], [1], [0], [0], [0, 0, 1, 0], [], []>} : vector<48x64xf32>, vector<32x64xf32>, vector<48x32xf32> -> vector<48x32xf32>
    %403 = arith.addf %372, %402 : vector<48x32xf32>
    %c4_237 = arith.constant 4 : index
    %c0_238 = arith.constant 0 : index
    %c0_239 = arith.constant 0 : index
    %404 = vector.load %arg5[%c4_237, %c0_238, %c0_239] : memref<8x1x32xf32, #tpu.memory_space<vmem>>, vector<1x1x32xf32>
    %405 = vector.shape_cast %404 : vector<1x1x32xf32> to vector<1x32xf32>
    %406 = arith.mulf %403, %403 : vector<48x32xf32>
    %cst_240 = arith.constant dense<0.000000e+00> : vector<48xf32>
    %407 = vector.multi_reduction <add>, %406, %cst_240 [1] : vector<48x32xf32> to vector<48xf32>
    %408 = vector.shape_cast %407 : vector<48xf32> to vector<48x1xf32>
    %cst_241 = arith.constant 3.200000e+01 : f32
    %409 = vector.broadcast %cst_241 : f32 to vector<48x1xf32>
    %410 = arith.divf %408, %409 : vector<48x1xf32>
    %cst_242 = arith.constant 9.99999997E-7 : f32
    %411 = vector.broadcast %cst_242 : f32 to vector<48x1xf32>
    %412 = arith.addf %410, %411 : vector<48x1xf32>
    %413 = math.rsqrt %412 : vector<48x1xf32>
    %414 = vector.broadcast %413 : vector<48x1xf32> to vector<48x32xf32>
    %415 = arith.mulf %403, %414 : vector<48x32xf32>
    %416 = vector.broadcast %405 : vector<1x32xf32> to vector<48x32xf32>
    %417 = arith.mulf %415, %416 : vector<48x32xf32>
    %c0_243 = arith.constant 0 : index
    %c0_244 = arith.constant 0 : index
    %418 = vector.load %arg6[%c0_243, %c0_244] : memref<40x128xf32, #tpu.memory_space<vmem>>, vector<32x128xf32>
    %cst_245 = arith.constant dense<0.000000e+00> : vector<48x128xf32>
    %419 = tpu.matmul %417, %418, %cst_245 {dimension_numbers = #tpu.dot_dimension_numbers<[1], [0], [0], [1], [0, 0, 1, 1], [], []>} : vector<48x32xf32>, vector<32x128xf32>, vector<48x128xf32> -> vector<48x128xf32>
    %c32_246 = arith.constant 32 : index
    %c0_247 = arith.constant 0 : index
    %420 = vector.load %arg6[%c32_246, %c0_247] : memref<40x128xf32, #tpu.memory_space<vmem>>, vector<1x128xf32>
    %421 = vector.broadcast %420 : vector<1x128xf32> to vector<48x128xf32>
    %422 = arith.addf %419, %421 : vector<48x128xf32>
    %c0_248 = arith.constant 0 : index
    %c0_249 = arith.constant 0 : index
    %423 = vector.load %arg7[%c0_248, %c0_249] : memref<48x128xf32, #tpu.memory_space<vmem>>, vector<48x128xf32>
    tpu.vector_store %arg7[%c0_248, %c0_249], %422 {strides = array<i32>} : memref<48x128xf32, #tpu.memory_space<vmem>>, vector<48x128xf32>,
    return
  }
}

</mosaic_0001>

<llo_original>
// kernel: link_decoder_forward.1
$region0: #{link_decoder_forward.1}
  #allocation0 [shape = 'u32[]', space=smem, size = 0x4, offset = 0x4, fixed_abs, tag = 'smem constant byte address 0x4 - core index']
  #allocation1 [shape = 'u32[72,128]{1,0:T(1,128)}', space=vmem, size = 0x9000, scoped, tag = 'internal scratch']
  %s0 = inlined_call_operand.vmem [shape: f32[48,32], index: 0, kind: input, shape index: {}]
  %s1 = inlined_call_operand.vmem [shape: f32[2,48,8], index: 1, kind: input, shape index: {}]
  %s2 = inlined_call_operand.vmem [shape: f32[48,48], index: 2, kind: input, shape index: {}]
  %s3 = inlined_call_operand.vmem [shape: f32[48,32,8], index: 3, kind: input, shape index: {}]
  %s4 = inlined_call_operand.vmem [shape: f32[6,32,64], index: 4, kind: input, shape index: {}]
  %s5 = inlined_call_operand.vmem [shape: f32[8,1,32], index: 5, kind: input, shape index: {}]
  %s6 = inlined_call_operand.vmem [shape: f32[40,128], index: 6, kind: input, shape index: {}]
  %s7 = inlined_call_operand.vmem [shape: f32[48,128], index: 7, kind: output, shape index: {}]
  %s8 = sld [smem:[#allocation0]]
  $region38: #{link_decoder_forward.1} parent=0
    _
  %s10 = ssub.s32 1, %s8
  %s11 = scalar_select 0, %s10, %s8
  // Predicated region
  $region2: #{link_decoder_forward.1} parent=0 // pred_check
    _
  $region3: #{link_decoder_forward.1} parent=0 // pred_check_branch
    %13 = sbr.rel (0) target = $region5
  $region4: #{link_decoder_forward.1} parent=0 // pred_region
    _
  $region5: #{link_decoder_forward.1} parent=0 // pred_fallthru
    _
  // Predicated region
  $region6: #{link_decoder_forward.1} parent=0 // pred_check
    _
  $region7: #{link_decoder_forward.1} parent=0 // pred_check_branch
    %15 = sbr.rel (0) target = $region9
  $region8: #{link_decoder_forward.1} parent=0 // pred_region
    _
  $region9: #{link_decoder_forward.1} parent=0 // pred_fallthru
    _
  // Predicated region
  $region10: #{link_decoder_forward.1} parent=0 // pred_check
    _
  $region11: #{link_decoder_forward.1} parent=0 // pred_check_branch
    %17 = sbr.rel (0) target = $region13
  $region12: #{link_decoder_forward.1} parent=0 // pred_region
    _
  $region13: #{link_decoder_forward.1} parent=0 // pred_fallthru
    _
  // Predicated region
  $region14: #{link_decoder_forward.1} parent=0 // pred_check
    _
  $region15: #{link_decoder_forward.1} parent=0 // pred_check_branch
    %19 = sbr.rel (0) target = $region17
  $region16: #{link_decoder_forward.1} parent=0 // pred_region
    _
  $region17: #{link_decoder_forward.1} parent=0 // pred_fallthru
    _
  // Predicated region
  $region18: #{link_decoder_forward.1} parent=0 // pred_check
    _
  $region19: #{link_decoder_forward.1} parent=0 // pred_check_branch
    %21 = sbr.rel (0) target = $region21
  $region20: #{link_decoder_forward.1} parent=0 // pred_region
    _
  $region21: #{link_decoder_forward.1} parent=0 // pred_fallthru
    _
  // Predicated region
  $region22: #{link_decoder_forward.1} parent=0 // pred_check
    _
  $region23: #{link_decoder_forward.1} parent=0 // pred_check_branch
    %23 = sbr.rel (0) target = $region25
  $region24: #{link_decoder_forward.1} parent=0 // pred_region
    _
  $region25: #{link_decoder_forward.1} parent=0 // pred_fallthru
    _
  // Predicated region
  $region26: #{link_decoder_forward.1} parent=0 // pred_check
    _
  $region27: #{link_decoder_forward.1} parent=0 // pred_check_branch
    %25 = sbr.rel (0) target = $region29
  $region28: #{link_decoder_forward.1} parent=0 // pred_region
    _
  $region29: #{link_decoder_forward.1} parent=0 // pred_fallthru
    _
  %v26 = vld [vmem:[%s0] sm:$0xff]
  %v27 = vld [vmem:[%s0 + $0x8] sm:$0xff]
  %v28 = vld [vmem:[%s0 + $0x10] sm:$0xff]
  %v29 = vld [vmem:[%s0 + $0x18] sm:$0xff]
  %v30 = vld [vmem:[%s0 + $0x20] sm:$0xff]
  %v31 = vld [vmem:[%s0 + $0x28] sm:$0xff]
  %v32 = vld [vmem:[%s1] sm:$0xff]
  %v33 = vld [vmem:[%s1 + $0x8] sm:$0xff]
  %v34 = vld [vmem:[%s1 + $0x10] sm:$0xff]
  %v35 = vld [vmem:[%s1 + $0x18] sm:$0xff]
  %v36 = vld [vmem:[%s1 + $0x20] sm:$0xff]
  %v37 = vld [vmem:[%s1 + $0x28] sm:$0xff]
  %s38 = scalar_lea.vmem %s1, 48
  %v39 = vld [vmem:[%s38] sm:$0xff]
  %v40 = vld [vmem:[%s38 + $0x8] sm:$0xff]
  %v41 = vld [vmem:[%s38 + $0x10] sm:$0xff]
  %v42 = vld [vmem:[%s38 + $0x18] sm:$0xff]
  %v43 = vld [vmem:[%s38 + $0x20] sm:$0xff]
  %v44 = vld [vmem:[%s38 + $0x28] sm:$0xff]
  %v45 = vld [vmem:[%s2] sm:$0xff]
  %v46 = vld [vmem:[%s2 + $0x8] sm:$0xff]
  %v47 = vld [vmem:[%s2 + $0x10] sm:$0xff]
  %v48 = vld [vmem:[%s2 + $0x18] sm:$0xff]
  %v49 = vld [vmem:[%s2 + $0x20] sm:$0xff]
  %v50 = vld [vmem:[%s2 + $0x28] sm:$0xff]
  %v51 = vld [vmem:[%s5] sm:$0x1]
  %v52 = vmul.f32 %v26, %v26
  %v53 = vmul.f32 %v27, %v27
  %v54 = vmul.f32 %v28, %v28
  %v55 = vmul.f32 %v29, %v29
  %v56 = vmul.f32 %v30, %v30
  %v57 = vmul.f32 %v31, %v31
  %vm58 = vcmask 261120
  %v59 = vsel %vm58, %v52, 0.0
  %60 = vadd.xlane.f32.xlu0 %v59
  %v61 = vpop.xlane.xlu0 %60
  %v62 = vsel %vm58, %v53, 0.0
  %63 = vadd.xlane.f32.xlu0 %v62
  %v64 = vpop.xlane.xlu0 %63
  %v65 = vsel %vm58, %v54, 0.0
  %66 = vadd.xlane.f32.xlu0 %v65
  %v67 = vpop.xlane.xlu0 %66
  %v68 = vsel %vm58, %v55, 0.0
  %69 = vadd.xlane.f32.xlu0 %v68
  %v70 = vpop.xlane.xlu0 %69
  %v71 = vsel %vm58, %v56, 0.0
  %72 = vadd.xlane.f32.xlu0 %v71
  %v73 = vpop.xlane.xlu0 %72
  %v74 = vsel %vm58, %v57, 0.0
  %75 = vadd.xlane.f32.xlu0 %v74
  %v76 = vpop.xlane.xlu0 %75
  %v77 = vrcp.pop 32.0
  %v78 = vmul.f32 32.0, %v77
  %v79 = vsub.f32 1.0, %v78
  %v80 = vmul.f32 %v77, %v79
  %v81 = vadd.f32 %v77, %v80
  %vm82 = vweird.f32 %v77
  %v83 = vsel %vm82, %v77, %v81
  %v84 = vmul.f32 %v61, %v83
  %v85 = vmul.f32 %v64, %v83
  %v86 = vmul.f32 %v67, %v83
  %v87 = vmul.f32 %v70, %v83
  %v88 = vmul.f32 %v73, %v83
  %v89 = vmul.f32 %v76, %v83
  %v90 = vadd.f32 %v84, 1e-06
  %v91 = vadd.f32 %v85, 1e-06
  %v92 = vadd.f32 %v86, 1e-06
  %v93 = vadd.f32 %v87, 1e-06
  %v94 = vadd.f32 %v88, 1e-06
  %v95 = vadd.f32 %v89, 1e-06
  %v96 = vrsqrt.pop %v90
  %v97 = vmul.f32 %v96, %v90
  %v98 = vmul.f32 %v97, %v96
  %v99 = vmul.f32 0.5, %v98
  %v100 = vsub.f32 1.5, %v99
  %v101 = vmul.f32 %v96, %v100
  %vm102 = vweird.f32 %v90
  %vm103 = vweird.f32 %v96
  %vm104 = vmor %vm102, %vm103
  %v105 = vsel %vm104, %v96, %v101
  %v106 = vrsqrt.pop %v91
  %v107 = vmul.f32 %v106, %v91
  %v108 = vmul.f32 %v107, %v106
  %v109 = vmul.f32 0.5, %v108
  %v110 = vsub.f32 1.5, %v109
  %v111 = vmul.f32 %v106, %v110
  %vm112 = vweird.f32 %v91
  %vm113 = vweird.f32 %v106
  %vm114 = vmor %vm112, %vm113
  %v115 = vsel %vm114, %v106, %v111
  %v116 = vrsqrt.pop %v92
  %v117 = vmul.f32 %v116, %v92
  %v118 = vmul.f32 %v117, %v116
  %v119 = vmul.f32 0.5, %v118
  %v120 = vsub.f32 1.5, %v119
  %v121 = vmul.f32 %v116, %v120
  %vm122 = vweird.f32 %v92
  %vm123 = vweird.f32 %v116
  %vm124 = vmor %vm122, %vm123
  %v125 = vsel %vm124, %v116, %v121
  %v126 = vrsqrt.pop %v93
  %v127 = vmul.f32 %v126, %v93
  %v128 = vmul.f32 %v127, %v126
  %v129 = vmul.f32 0.5, %v128
  %v130 = vsub.f32 1.5, %v129
  %v131 = vmul.f32 %v126, %v130
  %vm132 = vweird.f32 %v93
  %vm133 = vweird.f32 %v126
  %vm134 = vmor %vm132, %vm133
  %v135 = vsel %vm134, %v126, %v131
  %v136 = vrsqrt.pop %v94
  %v137 = vmul.f32 %v136, %v94
  %v138 = vmul.f32 %v137, %v136
  %v139 = vmul.f32 0.5, %v138
  %v140 = vsub.f32 1.5, %v139
  %v141 = vmul.f32 %v136, %v140
  %vm142 = vweird.f32 %v94
  %vm143 = vweird.f32 %v136
  %vm144 = vmor %vm142, %vm143
  %v145 = vsel %vm144, %v136, %v141
  %v146 = vrsqrt.pop %v95
  %v147 = vmul.f32 %v146, %v95
  %v148 = vmul.f32 %v147, %v146
  %v149 = vmul.f32 0.5, %v148
  %v150 = vsub.f32 1.5, %v149
  %v151 = vmul.f32 %v146, %v150
  %vm152 = vweird.f32 %v95
  %vm153 = vweird.f32 %v146
  %vm154 = vmor %vm152, %vm153
  %v155 = vsel %vm154, %v146, %v151
  %v156 = vmul.f32 %v26, %v105
  %v157 = vmul.f32 %v27, %v115
  %v158 = vmul.f32 %v28, %v125
  %v159 = vmul.f32 %v29, %v135
  %v160 = vmul.f32 %v30, %v145
  %v161 = vmul.f32 %v31, %v155
  %v163 = vperm.slane %v51, 0
  %v165 = vmul.f32 %v156, %v163
  %v166 = vmul.f32 %v157, %v163
  %v167 = vmul.f32 %v158, %v163
  %v168 = vmul.f32 %v159, %v163
  %v169 = vmul.f32 %v160, %v163
  %v170 = vmul.f32 %v161, %v163
  %v171 = vld [vmem:[%s3] sm:$0xff]
  %v172 = vld [vmem:[%s3 + $0x8] sm:$0xff]
  %v173 = vld [vmem:[%s3 + $0x10] sm:$0xff]
  %v174 = vld [vmem:[%s3 + $0x18] sm:$0xff]
  %v176 = vsel %vm58, %v165, 0
  %v179 = vsel %vm58, %v166, 0
  %v182 = vsel %vm58, %v167, 0
  %v185 = vsel %vm58, %v168, 0
  %v188 = vsel %vm58, %v169, 0
  %v191 = vsel %vm58, %v170, 0
  %193 = vmatpush.msra.mxu0 0.0
  %194 = vmatpush.msra.mxu0 0.0
  %195 = vmatpush.msra.mxu0 0.0
  %196 = vmatpush.msra.mxu0 0.0
  %197 = vmatpush.msra.mxu0 0.0
  %198 = vmatpush.msra.mxu0 0.0
  %199 = vmatpush.msra.mxu0 0.0
  %200 = vmatpush.msra.mxu0 0.0
  %201 = vmatpush.msra.mxu0 0.0
  %202 = vmatpush.msra.mxu0 0.0
  %203 = vmatpush.msra.mxu0 0.0
  %204 = vmatpush.msra.mxu0 0.0
  %205 = vmatpush.msra.mxu0 %v174
  %206 = vmatpush.msra.mxu0 %v173
  %207 = vmatpush.msra.mxu0 %v172
  %208 = vmatpush.msra.mxu0 %v171
  %209 = vmatmul.f32.gmra.mxu0 %v176
  %v210 = vpop.f32.mrf.mxu0
  %v211 = vadd.f32 0.0, %v210
  %212 = vmatmul.f32.gmra.mxu0 %v179
  %v213 = vpop.f32.mrf.mxu0
  %v214 = vadd.f32 0.0, %v213
  %215 = vmatmul.f32.gmra.mxu0 %v182
  %v216 = vpop.f32.mrf.mxu0
  %v217 = vadd.f32 0.0, %v216
  %218 = vmatmul.f32.gmra.mxu0 %v185
  %v219 = vpop.f32.mrf.mxu0
  %v220 = vadd.f32 0.0, %v219
  %221 = vmatmul.f32.gmra.mxu0 %v188
  %v222 = vpop.f32.mrf.mxu0
  %v223 = vadd.f32 0.0, %v222
  %224 = vmatmul.f32.gmra.mxu0 %v191
  %v225 = vpop.f32.mrf.mxu0
  %v226 = vadd.f32 0.0, %v225
  %227 = vdwg.mxu0
  %s228 = scalar_lea.vmem %s3, 32
  %v229 = vld [vmem:[%s228] sm:$0xff]
  %v230 = vld [vmem:[%s228 + $0x8] sm:$0xff]
  %v231 = vld [vmem:[%s228 + $0x10] sm:$0xff]
  %v232 = vld [vmem:[%s228 + $0x18] sm:$0xff]
  %233 = vmatpush.msra.mxu0 0.0
  %234 = vmatpush.msra.mxu0 0.0
  %235 = vmatpush.msra.mxu0 0.0
  %236 = vmatpush.msra.mxu0 0.0
  %237 = vmatpush.msra.mxu0 0.0
  %238 = vmatpush.msra.mxu0 0.0
  %239 = vmatpush.msra.mxu0 0.0
  %240 = vmatpush.msra.mxu0 0.0
  %241 = vmatpush.msra.mxu0 0.0
  %242 = vmatpush.msra.mxu0 0.0
  %243 = vmatpush.msra.mxu0 0.0
  %244 = vmatpush.msra.mxu0 0.0
  %245 = vmatpush.msra.mxu0 %v232
  %246 = vmatpush.msra.mxu0 %v231
  %247 = vmatpush.msra.mxu0 %v230
  %248 = vmatpush.msra.mxu0 %v229
  %249 = vmatmul.f32.gmra.mxu0 %v176
  %v250 = vpop.f32.mrf.mxu0
  %v251 = vadd.f32 0.0, %v250
  %252 = vmatmul.f32.gmra.mxu0 %v179
  %v253 = vpop.f32.mrf.mxu0
  %v254 = vadd.f32 0.0, %v253
  %255 = vmatmul.f32.gmra.mxu0 %v182
  %v256 = vpop.f32.mrf.mxu0
  %v257 = vadd.f32 0.0, %v256
  %258 = vmatmul.f32.gmra.mxu0 %v185
  %v259 = vpop.f32.mrf.mxu0
  %v260 = vadd.f32 0.0, %v259
  %261 = vmatmul.f32.gmra.mxu0 %v188
  %v262 = vpop.f32.mrf.mxu0
  %v263 = vadd.f32 0.0, %v262
  %264 = vmatmul.f32.gmra.mxu0 %v191
  %v265 = vpop.f32.mrf.mxu0
  %v266 = vadd.f32 0.0, %v265
  %267 = vdwg.mxu0
  %s268 = scalar_lea.vmem %s3, 64
  %v269 = vld [vmem:[%s268] sm:$0xff]
  %v270 = vld [vmem:[%s268 + $0x8] sm:$0xff]
  %v271 = vld [vmem:[%s268 + $0x10] sm:$0xff]
  %v272 = vld [vmem:[%s268 + $0x18] sm:$0xff]
  %273 = vmatpush.msra.mxu0 0.0
  %274 = vmatpush.msra.mxu0 0.0
  %275 = vmatpush.msra.mxu0 0.0
  %276 = vmatpush.msra.mxu0 0.0
  %277 = vmatpush.msra.mxu0 0.0
  %278 = vmatpush.msra.mxu0 0.0
  %279 = vmatpush.msra.mxu0 0.0
  %280 = vmatpush.msra.mxu0 0.0
  %281 = vmatpush.msra.mxu0 0.0
  %282 = vmatpush.msra.mxu0 0.0
  %283 = vmatpush.msra.mxu0 0.0
  %284 = vmatpush.msra.mxu0 0.0
  %285 = vmatpush.msra.mxu0 %v272
  %286 = vmatpush.msra.mxu0 %v271
  %287 = vmatpush.msra.mxu0 %v270
  %288 = vmatpush.msra.mxu0 %v269
  %289 = vmatmul.f32.gmra.mxu0 %v176
  %v290 = vpop.f32.mrf.mxu0
  %v291 = vadd.f32 0.0, %v290
  %292 = vmatmul.f32.gmra.mxu0 %v179
  %v293 = vpop.f32.mrf.mxu0
  %v294 = vadd.f32 0.0, %v293
  %295 = vmatmul.f32.gmra.mxu0 %v182
  %v296 = vpop.f32.mrf.mxu0
  %v297 = vadd.f32 0.0, %v296
  %298 = vmatmul.f32.gmra.mxu0 %v185
  %v299 = vpop.f32.mrf.mxu0
  %v300 = vadd.f32 0.0, %v299
  %301 = vmatmul.f32.gmra.mxu0 %v188
  %v302 = vpop.f32.mrf.mxu0
  %v303 = vadd.f32 0.0, %v302
  %304 = vmatmul.f32.gmra.mxu0 %v191
  %v305 = vpop.f32.mrf.mxu0
  %v306 = vadd.f32 0.0, %v305
  %307 = vdwg.mxu0
  %s308 = scalar_lea.vmem %s3, 96
  %v309 = vld [vmem:[%s308] sm:$0xff]
  %v310 = vld [vmem:[%s308 + $0x8] sm:$0xff]
  %v311 = vld [vmem:[%s308 + $0x10] sm:$0xff]
  %v312 = vld [vmem:[%s308 + $0x18] sm:$0xff]
  %313 = vmatpush.msra.mxu0 0.0
  %314 = vmatpush.msra.mxu0 0.0
  %315 = vmatpush.msra.mxu0 0.0
  %316 = vmatpush.msra.mxu0 0.0
  %317 = vmatpush.msra.mxu0 0.0
  %318 = vmatpush.msra.mxu0 0.0
  %319 = vmatpush.msra.mxu0 0.0
  %320 = vmatpush.msra.mxu0 0.0
  %321 = vmatpush.msra.mxu0 0.0
  %322 = vmatpush.msra.mxu0 0.0
  %323 = vmatpush.msra.mxu0 0.0
  %324 = vmatpush.msra.mxu0 0.0
  %325 = vmatpush.msra.mxu0 %v312
  %326 = vmatpush.msra.mxu0 %v311
  %327 = vmatpush.msra.mxu0 %v310
  %328 = vmatpush.msra.mxu0 %v309
  %329 = vmatmul.f32.gmra.mxu0 %v176
  %v330 = vpop.f32.mrf.mxu0
  %v331 = vadd.f32 0.0, %v330
  %332 = vmatmul.f32.gmra.mxu0 %v179
  %v333 = vpop.f32.mrf.mxu0
  %v334 = vadd.f32 0.0, %v333
  %335 = vmatmul.f32.gmra.mxu0 %v182
  %v336 = vpop.f32.mrf.mxu0
  %v337 = vadd.f32 0.0, %v336
  %338 = vmatmul.f32.gmra.mxu0 %v185
  %v339 = vpop.f32.mrf.mxu0
  %v340 = vadd.f32 0.0, %v339
  %341 = vmatmul.f32.gmra.mxu0 %v188
  %v342 = vpop.f32.mrf.mxu0
  %v343 = vadd.f32 0.0, %v342
  %344 = vmatmul.f32.gmra.mxu0 %v191
  %v345 = vpop.f32.mrf.mxu0
  %v346 = vadd.f32 0.0, %v345
  %347 = vdwg.mxu0
  %s348 = scalar_lea.vmem %s3, 128
  %v349 = vld [vmem:[%s348] sm:$0xff]
  %v350 = vld [vmem:[%s348 + $0x8] sm:$0xff]
  %v351 = vld [vmem:[%s348 + $0x10] sm:$0xff]
  %v352 = vld [vmem:[%s348 + $0x18] sm:$0xff]
  %353 = vmatpush.msra.mxu0 0.0
  %354 = vmatpush.msra.mxu0 0.0
  %355 = vmatpush.msra.mxu0 0.0
  %356 = vmatpush.msra.mxu0 0.0
  %357 = vmatpush.msra.mxu0 0.0
  %358 = vmatpush.msra.mxu0 0.0
  %359 = vmatpush.msra.mxu0 0.0
  %360 = vmatpush.msra.mxu0 0.0
  %361 = vmatpush.msra.mxu0 0.0
  %362 = vmatpush.msra.mxu0 0.0
  %363 = vmatpush.msra.mxu0 0.0
  %364 = vmatpush.msra.mxu0 0.0
  %365 = vmatpush.msra.mxu0 %v352
  %366 = vmatpush.msra.mxu0 %v351
  %367 = vmatpush.msra.mxu0 %v350
  %368 = vmatpush.msra.mxu0 %v349
  %369 = vmatmul.f32.gmra.mxu0 %v176
  %v370 = vpop.f32.mrf.mxu0
  %v371 = vadd.f32 0.0, %v370
  %372 = vmatmul.f32.gmra.mxu0 %v179
  %v373 = vpop.f32.mrf.mxu0
  %v374 = vadd.f32 0.0, %v373
  %375 = vmatmul.f32.gmra.mxu0 %v182
  %v376 = vpop.f32.mrf.mxu0
  %v377 = vadd.f32 0.0, %v376
  %378 = vmatmul.f32.gmra.mxu0 %v185
  %v379 = vpop.f32.mrf.mxu0
  %v380 = vadd.f32 0.0, %v379
  %381 = vmatmul.f32.gmra.mxu0 %v188
  %v382 = vpop.f32.mrf.mxu0
  %v383 = vadd.f32 0.0, %v382
  %384 = vmatmul.f32.gmra.mxu0 %v191
  %v385 = vpop.f32.mrf.mxu0
  %v386 = vadd.f32 0.0, %v385
  %387 = vdwg.mxu0
  %v388 = vmul.f32 %v211, %v32
  %v389 = vmul.f32 %v214, %v33
  %v390 = vmul.f32 %v217, %v34
  %v391 = vmul.f32 %v220, %v35
  %v392 = vmul.f32 %v223, %v36
  %v393 = vmul.f32 %v226, %v37
  %v394 = vmul.f32 %v251, %v39
  %v395 = vmul.f32 %v254, %v40
  %v396 = vmul.f32 %v257, %v41
  %v397 = vmul.f32 %v260, %v42
  %v398 = vmul.f32 %v263, %v43
  %v399 = vmul.f32 %v266, %v44
  %v400 = vadd.f32 %v388, %v394
  %v401 = vadd.f32 %v389, %v395
  %v402 = vadd.f32 %v390, %v396
  %v403 = vadd.f32 %v391, %v397
  %v404 = vadd.f32 %v392, %v398
  %v405 = vadd.f32 %v393, %v399
  %v406 = vmul.f32 %v291, %v32
  %v407 = vmul.f32 %v294, %v33
  %v408 = vmul.f32 %v297, %v34
  %v409 = vmul.f32 %v300, %v35
  %v410 = vmul.f32 %v303, %v36
  %v411 = vmul.f32 %v306, %v37
  %v412 = vmul.f32 %v331, %v39
  %v413 = vmul.f32 %v334, %v40
  %v414 = vmul.f32 %v337, %v41
  %v415 = vmul.f32 %v340, %v42
  %v416 = vmul.f32 %v343, %v43
  %v417 = vmul.f32 %v346, %v44
  %v418 = vadd.f32 %v406, %v412
  %v419 = vadd.f32 %v407, %v413
  %v420 = vadd.f32 %v408, %v414
  %v421 = vadd.f32 %v409, %v415
  %v422 = vadd.f32 %v410, %v416
  %v423 = vadd.f32 %v411, %v417
  %vm424 = vcmask 64512
  %v426 = vsel %vm424, %v400, 0
  %v429 = vsel %vm424, %v401, 0
  %v432 = vsel %vm424, %v402, 0
  %v435 = vsel %vm424, %v403, 0
  %v438 = vsel %vm424, %v404, 0
  %v441 = vsel %vm424, %v405, 0
  %v444 = vsel %vm424, %v418, 0
  %v447 = vsel %vm424, %v419, 0
  %v450 = vsel %vm424, %v420, 0
  %v453 = vsel %vm424, %v421, 0
  %v456 = vsel %vm424, %v422, 0
  %v459 = vsel %vm424, %v423, 0
  %461 = vmatpush.xpose.msra.mxu0 0.0
  %462 = vmatpush.xpose.msra.mxu0 0.0
  %463 = vmatpush.xpose.msra.mxu0 0.0
  %464 = vmatpush.xpose.msra.mxu0 0.0
  %465 = vmatpush.xpose.msra.mxu0 0.0
  %466 = vmatpush.xpose.msra.mxu0 0.0
  %467 = vmatpush.xpose.msra.mxu0 0.0
  %468 = vmatpush.xpose.msra.mxu0 0.0
  %469 = vmatpush.xpose.msra.mxu0 0.0
  %470 = vmatpush.xpose.msra.mxu0 0.0
  %471 = vmatpush.xpose.msra.mxu0 %v459
  %472 = vmatpush.xpose.msra.mxu0 %v456
  %473 = vmatpush.xpose.msra.mxu0 %v453
  %474 = vmatpush.xpose.msra.mxu0 %v450
  %475 = vmatpush.xpose.msra.mxu0 %v447
  %476 = vmatpush.xpose.msra.mxu0 %v444
  %477 = vmatmul.f32.gmra.mxu0 %v426
  %v478 = vpop.f32.mrf.mxu0
  %v479 = vadd.f32 %v45, %v478
  %480 = vmatmul.f32.gmra.mxu0 %v429
  %v481 = vpop.f32.mrf.mxu0
  %v482 = vadd.f32 %v46, %v481
  %483 = vmatmul.f32.gmra.mxu0 %v432
  %v484 = vpop.f32.mrf.mxu0
  %v485 = vadd.f32 %v47, %v484
  %486 = vmatmul.f32.gmra.mxu0 %v435
  %v487 = vpop.f32.mrf.mxu0
  %v488 = vadd.f32 %v48, %v487
  %489 = vmatmul.f32.gmra.mxu0 %v438
  %v490 = vpop.f32.mrf.mxu0
  %v491 = vadd.f32 %v49, %v490
  %492 = vmatmul.f32.gmra.mxu0 %v441
  %v493 = vpop.f32.mrf.mxu0
  %v494 = vadd.f32 %v50, %v493
  %495 = vdwg.mxu0
  %vm496 = vcmask 392192
  %v497 = vsel %vm496, %v479, -inf
  %498 = vmax.xlane.f32.xlu0 %v497
  %v499 = vpop.xlane.xlu0 %498
  %v500 = vsel %vm496, %v482, -inf
  %501 = vmax.xlane.f32.xlu0 %v500
  %v502 = vpop.xlane.xlu0 %501
  %v503 = vsel %vm496, %v485, -inf
  %504 = vmax.xlane.f32.xlu0 %v503
  %v505 = vpop.xlane.xlu0 %504
  %v506 = vsel %vm496, %v488, -inf
  %507 = vmax.xlane.f32.xlu0 %v506
  %v508 = vpop.xlane.xlu0 %507
  %v509 = vsel %vm496, %v491, -inf
  %510 = vmax.xlane.f32.xlu0 %v509
  %v511 = vpop.xlane.xlu0 %510
  %v512 = vsel %vm496, %v494, -inf
  %513 = vmax.xlane.f32.xlu0 %v512
  %v514 = vpop.xlane.xlu0 %513
  %v515 = vsub.f32 %v479, %v499
  %v516 = vsub.f32 %v482, %v502
  %v517 = vsub.f32 %v485, %v505
  %v518 = vsub.f32 %v488, %v508
  %v519 = vsub.f32 %v491, %v511
  %v520 = vsub.f32 %v494, %v514
  %v521 = vmul.f32 %v515, 1.442695
  %v522 = vpow.pop %v521
  %v523 = vmul.f32 %v516, 1.442695
  %v524 = vpow.pop %v523
  %v525 = vmul.f32 %v517, 1.442695
  %v526 = vpow.pop %v525
  %v527 = vmul.f32 %v518, 1.442695
  %v528 = vpow.pop %v527
  %v529 = vmul.f32 %v519, 1.442695
  %v530 = vpow.pop %v529
  %v531 = vmul.f32 %v520, 1.442695
  %v532 = vpow.pop %v531
  %v533 = vsel %vm496, %v522, 0.0
  %534 = vadd.xlane.f32.xlu0 %v533
  %v535 = vpop.xlane.xlu0 %534
  %v536 = vsel %vm496, %v524, 0.0
  %537 = vadd.xlane.f32.xlu0 %v536
  %v538 = vpop.xlane.xlu0 %537
  %v539 = vsel %vm496, %v526, 0.0
  %540 = vadd.xlane.f32.xlu0 %v539
  %v541 = vpop.xlane.xlu0 %540
  %v542 = vsel %vm496, %v528, 0.0
  %543 = vadd.xlane.f32.xlu0 %v542
  %v544 = vpop.xlane.xlu0 %543
  %v545 = vsel %vm496, %v530, 0.0
  %546 = vadd.xlane.f32.xlu0 %v545
  %v547 = vpop.xlane.xlu0 %546
  %v548 = vsel %vm496, %v532, 0.0
  %549 = vadd.xlane.f32.xlu0 %v548
  %v550 = vpop.xlane.xlu0 %549
  %v551 = vrcp.pop %v535
  %v552 = vrcp.pop %v538
  %v553 = vrcp.pop %v541
  %v554 = vrcp.pop %v544
  %v555 = vrcp.pop %v547
  %v556 = vrcp.pop %v550
  %v557 = vmul.f32 %v522, %v551
  %v558 = vmul.f32 %v524, %v552
  %v559 = vmul.f32 %v526, %v553
  %v560 = vmul.f32 %v528, %v554
  %v561 = vmul.f32 %v530, %v555
  %v562 = vmul.f32 %v532, %v556
  %v564 = vsel %vm496, %v557, 0
  %v567 = vsel %vm496, %v558, 0
  %v570 = vsel %vm496, %v559, 0
  %v573 = vsel %vm496, %v560, 0
  %v576 = vsel %vm496, %v561, 0
  %v579 = vsel %vm496, %v562, 0
  %581 = vmatpush.msra.mxu0 0.0
  %582 = vmatpush.msra.mxu0 0.0
  %583 = vmatpush.msra.mxu0 0.0
  %584 = vmatpush.msra.mxu0 0.0
  %585 = vmatpush.msra.mxu0 0.0
  %586 = vmatpush.msra.mxu0 0.0
  %587 = vmatpush.msra.mxu0 0.0
  %588 = vmatpush.msra.mxu0 0.0
  %589 = vmatpush.msra.mxu0 0.0
  %590 = vmatpush.msra.mxu0 0.0
  %591 = vmatpush.msra.mxu0 %v386
  %592 = vmatpush.msra.mxu0 %v383
  %593 = vmatpush.msra.mxu0 %v380
  %594 = vmatpush.msra.mxu0 %v377
  %595 = vmatpush.msra.mxu0 %v374
  %596 = vmatpush.msra.mxu0 %v371
  %597 = vmatmul.f32.gmra.mxu0 %v564
  %v598 = vpop.f32.mrf.mxu0
  %v599 = vadd.f32 0.0, %v598
  %600 = vmatmul.f32.gmra.mxu0 %v567
  %v601 = vpop.f32.mrf.mxu0
  %v602 = vadd.f32 0.0, %v601
  %603 = vmatmul.f32.gmra.mxu0 %v570
  %v604 = vpop.f32.mrf.mxu0
  %v605 = vadd.f32 0.0, %v604
  %606 = vmatmul.f32.gmra.mxu0 %v573
  %v607 = vpop.f32.mrf.mxu0
  %v608 = vadd.f32 0.0, %v607
  %609 = vmatmul.f32.gmra.mxu0 %v576
  %v610 = vpop.f32.mrf.mxu0
  %v611 = vadd.f32 0.0, %v610
  %612 = vmatmul.f32.gmra.mxu0 %v579
  %v613 = vpop.f32.mrf.mxu0
  %v614 = vadd.f32 0.0, %v613
  %615 = vdwg.mxu0
  %s616 = scalar_lea.vmem %s3, 160
  %v617 = vld [vmem:[%s616] sm:$0xff]
  %v618 = vld [vmem:[%s616 + $0x8] sm:$0xff]
  %v619 = vld [vmem:[%s616 + $0x10] sm:$0xff]
  %v620 = vld [vmem:[%s616 + $0x18] sm:$0xff]
  %s621 = scalar_lea.vmem %s3, 192
  %v622 = vld [vmem:[%s621] sm:$0xff]
  %v623 = vld [vmem:[%s621 + $0x8] sm:$0xff]
  %v624 = vld [vmem:[%s621 + $0x10] sm:$0xff]
  %v625 = vld [vmem:[%s621 + $0x18] sm:$0xff]
  %626 = vmatpush.msra.mxu0 0.0
  %627 = vmatpush.msra.mxu0 0.0
  %628 = vmatpush.msra.mxu0 0.0
  %629 = vmatpush.msra.mxu0 0.0
  %630 = vmatpush.msra.mxu0 0.0
  %631 = vmatpush.msra.mxu0 0.0
  %632 = vmatpush.msra.mxu0 0.0
  %633 = vmatpush.msra.mxu0 0.0
  %634 = vmatpush.msra.mxu0 0.0
  %635 = vmatpush.msra.mxu0 0.0
  %636 = vmatpush.msra.mxu0 0.0
  %637 = vmatpush.msra.mxu0 0.0
  %638 = vmatpush.msra.mxu0 %v625
  %639 = vmatpush.msra.mxu0 %v624
  %640 = vmatpush.msra.mxu0 %v623
  %641 = vmatpush.msra.mxu0 %v622
  %642 = vmatmul.f32.gmra.mxu0 %v176
  %v643 = vpop.f32.mrf.mxu0
  %v644 = vadd.f32 0.0, %v643
  %645 = vmatmul.f32.gmra.mxu0 %v179
  %v646 = vpop.f32.mrf.mxu0
  %v647 = vadd.f32 0.0, %v646
  %648 = vmatmul.f32.gmra.mxu0 %v182
  %v649 = vpop.f32.mrf.mxu0
  %v650 = vadd.f32 0.0, %v649
  %651 = vmatmul.f32.gmra.mxu0 %v185
  %v652 = vpop.f32.mrf.mxu0
  %v653 = vadd.f32 0.0, %v652
  %654 = vmatmul.f32.gmra.mxu0 %v188
  %v655 = vpop.f32.mrf.mxu0
  %v656 = vadd.f32 0.0, %v655
  %657 = vmatmul.f32.gmra.mxu0 %v191
  %v658 = vpop.f32.mrf.mxu0
  %v659 = vadd.f32 0.0, %v658
  %660 = vdwg.mxu0
  %s661 = scalar_lea.vmem %s3, 224
  %v662 = vld [vmem:[%s661] sm:$0xff]
  %v663 = vld [vmem:[%s661 + $0x8] sm:$0xff]
  %v664 = vld [vmem:[%s661 + $0x10] sm:$0xff]
  %v665 = vld [vmem:[%s661 + $0x18] sm:$0xff]
  %666 = vmatpush.msra.mxu0 0.0
  %667 = vmatpush.msra.mxu0 0.0
  %668 = vmatpush.msra.mxu0 0.0
  %669 = vmatpush.msra.mxu0 0.0
  %670 = vmatpush.msra.mxu0 0.0
  %671 = vmatpush.msra.mxu0 0.0
  %672 = vmatpush.msra.mxu0 0.0
  %673 = vmatpush.msra.mxu0 0.0
  %674 = vmatpush.msra.mxu0 0.0
  %675 = vmatpush.msra.mxu0 0.0
  %676 = vmatpush.msra.mxu0 0.0
  %677 = vmatpush.msra.mxu0 0.0
  %678 = vmatpush.msra.mxu0 %v665
  %679 = vmatpush.msra.mxu0 %v664
  %680 = vmatpush.msra.mxu0 %v663
  %681 = vmatpush.msra.mxu0 %v662
  %682 = vmatmul.f32.gmra.mxu0 %v176
  %v683 = vpop.f32.mrf.mxu0
  %v684 = vadd.f32 0.0, %v683
  %685 = vmatmul.f32.gmra.mxu0 %v179
  %v686 = vpop.f32.mrf.mxu0
  %v687 = vadd.f32 0.0, %v686
  %688 = vmatmul.f32.gmra.mxu0 %v182
  %v689 = vpop.f32.mrf.mxu0
  %v690 = vadd.f32 0.0, %v689
  %691 = vmatmul.f32.gmra.mxu0 %v185
  %v692 = vpop.f32.mrf.mxu0
  %v693 = vadd.f32 0.0, %v692
  %694 = vmatmul.f32.gmra.mxu0 %v188
  %v695 = vpop.f32.mrf.mxu0
  %v696 = vadd.f32 0.0, %v695
  %697 = vmatmul.f32.gmra.mxu0 %v191
  %v698 = vpop.f32.mrf.mxu0
  %v699 = vadd.f32 0.0, %v698
  %700 = vdwg.mxu0
  %s701 = scalar_lea.vmem %s3, 256
  %v702 = vld [vmem:[%s701] sm:$0xff]
  %v703 = vld [vmem:[%s701 + $0x8] sm:$0xff]
  %v704 = vld [vmem:[%s701 + $0x10] sm:$0xff]
  %v705 = vld [vmem:[%s701 + $0x18] sm:$0xff]
  %706 = vmatpush.msra.mxu0 0.0
  %707 = vmatpush.msra.mxu0 0.0
  %708 = vmatpush.msra.mxu0 0.0
  %709 = vmatpush.msra.mxu0 0.0
  %710 = vmatpush.msra.mxu0 0.0
  %711 = vmatpush.msra.mxu0 0.0
  %712 = vmatpush.msra.mxu0 0.0
  %713 = vmatpush.msra.mxu0 0.0
  %714 = vmatpush.msra.mxu0 0.0
  %715 = vmatpush.msra.mxu0 0.0
  %716 = vmatpush.msra.mxu0 0.0
  %717 = vmatpush.msra.mxu0 0.0
  %718 = vmatpush.msra.mxu0 %v705
  %719 = vmatpush.msra.mxu0 %v704
  %720 = vmatpush.msra.mxu0 %v703
  %721 = vmatpush.msra.mxu0 %v702
  %722 = vmatmul.f32.gmra.mxu0 %v176
  %v723 = vpop.f32.mrf.mxu0
  %v724 = vadd.f32 0.0, %v723
  %725 = vmatmul.f32.gmra.mxu0 %v179
  %v726 = vpop.f32.mrf.mxu0
  %v727 = vadd.f32 0.0, %v726
  %728 = vmatmul.f32.gmra.mxu0 %v182
  %v729 = vpop.f32.mrf.mxu0
  %v730 = vadd.f32 0.0, %v729
  %731 = vmatmul.f32.gmra.mxu0 %v185
  %v732 = vpop.f32.mrf.mxu0
  %v733 = vadd.f32 0.0, %v732
  %734 = vmatmul.f32.gmra.mxu0 %v188
  %v735 = vpop.f32.mrf.mxu0
  %v736 = vadd.f32 0.0, %v735
  %737 = vmatmul.f32.gmra.mxu0 %v191
  %v738 = vpop.f32.mrf.mxu0
  %v739 = vadd.f32 0.0, %v738
  %740 = vdwg.mxu0
  %s741 = scalar_lea.vmem %s3, 288
  %v742 = vld [vmem:[%s741] sm:$0xff]
  %v743 = vld [vmem:[%s741 + $0x8] sm:$0xff]
  %v744 = vld [vmem:[%s741 + $0x10] sm:$0xff]
  %v745 = vld [vmem:[%s741 + $0x18] sm:$0xff]
  %746 = vmatpush.msra.mxu0 0.0
  %747 = vmatpush.msra.mxu0 0.0
  %748 = vmatpush.msra.mxu0 0.0
  %749 = vmatpush.msra.mxu0 0.0
  %750 = vmatpush.msra.mxu0 0.0
  %751 = vmatpush.msra.mxu0 0.0
  %752 = vmatpush.msra.mxu0 0.0
  %753 = vmatpush.msra.mxu0 0.0
  %754 = vmatpush.msra.mxu0 0.0
  %755 = vmatpush.msra.mxu0 0.0
  %756 = vmatpush.msra.mxu0 0.0
  %757 = vmatpush.msra.mxu0 0.0
  %758 = vmatpush.msra.mxu0 %v745
  %759 = vmatpush.msra.mxu0 %v744
  %760 = vmatpush.msra.mxu0 %v743
  %761 = vmatpush.msra.mxu0 %v742
  %762 = vmatmul.f32.gmra.mxu0 %v176
  %v763 = vpop.f32.mrf.mxu0
  %v764 = vadd.f32 0.0, %v763
  %765 = vmatmul.f32.gmra.mxu0 %v179
  %v766 = vpop.f32.mrf.mxu0
  %v767 = vadd.f32 0.0, %v766
  %768 = vmatmul.f32.gmra.mxu0 %v182
  %v769 = vpop.f32.mrf.mxu0
  %v770 = vadd.f32 0.0, %v769
  %771 = vmatmul.f32.gmra.mxu0 %v185
  %v772 = vpop.f32.mrf.mxu0
  %v773 = vadd.f32 0.0, %v772
  %774 = vmatmul.f32.gmra.mxu0 %v188
  %v775 = vpop.f32.mrf.mxu0
  %v776 = vadd.f32 0.0, %v775
  %777 = vmatmul.f32.gmra.mxu0 %v191
  %v778 = vpop.f32.mrf.mxu0
  %v779 = vadd.f32 0.0, %v778
  %780 = vdwg.mxu0
  %s781 = scalar_lea.vmem %s3, 320
  %v782 = vld [vmem:[%s781] sm:$0xff]
  %v783 = vld [vmem:[%s781 + $0x8] sm:$0xff]
  %v784 = vld [vmem:[%s781 + $0x10] sm:$0xff]
  %v785 = vld [vmem:[%s781 + $0x18] sm:$0xff]
  %786 = vmatpush.msra.mxu0 0.0
  %787 = vmatpush.msra.mxu0 0.0
  %788 = vmatpush.msra.mxu0 0.0
  %789 = vmatpush.msra.mxu0 0.0
  %790 = vmatpush.msra.mxu0 0.0
  %791 = vmatpush.msra.mxu0 0.0
  %792 = vmatpush.msra.mxu0 0.0
  %793 = vmatpush.msra.mxu0 0.0
  %794 = vmatpush.msra.mxu0 0.0
  %795 = vmatpush.msra.mxu0 0.0
  %796 = vmatpush.msra.mxu0 0.0
  %797 = vmatpush.msra.mxu0 0.0
  %798 = vmatpush.msra.mxu0 %v785
  %799 = vmatpush.msra.mxu0 %v784
  %800 = vmatpush.msra.mxu0 %v783
  %801 = vmatpush.msra.mxu0 %v782
  %802 = vmatmul.f32.gmra.mxu0 %v176
  %v803 = vpop.f32.mrf.mxu0
  %v804 = vadd.f32 0.0, %v803
  %805 = vmatmul.f32.gmra.mxu0 %v179
  %v806 = vpop.f32.mrf.mxu0
  %v807 = vadd.f32 0.0, %v806
  %808 = vmatmul.f32.gmra.mxu0 %v182
  %v809 = vpop.f32.mrf.mxu0
  %v810 = vadd.f32 0.0, %v809
  %811 = vmatmul.f32.gmra.mxu0 %v185
  %v812 = vpop.f32.mrf.mxu0
  %v813 = vadd.f32 0.0, %v812
  %814 = vmatmul.f32.gmra.mxu0 %v188
  %v815 = vpop.f32.mrf.mxu0
  %v816 = vadd.f32 0.0, %v815
  %817 = vmatmul.f32.gmra.mxu0 %v191
  %v818 = vpop.f32.mrf.mxu0
  %v819 = vadd.f32 0.0, %v818
  %820 = vdwg.mxu0
  %v821 = vmul.f32 %v644, %v32
  %v822 = vmul.f32 %v647, %v33
  %v823 = vmul.f32 %v650, %v34
  %v824 = vmul.f32 %v653, %v35
  %v825 = vmul.f32 %v656, %v36
  %v826 = vmul.f32 %v659, %v37
  %v827 = vmul.f32 %v684, %v39
  %v828 = vmul.f32 %v687, %v40
  %v829 = vmul.f32 %v690, %v41
  %v830 = vmul.f32 %v693, %v42
  %v831 = vmul.f32 %v696, %v43
  %v832 = vmul.f32 %v699, %v44
  %v833 = vadd.f32 %v821, %v827
  %v834 = vadd.f32 %v822, %v828
  %v835 = vadd.f32 %v823, %v829
  %v836 = vadd.f32 %v824, %v830
  %v837 = vadd.f32 %v825, %v831
  %v838 = vadd.f32 %v826, %v832
  %v839 = vmul.f32 %v724, %v32
  %v840 = vmul.f32 %v727, %v33
  %v841 = vmul.f32 %v730, %v34
  %v842 = vmul.f32 %v733, %v35
  %v843 = vmul.f32 %v736, %v36
  %v844 = vmul.f32 %v739, %v37
  %v845 = vmul.f32 %v764, %v39
  %v846 = vmul.f32 %v767, %v40
  %v847 = vmul.f32 %v770, %v41
  %v848 = vmul.f32 %v773, %v42
  %v849 = vmul.f32 %v776, %v43
  %v850 = vmul.f32 %v779, %v44
  %v851 = vadd.f32 %v839, %v845
  %v852 = vadd.f32 %v840, %v846
  %v853 = vadd.f32 %v841, %v847
  %v854 = vadd.f32 %v842, %v848
  %v855 = vadd.f32 %v843, %v849
  %v856 = vadd.f32 %v844, %v850
  %v858 = vsel %vm424, %v833, 0
  %v861 = vsel %vm424, %v834, 0
  %v864 = vsel %vm424, %v835, 0
  %v867 = vsel %vm424, %v836, 0
  %v870 = vsel %vm424, %v837, 0
  %v873 = vsel %vm424, %v838, 0
  %v876 = vsel %vm424, %v851, 0
  %v879 = vsel %vm424, %v852, 0
  %v882 = vsel %vm424, %v853, 0
  %v885 = vsel %vm424, %v854, 0
  %v888 = vsel %vm424, %v855, 0
  %v891 = vsel %vm424, %v856, 0
  %893 = vmatpush.xpose.msra.mxu0 0.0
  %894 = vmatpush.xpose.msra.mxu0 0.0
  %895 = vmatpush.xpose.msra.mxu0 0.0
  %896 = vmatpush.xpose.msra.mxu0 0.0
  %897 = vmatpush.xpose.msra.mxu0 0.0
  %898 = vmatpush.xpose.msra.mxu0 0.0
  %899 = vmatpush.xpose.msra.mxu0 0.0
  %900 = vmatpush.xpose.msra.mxu0 0.0
  %901 = vmatpush.xpose.msra.mxu0 0.0
  %902 = vmatpush.xpose.msra.mxu0 0.0
  %903 = vmatpush.xpose.msra.mxu0 %v891
  %904 = vmatpush.xpose.msra.mxu0 %v888
  %905 = vmatpush.xpose.msra.mxu0 %v885
  %906 = vmatpush.xpose.msra.mxu0 %v882
  %907 = vmatpush.xpose.msra.mxu0 %v879
  %908 = vmatpush.xpose.msra.mxu0 %v876
  %909 = vmatmul.f32.gmra.mxu0 %v858
  %v910 = vpop.f32.mrf.mxu0
  %v911 = vadd.f32 %v45, %v910
  %912 = vmatmul.f32.gmra.mxu0 %v861
  %v913 = vpop.f32.mrf.mxu0
  %v914 = vadd.f32 %v46, %v913
  %915 = vmatmul.f32.gmra.mxu0 %v864
  %v916 = vpop.f32.mrf.mxu0
  %v917 = vadd.f32 %v47, %v916
  %918 = vmatmul.f32.gmra.mxu0 %v867
  %v919 = vpop.f32.mrf.mxu0
  %v920 = vadd.f32 %v48, %v919
  %921 = vmatmul.f32.gmra.mxu0 %v870
  %v922 = vpop.f32.mrf.mxu0
  %v923 = vadd.f32 %v49, %v922
  %924 = vmatmul.f32.gmra.mxu0 %v873
  %v925 = vpop.f32.mrf.mxu0
  %v926 = vadd.f32 %v50, %v925
  %927 = vdwg.mxu0
  %v928 = vsel %vm496, %v911, -inf
  %929 = vmax.xlane.f32.xlu0 %v928
  %v930 = vpop.xlane.xlu0 %929
  %v931 = vsel %vm496, %v914, -inf
  %932 = vmax.xlane.f32.xlu0 %v931
  %v933 = vpop.xlane.xlu0 %932
  %v934 = vsel %vm496, %v917, -inf
  %935 = vmax.xlane.f32.xlu0 %v934
  %v936 = vpop.xlane.xlu0 %935
  %v937 = vsel %vm496, %v920, -inf
  %938 = vmax.xlane.f32.xlu0 %v937
  %v939 = vpop.xlane.xlu0 %938
  %v940 = vsel %vm496, %v923, -inf
  %941 = vmax.xlane.f32.xlu0 %v940
  %v942 = vpop.xlane.xlu0 %941
  %v943 = vsel %vm496, %v926, -inf
  %944 = vmax.xlane.f32.xlu0 %v943
  %v945 = vpop.xlane.xlu0 %944
  %v946 = vsub.f32 %v911, %v930
  %v947 = vsub.f32 %v914, %v933
  %v948 = vsub.f32 %v917, %v936
  %v949 = vsub.f32 %v920, %v939
  %v950 = vsub.f32 %v923, %v942
  %v951 = vsub.f32 %v926, %v945
  %v952 = vmul.f32 %v946, 1.442695
  %v953 = vpow.pop %v952
  %v954 = vmul.f32 %v947, 1.442695
  %v955 = vpow.pop %v954
  %v956 = vmul.f32 %v948, 1.442695
  %v957 = vpow.pop %v956
  %v958 = vmul.f32 %v949, 1.442695
  %v959 = vpow.pop %v958
  %v960 = vmul.f32 %v950, 1.442695
  %v961 = vpow.pop %v960
  %v962 = vmul.f32 %v951, 1.442695
  %v963 = vpow.pop %v962
  %v964 = vsel %vm496, %v953, 0.0
  %965 = vadd.xlane.f32.xlu0 %v964
  %v966 = vpop.xlane.xlu0 %965
  %v967 = vsel %vm496, %v955, 0.0
  %968 = vadd.xlane.f32.xlu0 %v967
  %v969 = vpop.xlane.xlu0 %968
  %v970 = vsel %vm496, %v957, 0.0
  %971 = vadd.xlane.f32.xlu0 %v970
  %v972 = vpop.xlane.xlu0 %971
  %v973 = vsel %vm496, %v959, 0.0
  %974 = vadd.xlane.f32.xlu0 %v973
  %v975 = vpop.xlane.xlu0 %974
  %v976 = vsel %vm496, %v961, 0.0
  %977 = vadd.xlane.f32.xlu0 %v976
  %v978 = vpop.xlane.xlu0 %977
  %v979 = vsel %vm496, %v963, 0.0
  %980 = vadd.xlane.f32.xlu0 %v979
  %v981 = vpop.xlane.xlu0 %980
  %v982 = vrcp.pop %v966
  %v983 = vrcp.pop %v969
  %v984 = vrcp.pop %v972
  %v985 = vrcp.pop %v975
  %v986 = vrcp.pop %v978
  %v987 = vrcp.pop %v981
  %v988 = vmul.f32 %v953, %v982
  %v989 = vmul.f32 %v955, %v983
  %v990 = vmul.f32 %v957, %v984
  %v991 = vmul.f32 %v959, %v985
  %v992 = vmul.f32 %v961, %v986
  %v993 = vmul.f32 %v963, %v987
  %v995 = vsel %vm496, %v988, 0
  %v998 = vsel %vm496, %v989, 0
  %v1001 = vsel %vm496, %v990, 0
  %v1004 = vsel %vm496, %v991, 0
  %v1007 = vsel %vm496, %v992, 0
  %v1010 = vsel %vm496, %v993, 0
  %1012 = vmatpush.msra.mxu0 0.0
  %1013 = vmatpush.msra.mxu0 0.0
  %1014 = vmatpush.msra.mxu0 0.0
  %1015 = vmatpush.msra.mxu0 0.0
  %1016 = vmatpush.msra.mxu0 0.0
  %1017 = vmatpush.msra.mxu0 0.0
  %1018 = vmatpush.msra.mxu0 0.0
  %1019 = vmatpush.msra.mxu0 0.0
  %1020 = vmatpush.msra.mxu0 0.0
  %1021 = vmatpush.msra.mxu0 0.0
  %1022 = vmatpush.msra.mxu0 %v819
  %1023 = vmatpush.msra.mxu0 %v816
  %1024 = vmatpush.msra.mxu0 %v813
  %1025 = vmatpush.msra.mxu0 %v810
  %1026 = vmatpush.msra.mxu0 %v807
  %1027 = vmatpush.msra.mxu0 %v804
  %1028 = vmatmul.f32.gmra.mxu0 %v995
  %v1029 = vpop.f32.mrf.mxu0
  %v1030 = vadd.f32 0.0, %v1029
  %1031 = vmatmul.f32.gmra.mxu0 %v998
  %v1032 = vpop.f32.mrf.mxu0
  %v1033 = vadd.f32 0.0, %v1032
  %1034 = vmatmul.f32.gmra.mxu0 %v1001
  %v1035 = vpop.f32.mrf.mxu0
  %v1036 = vadd.f32 0.0, %v1035
  %1037 = vmatmul.f32.gmra.mxu0 %v1004
  %v1038 = vpop.f32.mrf.mxu0
  %v1039 = vadd.f32 0.0, %v1038
  %1040 = vmatmul.f32.gmra.mxu0 %v1007
  %v1041 = vpop.f32.mrf.mxu0
  %v1042 = vadd.f32 0.0, %v1041
  %1043 = vmatmul.f32.gmra.mxu0 %v1010
  %v1044 = vpop.f32.mrf.mxu0
  %v1045 = vadd.f32 0.0, %v1044
  %1046 = vdwg.mxu0
  %s1047 = scalar_lea.vmem %s3, 352
  %v1048 = vld [vmem:[%s1047] sm:$0xff]
  %v1049 = vld [vmem:[%s1047 + $0x8] sm:$0xff]
  %v1050 = vld [vmem:[%s1047 + $0x10] sm:$0xff]
  %v1051 = vld [vmem:[%s1047 + $0x18] sm:$0xff]
  %v1053 = vsel %vm424, %v1030, 0
  %v1056 = vsel %vm424, %v1033, 0
  %v1059 = vsel %vm424, %v1036, 0
  %v1062 = vsel %vm424, %v1039, 0
  %v1065 = vsel %vm424, %v1042, 0
  %v1068 = vsel %vm424, %v1045, 0
  %v1071 = vsel %vm424, %v1048, 0
  %v1074 = vsel %vm424, %v1049, 0
  %v1077 = vsel %vm424, %v1050, 0
  %v1080 = vsel %vm424, %v1051, 0
  %1082 = vmatpush.xpose.msra.mxu0 0.0
  %1083 = vmatpush.xpose.msra.mxu0 0.0
  %1084 = vmatpush.xpose.msra.mxu0 0.0
  %1085 = vmatpush.xpose.msra.mxu0 0.0
  %1086 = vmatpush.xpose.msra.mxu0 0.0
  %1087 = vmatpush.xpose.msra.mxu0 0.0
  %1088 = vmatpush.xpose.msra.mxu0 0.0
  %1089 = vmatpush.xpose.msra.mxu0 0.0
  %1090 = vmatpush.xpose.msra.mxu0 0.0
  %1091 = vmatpush.xpose.msra.mxu0 0.0
  %1092 = vmatpush.xpose.msra.mxu0 0.0
  %1093 = vmatpush.xpose.msra.mxu0 0.0
  %1094 = vmatpush.xpose.msra.mxu0 %v1080
  %1095 = vmatpush.xpose.msra.mxu0 %v1077
  %1096 = vmatpush.xpose.msra.mxu0 %v1074
  %1097 = vmatpush.xpose.msra.mxu0 %v1071
  %1098 = vmatmul.f32.gmra.mxu0 %v1053
  %v1099 = vpop.f32.mrf.mxu0
  %v1100 = vadd.f32 0.0, %v1099
  %1101 = vmatmul.f32.gmra.mxu0 %v1056
  %v1102 = vpop.f32.mrf.mxu0
  %v1103 = vadd.f32 0.0, %v1102
  %1104 = vmatmul.f32.gmra.mxu0 %v1059
  %v1105 = vpop.f32.mrf.mxu0
  %v1106 = vadd.f32 0.0, %v1105
  %1107 = vmatmul.f32.gmra.mxu0 %v1062
  %v1108 = vpop.f32.mrf.mxu0
  %v1109 = vadd.f32 0.0, %v1108
  %1110 = vmatmul.f32.gmra.mxu0 %v1065
  %v1111 = vpop.f32.mrf.mxu0
  %v1112 = vadd.f32 0.0, %v1111
  %1113 = vmatmul.f32.gmra.mxu0 %v1068
  %v1114 = vpop.f32.mrf.mxu0
  %v1115 = vadd.f32 0.0, %v1114
  %1116 = vdwg.mxu0
  %v1118 = vsel %vm424, %v599, 0
  %v1121 = vsel %vm424, %v602, 0
  %v1124 = vsel %vm424, %v605, 0
  %v1127 = vsel %vm424, %v608, 0
  %v1130 = vsel %vm424, %v611, 0
  %v1133 = vsel %vm424, %v614, 0
  %v1136 = vsel %vm424, %v617, 0
  %v1139 = vsel %vm424, %v618, 0
  %v1142 = vsel %vm424, %v619, 0
  %v1145 = vsel %vm424, %v620, 0
  %1147 = vmatpush.xpose.msra.mxu0 0.0
  %1148 = vmatpush.xpose.msra.mxu0 0.0
  %1149 = vmatpush.xpose.msra.mxu0 0.0
  %1150 = vmatpush.xpose.msra.mxu0 0.0
  %1151 = vmatpush.xpose.msra.mxu0 0.0
  %1152 = vmatpush.xpose.msra.mxu0 0.0
  %1153 = vmatpush.xpose.msra.mxu0 0.0
  %1154 = vmatpush.xpose.msra.mxu0 0.0
  %1155 = vmatpush.xpose.msra.mxu0 0.0
  %1156 = vmatpush.xpose.msra.mxu0 0.0
  %1157 = vmatpush.xpose.msra.mxu0 0.0
  %1158 = vmatpush.xpose.msra.mxu0 0.0
  %1159 = vmatpush.xpose.msra.mxu0 %v1145
  %1160 = vmatpush.xpose.msra.mxu0 %v1142
  %1161 = vmatpush.xpose.msra.mxu0 %v1139
  %1162 = vmatpush.xpose.msra.mxu0 %v1136
  %1163 = vmatmul.f32.gmra.mxu0 %v1118
  %v1164 = vpop.f32.mrf.mxu0
  %v1165 = vadd.f32 %v1100, %v1164
  %1166 = vmatmul.f32.gmra.mxu0 %v1121
  %v1167 = vpop.f32.mrf.mxu0
  %v1168 = vadd.f32 %v1103, %v1167
  %1169 = vmatmul.f32.gmra.mxu0 %v1124
  %v1170 = vpop.f32.mrf.mxu0
  %v1171 = vadd.f32 %v1106, %v1170
  %1172 = vmatmul.f32.gmra.mxu0 %v1127
  %v1173 = vpop.f32.mrf.mxu0
  %v1174 = vadd.f32 %v1109, %v1173
  %1175 = vmatmul.f32.gmra.mxu0 %v1130
  %v1176 = vpop.f32.mrf.mxu0
  %v1177 = vadd.f32 %v1112, %v1176
  %1178 = vmatmul.f32.gmra.mxu0 %v1133
  %v1179 = vpop.f32.mrf.mxu0
  %v1180 = vadd.f32 %v1115, %v1179
  %1181 = vdwg.mxu0
  %s1182 = scalar_lea.vmem %s3, 384
  %v1183 = vld [vmem:[%s1182] sm:$0xff]
  %v1184 = vld [vmem:[%s1182 + $0x8] sm:$0xff]
  %v1185 = vld [vmem:[%s1182 + $0x10] sm:$0xff]
  %v1186 = vld [vmem:[%s1182 + $0x18] sm:$0xff]
  %1187 = vmatpush.msra.mxu0 0.0
  %1188 = vmatpush.msra.mxu0 0.0
  %1189 = vmatpush.msra.mxu0 0.0
  %1190 = vmatpush.msra.mxu0 0.0
  %1191 = vmatpush.msra.mxu0 0.0
  %1192 = vmatpush.msra.mxu0 0.0
  %1193 = vmatpush.msra.mxu0 0.0
  %1194 = vmatpush.msra.mxu0 0.0
  %1195 = vmatpush.msra.mxu0 0.0
  %1196 = vmatpush.msra.mxu0 0.0
  %1197 = vmatpush.msra.mxu0 0.0
  %1198 = vmatpush.msra.mxu0 0.0
  %1199 = vmatpush.msra.mxu0 %v1186
  %1200 = vmatpush.msra.mxu0 %v1185
  %1201 = vmatpush.msra.mxu0 %v1184
  %1202 = vmatpush.msra.mxu0 %v1183
  %1203 = vmatmul.f32.gmra.mxu0 %v176
  %v1204 = vpop.f32.mrf.mxu0
  %v1205 = vadd.f32 0.0, %v1204
  %1206 = vmatmul.f32.gmra.mxu0 %v179
  %v1207 = vpop.f32.mrf.mxu0
  %v1208 = vadd.f32 0.0, %v1207
  %1209 = vmatmul.f32.gmra.mxu0 %v182
  %v1210 = vpop.f32.mrf.mxu0
  %v1211 = vadd.f32 0.0, %v1210
  %1212 = vmatmul.f32.gmra.mxu0 %v185
  %v1213 = vpop.f32.mrf.mxu0
  %v1214 = vadd.f32 0.0, %v1213
  %1215 = vmatmul.f32.gmra.mxu0 %v188
  %v1216 = vpop.f32.mrf.mxu0
  %v1217 = vadd.f32 0.0, %v1216
  %1218 = vmatmul.f32.gmra.mxu0 %v191
  %v1219 = vpop.f32.mrf.mxu0
  %v1220 = vadd.f32 0.0, %v1219
  %1221 = vdwg.mxu0
  %s1222 = scalar_lea.vmem %s3, 416
  %v1223 = vld [vmem:[%s1222] sm:$0xff]
  %v1224 = vld [vmem:[%s1222 + $0x8] sm:$0xff]
  %v1225 = vld [vmem:[%s1222 + $0x10] sm:$0xff]
  %v1226 = vld [vmem:[%s1222 + $0x18] sm:$0xff]
  %1227 = vmatpush.msra.mxu0 0.0
  %1228 = vmatpush.msra.mxu0 0.0
  %1229 = vmatpush.msra.mxu0 0.0
  %1230 = vmatpush.msra.mxu0 0.0
  %1231 = vmatpush.msra.mxu0 0.0
  %1232 = vmatpush.msra.mxu0 0.0
  %1233 = vmatpush.msra.mxu0 0.0
  %1234 = vmatpush.msra.mxu0 0.0
  %1235 = vmatpush.msra.mxu0 0.0
  %1236 = vmatpush.msra.mxu0 0.0
  %1237 = vmatpush.msra.mxu0 0.0
  %1238 = vmatpush.msra.mxu0 0.0
  %1239 = vmatpush.msra.mxu0 %v1226
  %1240 = vmatpush.msra.mxu0 %v1225
  %1241 = vmatpush.msra.mxu0 %v1224
  %1242 = vmatpush.msra.mxu0 %v1223
  %1243 = vmatmul.f32.gmra.mxu0 %v176
  %v1244 = vpop.f32.mrf.mxu0
  %v1245 = vadd.f32 0.0, %v1244
  %1246 = vmatmul.f32.gmra.mxu0 %v179
  %v1247 = vpop.f32.mrf.mxu0
  %v1248 = vadd.f32 0.0, %v1247
  %1249 = vmatmul.f32.gmra.mxu0 %v182
  %v1250 = vpop.f32.mrf.mxu0
  %v1251 = vadd.f32 0.0, %v1250
  %1252 = vmatmul.f32.gmra.mxu0 %v185
  %v1253 = vpop.f32.mrf.mxu0
  %v1254 = vadd.f32 0.0, %v1253
  %1255 = vmatmul.f32.gmra.mxu0 %v188
  %v1256 = vpop.f32.mrf.mxu0
  %v1257 = vadd.f32 0.0, %v1256
  %1258 = vmatmul.f32.gmra.mxu0 %v191
  %v1259 = vpop.f32.mrf.mxu0
  %v1260 = vadd.f32 0.0, %v1259
  %1261 = vdwg.mxu0
  %s1262 = scalar_lea.vmem %s3, 448
  %v1263 = vld [vmem:[%s1262] sm:$0xff]
  %v1264 = vld [vmem:[%s1262 + $0x8] sm:$0xff]
  %v1265 = vld [vmem:[%s1262 + $0x10] sm:$0xff]
  %v1266 = vld [vmem:[%s1262 + $0x18] sm:$0xff]
  %1267 = vmatpush.msra.mxu0 0.0
  %1268 = vmatpush.msra.mxu0 0.0
  %1269 = vmatpush.msra.mxu0 0.0
  %1270 = vmatpush.msra.mxu0 0.0
  %1271 = vmatpush.msra.mxu0 0.0
  %1272 = vmatpush.msra.mxu0 0.0
  %1273 = vmatpush.msra.mxu0 0.0
  %1274 = vmatpush.msra.mxu0 0.0
  %1275 = vmatpush.msra.mxu0 0.0
  %1276 = vmatpush.msra.mxu0 0.0
  %1277 = vmatpush.msra.mxu0 0.0
  %1278 = vmatpush.msra.mxu0 0.0
  %1279 = vmatpush.msra.mxu0 %v1266
  %1280 = vmatpush.msra.mxu0 %v1265
  %1281 = vmatpush.msra.mxu0 %v1264
  %1282 = vmatpush.msra.mxu0 %v1263
  %1283 = vmatmul.f32.gmra.mxu0 %v176
  %v1284 = vpop.f32.mrf.mxu0
  %v1285 = vadd.f32 0.0, %v1284
  %1286 = vmatmul.f32.gmra.mxu0 %v179
  %v1287 = vpop.f32.mrf.mxu0
  %v1288 = vadd.f32 0.0, %v1287
  %1289 = vmatmul.f32.gmra.mxu0 %v182
  %v1290 = vpop.f32.mrf.mxu0
  %v1291 = vadd.f32 0.0, %v1290
  %1292 = vmatmul.f32.gmra.mxu0 %v185
  %v1293 = vpop.f32.mrf.mxu0
  %v1294 = vadd.f32 0.0, %v1293
  %1295 = vmatmul.f32.gmra.mxu0 %v188
  %v1296 = vpop.f32.mrf.mxu0
  %v1297 = vadd.f32 0.0, %v1296
  %1298 = vmatmul.f32.gmra.mxu0 %v191
  %v1299 = vpop.f32.mrf.mxu0
  %v1300 = vadd.f32 0.0, %v1299
  %1301 = vdwg.mxu0
  %s1302 = scalar_lea.vmem %s3, 480
  %v1303 = vld [vmem:[%s1302] sm:$0xff]
  %v1304 = vld [vmem:[%s1302 + $0x8] sm:$0xff]
  %v1305 = vld [vmem:[%s1302 + $0x10] sm:$0xff]
  %v1306 = vld [vmem:[%s1302 + $0x18] sm:$0xff]
  %1307 = vmatpush.msra.mxu0 0.0
  %1308 = vmatpush.msra.mxu0 0.0
  %1309 = vmatpush.msra.mxu0 0.0
  %1310 = vmatpush.msra.mxu0 0.0
  %1311 = vmatpush.msra.mxu0 0.0
  %1312 = vmatpush.msra.mxu0 0.0
  %1313 = vmatpush.msra.mxu0 0.0
  %1314 = vmatpush.msra.mxu0 0.0
  %1315 = vmatpush.msra.mxu0 0.0
  %1316 = vmatpush.msra.mxu0 0.0
  %1317 = vmatpush.msra.mxu0 0.0
  %1318 = vmatpush.msra.mxu0 0.0
  %1319 = vmatpush.msra.mxu0 %v1306
  %1320 = vmatpush.msra.mxu0 %v1305
  %1321 = vmatpush.msra.mxu0 %v1304
  %1322 = vmatpush.msra.mxu0 %v1303
  %1323 = vmatmul.f32.gmra.mxu0 %v176
  %v1324 = vpop.f32.mrf.mxu0
  %v1325 = vadd.f32 0.0, %v1324
  %1326 = vmatmul.f32.gmra.mxu0 %v179
  %v1327 = vpop.f32.mrf.mxu0
  %v1328 = vadd.f32 0.0, %v1327
  %1329 = vmatmul.f32.gmra.mxu0 %v182
  %v1330 = vpop.f32.mrf.mxu0
  %v1331 = vadd.f32 0.0, %v1330
  %1332 = vmatmul.f32.gmra.mxu0 %v185
  %v1333 = vpop.f32.mrf.mxu0
  %v1334 = vadd.f32 0.0, %v1333
  %1335 = vmatmul.f32.gmra.mxu0 %v188
  %v1336 = vpop.f32.mrf.mxu0
  %v1337 = vadd.f32 0.0, %v1336
  %1338 = vmatmul.f32.gmra.mxu0 %v191
  %v1339 = vpop.f32.mrf.mxu0
  %v1340 = vadd.f32 0.0, %v1339
  %1341 = vdwg.mxu0
  %s1342 = scalar_lea.vmem %s3, 512
  %v1343 = vld [vmem:[%s1342] sm:$0xff]
  %v1344 = vld [vmem:[%s1342 + $0x8] sm:$0xff]
  %v1345 = vld [vmem:[%s1342 + $0x10] sm:$0xff]
  %v1346 = vld [vmem:[%s1342 + $0x18] sm:$0xff]
  %1347 = vmatpush.msra.mxu0 0.0
  %1348 = vmatpush.msra.mxu0 0.0
  %1349 = vmatpush.msra.mxu0 0.0
  %1350 = vmatpush.msra.mxu0 0.0
  %1351 = vmatpush.msra.mxu0 0.0
  %1352 = vmatpush.msra.mxu0 0.0
  %1353 = vmatpush.msra.mxu0 0.0
  %1354 = vmatpush.msra.mxu0 0.0
  %1355 = vmatpush.msra.mxu0 0.0
  %1356 = vmatpush.msra.mxu0 0.0
  %1357 = vmatpush.msra.mxu0 0.0
  %1358 = vmatpush.msra.mxu0 0.0
  %1359 = vmatpush.msra.mxu0 %v1346
  %1360 = vmatpush.msra.mxu0 %v1345
  %1361 = vmatpush.msra.mxu0 %v1344
  %1362 = vmatpush.msra.mxu0 %v1343
  %1363 = vmatmul.f32.gmra.mxu0 %v176
  %v1364 = vpop.f32.mrf.mxu0
  %v1365 = vadd.f32 0.0, %v1364
  %1366 = vmatmul.f32.gmra.mxu0 %v179
  %v1367 = vpop.f32.mrf.mxu0
  %v1368 = vadd.f32 0.0, %v1367
  %1369 = vmatmul.f32.gmra.mxu0 %v182
  %v1370 = vpop.f32.mrf.mxu0
  %v1371 = vadd.f32 0.0, %v1370
  %1372 = vmatmul.f32.gmra.mxu0 %v185
  %v1373 = vpop.f32.mrf.mxu0
  %v1374 = vadd.f32 0.0, %v1373
  %1375 = vmatmul.f32.gmra.mxu0 %v188
  %v1376 = vpop.f32.mrf.mxu0
  %v1377 = vadd.f32 0.0, %v1376
  %1378 = vmatmul.f32.gmra.mxu0 %v191
  %v1379 = vpop.f32.mrf.mxu0
  %v1380 = vadd.f32 0.0, %v1379
  %1381 = vdwg.mxu0
  %v1382 = vmul.f32 %v1205, %v32
  %v1383 = vmul.f32 %v1208, %v33
  %v1384 = vmul.f32 %v1211, %v34
  %v1385 = vmul.f32 %v1214, %v35
  %v1386 = vmul.f32 %v1217, %v36
  %v1387 = vmul.f32 %v1220, %v37
  %v1388 = vmul.f32 %v1245, %v39
  %v1389 = vmul.f32 %v1248, %v40
  %v1390 = vmul.f32 %v1251, %v41
  %v1391 = vmul.f32 %v1254, %v42
  %v1392 = vmul.f32 %v1257, %v43
  %v1393 = vmul.f32 %v1260, %v44
  %v1394 = vadd.f32 %v1382, %v1388
  %v1395 = vadd.f32 %v1383, %v1389
  %v1396 = vadd.f32 %v1384, %v1390
  %v1397 = vadd.f32 %v1385, %v1391
  %v1398 = vadd.f32 %v1386, %v1392
  %v1399 = vadd.f32 %v1387, %v1393
  %v1400 = vmul.f32 %v1285, %v32
  %v1401 = vmul.f32 %v1288, %v33
  %v1402 = vmul.f32 %v1291, %v34
  %v1403 = vmul.f32 %v1294, %v35
  %v1404 = vmul.f32 %v1297, %v36
  %v1405 = vmul.f32 %v1300, %v37
  %v1406 = vmul.f32 %v1325, %v39
  %v1407 = vmul.f32 %v1328, %v40
  %v1408 = vmul.f32 %v1331, %v41
  %v1409 = vmul.f32 %v1334, %v42
  %v1410 = vmul.f32 %v1337, %v43
  %v1411 = vmul.f32 %v1340, %v44
  %v1412 = vadd.f32 %v1400, %v1406
  %v1413 = vadd.f32 %v1401, %v1407
  %v1414 = vadd.f32 %v1402, %v1408
  %v1415 = vadd.f32 %v1403, %v1409
  %v1416 = vadd.f32 %v1404, %v1410
  %v1417 = vadd.f32 %v1405, %v1411
  %v1419 = vsel %vm424, %v1394, 0
  %v1422 = vsel %vm424, %v1395, 0
  %v1425 = vsel %vm424, %v1396, 0
  %v1428 = vsel %vm424, %v1397, 0
  %v1431 = vsel %vm424, %v1398, 0
  %v1434 = vsel %vm424, %v1399, 0
  %v1437 = vsel %vm424, %v1412, 0
  %v1440 = vsel %vm424, %v1413, 0
  %v1443 = vsel %vm424, %v1414, 0
  %v1446 = vsel %vm424, %v1415, 0
  %v1449 = vsel %vm424, %v1416, 0
  %v1452 = vsel %vm424, %v1417, 0
  %1454 = vmatpush.xpose.msra.mxu0 0.0
  %1455 = vmatpush.xpose.msra.mxu0 0.0
  %1456 = vmatpush.xpose.msra.mxu0 0.0
  %1457 = vmatpush.xpose.msra.mxu0 0.0
  %1458 = vmatpush.xpose.msra.mxu0 0.0
  %1459 = vmatpush.xpose.msra.mxu0 0.0
  %1460 = vmatpush.xpose.msra.mxu0 0.0
  %1461 = vmatpush.xpose.msra.mxu0 0.0
  %1462 = vmatpush.xpose.msra.mxu0 0.0
  %1463 = vmatpush.xpose.msra.mxu0 0.0
  %1464 = vmatpush.xpose.msra.mxu0 %v1452
  %1465 = vmatpush.xpose.msra.mxu0 %v1449
  %1466 = vmatpush.xpose.msra.mxu0 %v1446
  %1467 = vmatpush.xpose.msra.mxu0 %v1443
  %1468 = vmatpush.xpose.msra.mxu0 %v1440
  %1469 = vmatpush.xpose.msra.mxu0 %v1437
  %1470 = vmatmul.f32.gmra.mxu0 %v1419
  %v1471 = vpop.f32.mrf.mxu0
  %v1472 = vadd.f32 %v45, %v1471
  %1473 = vmatmul.f32.gmra.mxu0 %v1422
  %v1474 = vpop.f32.mrf.mxu0
  %v1475 = vadd.f32 %v46, %v1474
  %1476 = vmatmul.f32.gmra.mxu0 %v1425
  %v1477 = vpop.f32.mrf.mxu0
  %v1478 = vadd.f32 %v47, %v1477
  %1479 = vmatmul.f32.gmra.mxu0 %v1428
  %v1480 = vpop.f32.mrf.mxu0
  %v1481 = vadd.f32 %v48, %v1480
  %1482 = vmatmul.f32.gmra.mxu0 %v1431
  %v1483 = vpop.f32.mrf.mxu0
  %v1484 = vadd.f32 %v49, %v1483
  %1485 = vmatmul.f32.gmra.mxu0 %v1434
  %v1486 = vpop.f32.mrf.mxu0
  %v1487 = vadd.f32 %v50, %v1486
  %1488 = vdwg.mxu0
  %v1489 = vsel %vm496, %v1472, -inf
  %1490 = vmax.xlane.f32.xlu0 %v1489
  %v1491 = vpop.xlane.xlu0 %1490
  %v1492 = vsel %vm496, %v1475, -inf
  %1493 = vmax.xlane.f32.xlu0 %v1492
  %v1494 = vpop.xlane.xlu0 %1493
  %v1495 = vsel %vm496, %v1478, -inf
  %1496 = vmax.xlane.f32.xlu0 %v1495
  %v1497 = vpop.xlane.xlu0 %1496
  %v1498 = vsel %vm496, %v1481, -inf
  %1499 = vmax.xlane.f32.xlu0 %v1498
  %v1500 = vpop.xlane.xlu0 %1499
  %v1501 = vsel %vm496, %v1484, -inf
  %1502 = vmax.xlane.f32.xlu0 %v1501
  %v1503 = vpop.xlane.xlu0 %1502
  %v1504 = vsel %vm496, %v1487, -inf
  %1505 = vmax.xlane.f32.xlu0 %v1504
  %v1506 = vpop.xlane.xlu0 %1505
  %v1507 = vsub.f32 %v1472, %v1491
  %v1508 = vsub.f32 %v1475, %v1494
  %v1509 = vsub.f32 %v1478, %v1497
  %v1510 = vsub.f32 %v1481, %v1500
  %v1511 = vsub.f32 %v1484, %v1503
  %v1512 = vsub.f32 %v1487, %v1506
  %v1513 = vmul.f32 %v1507, 1.442695
  %v1514 = vpow.pop %v1513
  %v1515 = vmul.f32 %v1508, 1.442695
  %v1516 = vpow.pop %v1515
  %v1517 = vmul.f32 %v1509, 1.442695
  %v1518 = vpow.pop %v1517
  %v1519 = vmul.f32 %v1510, 1.442695
  %v1520 = vpow.pop %v1519
  %v1521 = vmul.f32 %v1511, 1.442695
  %v1522 = vpow.pop %v1521
  %v1523 = vmul.f32 %v1512, 1.442695
  %v1524 = vpow.pop %v1523
  %v1525 = vsel %vm496, %v1514, 0.0
  %1526 = vadd.xlane.f32.xlu0 %v1525
  %v1527 = vpop.xlane.xlu0 %1526
  %v1528 = vsel %vm496, %v1516, 0.0
  %1529 = vadd.xlane.f32.xlu0 %v1528
  %v1530 = vpop.xlane.xlu0 %1529
  %v1531 = vsel %vm496, %v1518, 0.0
  %1532 = vadd.xlane.f32.xlu0 %v1531
  %v1533 = vpop.xlane.xlu0 %1532
  %v1534 = vsel %vm496, %v1520, 0.0
  %1535 = vadd.xlane.f32.xlu0 %v1534
  %v1536 = vpop.xlane.xlu0 %1535
  %v1537 = vsel %vm496, %v1522, 0.0
  %1538 = vadd.xlane.f32.xlu0 %v1537
  %v1539 = vpop.xlane.xlu0 %1538
  %v1540 = vsel %vm496, %v1524, 0.0
  %1541 = vadd.xlane.f32.xlu0 %v1540
  %v1542 = vpop.xlane.xlu0 %1541
  %v1543 = vrcp.pop %v1527
  %v1544 = vrcp.pop %v1530
  %v1545 = vrcp.pop %v1533
  %v1546 = vrcp.pop %v1536
  %v1547 = vrcp.pop %v1539
  %v1548 = vrcp.pop %v1542
  %v1549 = vmul.f32 %v1514, %v1543
  %v1550 = vmul.f32 %v1516, %v1544
  %v1551 = vmul.f32 %v1518, %v1545
  %v1552 = vmul.f32 %v1520, %v1546
  %v1553 = vmul.f32 %v1522, %v1547
  %v1554 = vmul.f32 %v1524, %v1548
  %v1556 = vsel %vm496, %v1549, 0
  %v1559 = vsel %vm496, %v1550, 0
  %v1562 = vsel %vm496, %v1551, 0
  %v1565 = vsel %vm496, %v1552, 0
  %v1568 = vsel %vm496, %v1553, 0
  %v1571 = vsel %vm496, %v1554, 0
  %1573 = vmatpush.msra.mxu0 0.0
  %1574 = vmatpush.msra.mxu0 0.0
  %1575 = vmatpush.msra.mxu0 0.0
  %1576 = vmatpush.msra.mxu0 0.0
  %1577 = vmatpush.msra.mxu0 0.0
  %1578 = vmatpush.msra.mxu0 0.0
  %1579 = vmatpush.msra.mxu0 0.0
  %1580 = vmatpush.msra.mxu0 0.0
  %1581 = vmatpush.msra.mxu0 0.0
  %1582 = vmatpush.msra.mxu0 0.0
  %1583 = vmatpush.msra.mxu0 %v1380
  %1584 = vmatpush.msra.mxu0 %v1377
  %1585 = vmatpush.msra.mxu0 %v1374
  %1586 = vmatpush.msra.mxu0 %v1371
  %1587 = vmatpush.msra.mxu0 %v1368
  %1588 = vmatpush.msra.mxu0 %v1365
  %1589 = vmatmul.f32.gmra.mxu0 %v1556
  %v1590 = vpop.f32.mrf.mxu0
  %v1591 = vadd.f32 0.0, %v1590
  %1592 = vmatmul.f32.gmra.mxu0 %v1559
  %v1593 = vpop.f32.mrf.mxu0
  %v1594 = vadd.f32 0.0, %v1593
  %1595 = vmatmul.f32.gmra.mxu0 %v1562
  %v1596 = vpop.f32.mrf.mxu0
  %v1597 = vadd.f32 0.0, %v1596
  %1598 = vmatmul.f32.gmra.mxu0 %v1565
  %v1599 = vpop.f32.mrf.mxu0
  %v1600 = vadd.f32 0.0, %v1599
  %1601 = vmatmul.f32.gmra.mxu0 %v1568
  %v1602 = vpop.f32.mrf.mxu0
  %v1603 = vadd.f32 0.0, %v1602
  %1604 = vmatmul.f32.gmra.mxu0 %v1571
  %v1605 = vpop.f32.mrf.mxu0
  %v1606 = vadd.f32 0.0, %v1605
  %1607 = vdwg.mxu0
  %s1608 = scalar_lea.vmem %s3, 544
  %v1609 = vld [vmem:[%s1608] sm:$0xff]
  %v1610 = vld [vmem:[%s1608 + $0x8] sm:$0xff]
  %v1611 = vld [vmem:[%s1608 + $0x10] sm:$0xff]
  %v1612 = vld [vmem:[%s1608 + $0x18] sm:$0xff]
  %v1614 = vsel %vm424, %v1591, 0
  %v1617 = vsel %vm424, %v1594, 0
  %v1620 = vsel %vm424, %v1597, 0
  %v1623 = vsel %vm424, %v1600, 0
  %v1626 = vsel %vm424, %v1603, 0
  %v1629 = vsel %vm424, %v1606, 0
  %v1632 = vsel %vm424, %v1609, 0
  %v1635 = vsel %vm424, %v1610, 0
  %v1638 = vsel %vm424, %v1611, 0
  %v1641 = vsel %vm424, %v1612, 0
  %1643 = vmatpush.xpose.msra.mxu0 0.0
  %1644 = vmatpush.xpose.msra.mxu0 0.0
  %1645 = vmatpush.xpose.msra.mxu0 0.0
  %1646 = vmatpush.xpose.msra.mxu0 0.0
  %1647 = vmatpush.xpose.msra.mxu0 0.0
  %1648 = vmatpush.xpose.msra.mxu0 0.0
  %1649 = vmatpush.xpose.msra.mxu0 0.0
  %1650 = vmatpush.xpose.msra.mxu0 0.0
  %1651 = vmatpush.xpose.msra.mxu0 0.0
  %1652 = vmatpush.xpose.msra.mxu0 0.0
  %1653 = vmatpush.xpose.msra.mxu0 0.0
  %1654 = vmatpush.xpose.msra.mxu0 0.0
  %1655 = vmatpush.xpose.msra.mxu0 %v1641
  %1656 = vmatpush.xpose.msra.mxu0 %v1638
  %1657 = vmatpush.xpose.msra.mxu0 %v1635
  %1658 = vmatpush.xpose.msra.mxu0 %v1632
  %1659 = vmatmul.f32.gmra.mxu0 %v1614
  %v1660 = vpop.f32.mrf.mxu0
  %v1661 = vadd.f32 0.0, %v1660
  %1662 = vmatmul.f32.gmra.mxu0 %v1617
  %v1663 = vpop.f32.mrf.mxu0
  %v1664 = vadd.f32 0.0, %v1663
  %1665 = vmatmul.f32.gmra.mxu0 %v1620
  %v1666 = vpop.f32.mrf.mxu0
  %v1667 = vadd.f32 0.0, %v1666
  %1668 = vmatmul.f32.gmra.mxu0 %v1623
  %v1669 = vpop.f32.mrf.mxu0
  %v1670 = vadd.f32 0.0, %v1669
  %1671 = vmatmul.f32.gmra.mxu0 %v1626
  %v1672 = vpop.f32.mrf.mxu0
  %v1673 = vadd.f32 0.0, %v1672
  %1674 = vmatmul.f32.gmra.mxu0 %v1629
  %v1675 = vpop.f32.mrf.mxu0
  %v1676 = vadd.f32 0.0, %v1675
  %1677 = vdwg.mxu0
  %v1678 = vadd.f32 %v1165, %v1661
  %v1679 = vadd.f32 %v1168, %v1664
  %v1680 = vadd.f32 %v1171, %v1667
  %v1681 = vadd.f32 %v1174, %v1670
  %v1682 = vadd.f32 %v1177, %v1673
  %v1683 = vadd.f32 %v1180, %v1676
  %s1684 = scalar_lea.vmem %s3, 576
  %v1685 = vld [vmem:[%s1684] sm:$0xff]
  %v1686 = vld [vmem:[%s1684 + $0x8] sm:$0xff]
  %v1687 = vld [vmem:[%s1684 + $0x10] sm:$0xff]
  %v1688 = vld [vmem:[%s1684 + $0x18] sm:$0xff]
  %1689 = vmatpush.msra.mxu0 0.0
  %1690 = vmatpush.msra.mxu0 0.0
  %1691 = vmatpush.msra.mxu0 0.0
  %1692 = vmatpush.msra.mxu0 0.0
  %1693 = vmatpush.msra.mxu0 0.0
  %1694 = vmatpush.msra.mxu0 0.0
  %1695 = vmatpush.msra.mxu0 0.0
  %1696 = vmatpush.msra.mxu0 0.0
  %1697 = vmatpush.msra.mxu0 0.0
  %1698 = vmatpush.msra.mxu0 0.0
  %1699 = vmatpush.msra.mxu0 0.0
  %1700 = vmatpush.msra.mxu0 0.0
  %1701 = vmatpush.msra.mxu0 %v1688
  %1702 = vmatpush.msra.mxu0 %v1687
  %1703 = vmatpush.msra.mxu0 %v1686
  %1704 = vmatpush.msra.mxu0 %v1685
  %1705 = vmatmul.f32.gmra.mxu0 %v176
  %v1706 = vpop.f32.mrf.mxu0
  %v1707 = vadd.f32 0.0, %v1706
  %1708 = vmatmul.f32.gmra.mxu0 %v179
  %v1709 = vpop.f32.mrf.mxu0
  %v1710 = vadd.f32 0.0, %v1709
  %1711 = vmatmul.f32.gmra.mxu0 %v182
  %v1712 = vpop.f32.mrf.mxu0
  %v1713 = vadd.f32 0.0, %v1712
  %1714 = vmatmul.f32.gmra.mxu0 %v185
  %v1715 = vpop.f32.mrf.mxu0
  %v1716 = vadd.f32 0.0, %v1715
  %1717 = vmatmul.f32.gmra.mxu0 %v188
  %v1718 = vpop.f32.mrf.mxu0
  %v1719 = vadd.f32 0.0, %v1718
  %1720 = vmatmul.f32.gmra.mxu0 %v191
  %v1721 = vpop.f32.mrf.mxu0
  %v1722 = vadd.f32 0.0, %v1721
  %1723 = vdwg.mxu0
  %s1724 = scalar_lea.vmem %s3, 608
  %v1725 = vld [vmem:[%s1724] sm:$0xff]
  %v1726 = vld [vmem:[%s1724 + $0x8] sm:$0xff]
  %v1727 = vld [vmem:[%s1724 + $0x10] sm:$0xff]
  %v1728 = vld [vmem:[%s1724 + $0x18] sm:$0xff]
  %1729 = vmatpush.msra.mxu0 0.0
  %1730 = vmatpush.msra.mxu0 0.0
  %1731 = vmatpush.msra.mxu0 0.0
  %1732 = vmatpush.msra.mxu0 0.0
  %1733 = vmatpush.msra.mxu0 0.0
  %1734 = vmatpush.msra.mxu0 0.0
  %1735 = vmatpush.msra.mxu0 0.0
  %1736 = vmatpush.msra.mxu0 0.0
  %1737 = vmatpush.msra.mxu0 0.0
  %1738 = vmatpush.msra.mxu0 0.0
  %1739 = vmatpush.msra.mxu0 0.0
  %1740 = vmatpush.msra.mxu0 0.0
  %1741 = vmatpush.msra.mxu0 %v1728
  %1742 = vmatpush.msra.mxu0 %v1727
  %1743 = vmatpush.msra.mxu0 %v1726
  %1744 = vmatpush.msra.mxu0 %v1725
  %1745 = vmatmul.f32.gmra.mxu0 %v176
  %v1746 = vpop.f32.mrf.mxu0
  %v1747 = vadd.f32 0.0, %v1746
  %1748 = vmatmul.f32.gmra.mxu0 %v179
  %v1749 = vpop.f32.mrf.mxu0
  %v1750 = vadd.f32 0.0, %v1749
  %1751 = vmatmul.f32.gmra.mxu0 %v182
  %v1752 = vpop.f32.mrf.mxu0
  %v1753 = vadd.f32 0.0, %v1752
  %1754 = vmatmul.f32.gmra.mxu0 %v185
  %v1755 = vpop.f32.mrf.mxu0
  %v1756 = vadd.f32 0.0, %v1755
  %1757 = vmatmul.f32.gmra.mxu0 %v188
  %v1758 = vpop.f32.mrf.mxu0
  %v1759 = vadd.f32 0.0, %v1758
  %1760 = vmatmul.f32.gmra.mxu0 %v191
  %v1761 = vpop.f32.mrf.mxu0
  %v1762 = vadd.f32 0.0, %v1761
  %1763 = vdwg.mxu0
  %s1764 = scalar_lea.vmem %s3, 640
  %v1765 = vld [vmem:[%s1764] sm:$0xff]
  %v1766 = vld [vmem:[%s1764 + $0x8] sm:$0xff]
  %v1767 = vld [vmem:[%s1764 + $0x10] sm:$0xff]
  %v1768 = vld [vmem:[%s1764 + $0x18] sm:$0xff]
  %1769 = vmatpush.msra.mxu0 0.0
  %1770 = vmatpush.msra.mxu0 0.0
  %1771 = vmatpush.msra.mxu0 0.0
  %1772 = vmatpush.msra.mxu0 0.0
  %1773 = vmatpush.msra.mxu0 0.0
  %1774 = vmatpush.msra.mxu0 0.0
  %1775 = vmatpush.msra.mxu0 0.0
  %1776 = vmatpush.msra.mxu0 0.0
  %1777 = vmatpush.msra.mxu0 0.0
  %1778 = vmatpush.msra.mxu0 0.0
  %1779 = vmatpush.msra.mxu0 0.0
  %1780 = vmatpush.msra.mxu0 0.0
  %1781 = vmatpush.msra.mxu0 %v1768
  %1782 = vmatpush.msra.mxu0 %v1767
  %1783 = vmatpush.msra.mxu0 %v1766
  %1784 = vmatpush.msra.mxu0 %v1765
  %1785 = vmatmul.f32.gmra.mxu0 %v176
  %v1786 = vpop.f32.mrf.mxu0
  %v1787 = vadd.f32 0.0, %v1786
  %1788 = vmatmul.f32.gmra.mxu0 %v179
  %v1789 = vpop.f32.mrf.mxu0
  %v1790 = vadd.f32 0.0, %v1789
  %1791 = vmatmul.f32.gmra.mxu0 %v182
  %v1792 = vpop.f32.mrf.mxu0
  %v1793 = vadd.f32 0.0, %v1792
  %1794 = vmatmul.f32.gmra.mxu0 %v185
  %v1795 = vpop.f32.mrf.mxu0
  %v1796 = vadd.f32 0.0, %v1795
  %1797 = vmatmul.f32.gmra.mxu0 %v188
  %v1798 = vpop.f32.mrf.mxu0
  %v1799 = vadd.f32 0.0, %v1798
  %1800 = vmatmul.f32.gmra.mxu0 %v191
  %v1801 = vpop.f32.mrf.mxu0
  %v1802 = vadd.f32 0.0, %v1801
  %1803 = vdwg.mxu0
  %s1804 = scalar_lea.vmem %s3, 672
  %v1805 = vld [vmem:[%s1804] sm:$0xff]
  %v1806 = vld [vmem:[%s1804 + $0x8] sm:$0xff]
  %v1807 = vld [vmem:[%s1804 + $0x10] sm:$0xff]
  %v1808 = vld [vmem:[%s1804 + $0x18] sm:$0xff]
  %1809 = vmatpush.msra.mxu0 0.0
  %1810 = vmatpush.msra.mxu0 0.0
  %1811 = vmatpush.msra.mxu0 0.0
  %1812 = vmatpush.msra.mxu0 0.0
  %1813 = vmatpush.msra.mxu0 0.0
  %1814 = vmatpush.msra.mxu0 0.0
  %1815 = vmatpush.msra.mxu0 0.0
  %1816 = vmatpush.msra.mxu0 0.0
  %1817 = vmatpush.msra.mxu0 0.0
  %1818 = vmatpush.msra.mxu0 0.0
  %1819 = vmatpush.msra.mxu0 0.0
  %1820 = vmatpush.msra.mxu0 0.0
  %1821 = vmatpush.msra.mxu0 %v1808
  %1822 = vmatpush.msra.mxu0 %v1807
  %1823 = vmatpush.msra.mxu0 %v1806
  %1824 = vmatpush.msra.mxu0 %v1805
  %1825 = vmatmul.f32.gmra.mxu0 %v176
  %v1826 = vpop.f32.mrf.mxu0
  %v1827 = vadd.f32 0.0, %v1826
  %1828 = vmatmul.f32.gmra.mxu0 %v179
  %v1829 = vpop.f32.mrf.mxu0
  %v1830 = vadd.f32 0.0, %v1829
  %1831 = vmatmul.f32.gmra.mxu0 %v182
  %v1832 = vpop.f32.mrf.mxu0
  %v1833 = vadd.f32 0.0, %v1832
  %1834 = vmatmul.f32.gmra.mxu0 %v185
  %v1835 = vpop.f32.mrf.mxu0
  %v1836 = vadd.f32 0.0, %v1835
  %1837 = vmatmul.f32.gmra.mxu0 %v188
  %v1838 = vpop.f32.mrf.mxu0
  %v1839 = vadd.f32 0.0, %v1838
  %1840 = vmatmul.f32.gmra.mxu0 %v191
  %v1841 = vpop.f32.mrf.mxu0
  %v1842 = vadd.f32 0.0, %v1841
  %1843 = vdwg.mxu0
  %s1844 = scalar_lea.vmem %s3, 704
  %v1845 = vld [vmem:[%s1844] sm:$0xff]
  %v1846 = vld [vmem:[%s1844 + $0x8] sm:$0xff]
  %v1847 = vld [vmem:[%s1844 + $0x10] sm:$0xff]
  %v1848 = vld [vmem:[%s1844 + $0x18] sm:$0xff]
  %1849 = vmatpush.msra.mxu0 0.0
  %1850 = vmatpush.msra.mxu0 0.0
  %1851 = vmatpush.msra.mxu0 0.0
  %1852 = vmatpush.msra.mxu0 0.0
  %1853 = vmatpush.msra.mxu0 0.0
  %1854 = vmatpush.msra.mxu0 0.0
  %1855 = vmatpush.msra.mxu0 0.0
  %1856 = vmatpush.msra.mxu0 0.0
  %1857 = vmatpush.msra.mxu0 0.0
  %1858 = vmatpush.msra.mxu0 0.0
  %1859 = vmatpush.msra.mxu0 0.0
  %1860 = vmatpush.msra.mxu0 0.0
  %1861 = vmatpush.msra.mxu0 %v1848
  %1862 = vmatpush.msra.mxu0 %v1847
  %1863 = vmatpush.msra.mxu0 %v1846
  %1864 = vmatpush.msra.mxu0 %v1845
  %1865 = vmatmul.f32.gmra.mxu0 %v176
  %v1866 = vpop.f32.mrf.mxu0
  %v1867 = vadd.f32 0.0, %v1866
  %1868 = vmatmul.f32.gmra.mxu0 %v179
  %v1869 = vpop.f32.mrf.mxu0
  %v1870 = vadd.f32 0.0, %v1869
  %1871 = vmatmul.f32.gmra.mxu0 %v182
  %v1872 = vpop.f32.mrf.mxu0
  %v1873 = vadd.f32 0.0, %v1872
  %1874 = vmatmul.f32.gmra.mxu0 %v185
  %v1875 = vpop.f32.mrf.mxu0
  %v1876 = vadd.f32 0.0, %v1875
  %1877 = vmatmul.f32.gmra.mxu0 %v188
  %v1878 = vpop.f32.mrf.mxu0
  %v1879 = vadd.f32 0.0, %v1878
  %1880 = vmatmul.f32.gmra.mxu0 %v191
  %v1881 = vpop.f32.mrf.mxu0
  %v1882 = vadd.f32 0.0, %v1881
  %1883 = vdwg.mxu0
  %v1884 = vmul.f32 %v1707, %v32
  %v1885 = vmul.f32 %v1710, %v33
  %v1886 = vmul.f32 %v1713, %v34
  %v1887 = vmul.f32 %v1716, %v35
  %v1888 = vmul.f32 %v1719, %v36
  %v1889 = vmul.f32 %v1722, %v37
  %v1890 = vmul.f32 %v1747, %v39
  %v1891 = vmul.f32 %v1750, %v40
  %v1892 = vmul.f32 %v1753, %v41
  %v1893 = vmul.f32 %v1756, %v42
  %v1894 = vmul.f32 %v1759, %v43
  %v1895 = vmul.f32 %v1762, %v44
  %v1896 = vadd.f32 %v1884, %v1890
  %v1897 = vadd.f32 %v1885, %v1891
  %v1898 = vadd.f32 %v1886, %v1892
  %v1899 = vadd.f32 %v1887, %v1893
  %v1900 = vadd.f32 %v1888, %v1894
  %v1901 = vadd.f32 %v1889, %v1895
  %v1902 = vmul.f32 %v1787, %v32
  %v1903 = vmul.f32 %v1790, %v33
  %v1904 = vmul.f32 %v1793, %v34
  %v1905 = vmul.f32 %v1796, %v35
  %v1906 = vmul.f32 %v1799, %v36
  %v1907 = vmul.f32 %v1802, %v37
  %v1908 = vmul.f32 %v1827, %v39
  %v1909 = vmul.f32 %v1830, %v40
  %v1910 = vmul.f32 %v1833, %v41
  %v1911 = vmul.f32 %v1836, %v42
  %v1912 = vmul.f32 %v1839, %v43
  %v1913 = vmul.f32 %v1842, %v44
  %v1914 = vadd.f32 %v1902, %v1908
  %v1915 = vadd.f32 %v1903, %v1909
  %v1916 = vadd.f32 %v1904, %v1910
  %v1917 = vadd.f32 %v1905, %v1911
  %v1918 = vadd.f32 %v1906, %v1912
  %v1919 = vadd.f32 %v1907, %v1913
  %v1921 = vsel %vm424, %v1896, 0
  %v1924 = vsel %vm424, %v1897, 0
  %v1927 = vsel %vm424, %v1898, 0
  %v1930 = vsel %vm424, %v1899, 0
  %v1933 = vsel %vm424, %v1900, 0
  %v1936 = vsel %vm424, %v1901, 0
  %v1939 = vsel %vm424, %v1914, 0
  %v1942 = vsel %vm424, %v1915, 0
  %v1945 = vsel %vm424, %v1916, 0
  %v1948 = vsel %vm424, %v1917, 0
  %v1951 = vsel %vm424, %v1918, 0
  %v1954 = vsel %vm424, %v1919, 0
  %1956 = vmatpush.xpose.msra.mxu0 0.0
  %1957 = vmatpush.xpose.msra.mxu0 0.0
  %1958 = vmatpush.xpose.msra.mxu0 0.0
  %1959 = vmatpush.xpose.msra.mxu0 0.0
  %1960 = vmatpush.xpose.msra.mxu0 0.0
  %1961 = vmatpush.xpose.msra.mxu0 0.0
  %1962 = vmatpush.xpose.msra.mxu0 0.0
  %1963 = vmatpush.xpose.msra.mxu0 0.0
  %1964 = vmatpush.xpose.msra.mxu0 0.0
  %1965 = vmatpush.xpose.msra.mxu0 0.0
  %1966 = vmatpush.xpose.msra.mxu0 %v1954
  %1967 = vmatpush.xpose.msra.mxu0 %v1951
  %1968 = vmatpush.xpose.msra.mxu0 %v1948
  %1969 = vmatpush.xpose.msra.mxu0 %v1945
  %1970 = vmatpush.xpose.msra.mxu0 %v1942
  %1971 = vmatpush.xpose.msra.mxu0 %v1939
  %1972 = vmatmul.f32.gmra.mxu0 %v1921
  %v1973 = vpop.f32.mrf.mxu0
  %v1974 = vadd.f32 %v45, %v1973
  %1975 = vmatmul.f32.gmra.mxu0 %v1924
  %v1976 = vpop.f32.mrf.mxu0
  %v1977 = vadd.f32 %v46, %v1976
  %1978 = vmatmul.f32.gmra.mxu0 %v1927
  %v1979 = vpop.f32.mrf.mxu0
  %v1980 = vadd.f32 %v47, %v1979
  %1981 = vmatmul.f32.gmra.mxu0 %v1930
  %v1982 = vpop.f32.mrf.mxu0
  %v1983 = vadd.f32 %v48, %v1982
  %1984 = vmatmul.f32.gmra.mxu0 %v1933
  %v1985 = vpop.f32.mrf.mxu0
  %v1986 = vadd.f32 %v49, %v1985
  %1987 = vmatmul.f32.gmra.mxu0 %v1936
  %v1988 = vpop.f32.mrf.mxu0
  %v1989 = vadd.f32 %v50, %v1988
  %1990 = vdwg.mxu0
  %v1991 = vsel %vm496, %v1974, -inf
  %1992 = vmax.xlane.f32.xlu0 %v1991
  %v1993 = vpop.xlane.xlu0 %1992
  %v1994 = vsel %vm496, %v1977, -inf
  %1995 = vmax.xlane.f32.xlu0 %v1994
  %v1996 = vpop.xlane.xlu0 %1995
  %v1997 = vsel %vm496, %v1980, -inf
  %1998 = vmax.xlane.f32.xlu0 %v1997
  %v1999 = vpop.xlane.xlu0 %1998
  %v2000 = vsel %vm496, %v1983, -inf
  %2001 = vmax.xlane.f32.xlu0 %v2000
  %v2002 = vpop.xlane.xlu0 %2001
  %v2003 = vsel %vm496, %v1986, -inf
  %2004 = vmax.xlane.f32.xlu0 %v2003
  %v2005 = vpop.xlane.xlu0 %2004
  %v2006 = vsel %vm496, %v1989, -inf
  %2007 = vmax.xlane.f32.xlu0 %v2006
  %v2008 = vpop.xlane.xlu0 %2007
  %v2009 = vsub.f32 %v1974, %v1993
  %v2010 = vsub.f32 %v1977, %v1996
  %v2011 = vsub.f32 %v1980, %v1999
  %v2012 = vsub.f32 %v1983, %v2002
  %v2013 = vsub.f32 %v1986, %v2005
  %v2014 = vsub.f32 %v1989, %v2008
  %v2015 = vmul.f32 %v2009, 1.442695
  %v2016 = vpow.pop %v2015
  %v2017 = vmul.f32 %v2010, 1.442695
  %v2018 = vpow.pop %v2017
  %v2019 = vmul.f32 %v2011, 1.442695
  %v2020 = vpow.pop %v2019
  %v2021 = vmul.f32 %v2012, 1.442695
  %v2022 = vpow.pop %v2021
  %v2023 = vmul.f32 %v2013, 1.442695
  %v2024 = vpow.pop %v2023
  %v2025 = vmul.f32 %v2014, 1.442695
  %v2026 = vpow.pop %v2025
  %v2027 = vsel %vm496, %v2016, 0.0
  %2028 = vadd.xlane.f32.xlu0 %v2027
  %v2029 = vpop.xlane.xlu0 %2028
  %v2030 = vsel %vm496, %v2018, 0.0
  %2031 = vadd.xlane.f32.xlu0 %v2030
  %v2032 = vpop.xlane.xlu0 %2031
  %v2033 = vsel %vm496, %v2020, 0.0
  %2034 = vadd.xlane.f32.xlu0 %v2033
  %v2035 = vpop.xlane.xlu0 %2034
  %v2036 = vsel %vm496, %v2022, 0.0
  %2037 = vadd.xlane.f32.xlu0 %v2036
  %v2038 = vpop.xlane.xlu0 %2037
  %v2039 = vsel %vm496, %v2024, 0.0
  %2040 = vadd.xlane.f32.xlu0 %v2039
  %v2041 = vpop.xlane.xlu0 %2040
  %v2042 = vsel %vm496, %v2026, 0.0
  %2043 = vadd.xlane.f32.xlu0 %v2042
  %v2044 = vpop.xlane.xlu0 %2043
  %v2045 = vrcp.pop %v2029
  %v2046 = vrcp.pop %v2032
  %v2047 = vrcp.pop %v2035
  %v2048 = vrcp.pop %v2038
  %v2049 = vrcp.pop %v2041
  %v2050 = vrcp.pop %v2044
  %v2051 = vmul.f32 %v2016, %v2045
  %v2052 = vmul.f32 %v2018, %v2046
  %v2053 = vmul.f32 %v2020, %v2047
  %v2054 = vmul.f32 %v2022, %v2048
  %v2055 = vmul.f32 %v2024, %v2049
  %v2056 = vmul.f32 %v2026, %v2050
  %v2058 = vsel %vm496, %v2051, 0
  %v2061 = vsel %vm496, %v2052, 0
  %v2064 = vsel %vm496, %v2053, 0
  %v2067 = vsel %vm496, %v2054, 0
  %v2070 = vsel %vm496, %v2055, 0
  %v2073 = vsel %vm496, %v2056, 0
  %2075 = vmatpush.msra.mxu0 0.0
  %2076 = vmatpush.msra.mxu0 0.0
  %2077 = vmatpush.msra.mxu0 0.0
  %2078 = vmatpush.msra.mxu0 0.0
  %2079 = vmatpush.msra.mxu0 0.0
  %2080 = vmatpush.msra.mxu0 0.0
  %2081 = vmatpush.msra.mxu0 0.0
  %2082 = vmatpush.msra.mxu0 0.0
  %2083 = vmatpush.msra.mxu0 0.0
  %2084 = vmatpush.msra.mxu0 0.0
  %2085 = vmatpush.msra.mxu0 %v1882
  %2086 = vmatpush.msra.mxu0 %v1879
  %2087 = vmatpush.msra.mxu0 %v1876
  %2088 = vmatpush.msra.mxu0 %v1873
  %2089 = vmatpush.msra.mxu0 %v1870
  %2090 = vmatpush.msra.mxu0 %v1867
  %2091 = vmatmul.f32.gmra.mxu0 %v2058
  %v2092 = vpop.f32.mrf.mxu0
  %v2093 = vadd.f32 0.0, %v2092
  %2094 = vmatmul.f32.gmra.mxu0 %v2061
  %v2095 = vpop.f32.mrf.mxu0
  %v2096 = vadd.f32 0.0, %v2095
  %2097 = vmatmul.f32.gmra.mxu0 %v2064
  %v2098 = vpop.f32.mrf.mxu0
  %v2099 = vadd.f32 0.0, %v2098
  %2100 = vmatmul.f32.gmra.mxu0 %v2067
  %v2101 = vpop.f32.mrf.mxu0
  %v2102 = vadd.f32 0.0, %v2101
  %2103 = vmatmul.f32.gmra.mxu0 %v2070
  %v2104 = vpop.f32.mrf.mxu0
  %v2105 = vadd.f32 0.0, %v2104
  %2106 = vmatmul.f32.gmra.mxu0 %v2073
  %v2107 = vpop.f32.mrf.mxu0
  %v2108 = vadd.f32 0.0, %v2107
  %2109 = vdwg.mxu0
  %s2110 = scalar_lea.vmem %s3, 736
  %v2111 = vld [vmem:[%s2110] sm:$0xff]
  %v2112 = vld [vmem:[%s2110 + $0x8] sm:$0xff]
  %v2113 = vld [vmem:[%s2110 + $0x10] sm:$0xff]
  %v2114 = vld [vmem:[%s2110 + $0x18] sm:$0xff]
  %v2116 = vsel %vm424, %v2093, 0
  %v2119 = vsel %vm424, %v2096, 0
  %v2122 = vsel %vm424, %v2099, 0
  %v2125 = vsel %vm424, %v2102, 0
  %v2128 = vsel %vm424, %v2105, 0
  %v2131 = vsel %vm424, %v2108, 0
  %v2134 = vsel %vm424, %v2111, 0
  %v2137 = vsel %vm424, %v2112, 0
  %v2140 = vsel %vm424, %v2113, 0
  %v2143 = vsel %vm424, %v2114, 0
  %2145 = vmatpush.xpose.msra.mxu0 0.0
  %2146 = vmatpush.xpose.msra.mxu0 0.0
  %2147 = vmatpush.xpose.msra.mxu0 0.0
  %2148 = vmatpush.xpose.msra.mxu0 0.0
  %2149 = vmatpush.xpose.msra.mxu0 0.0
  %2150 = vmatpush.xpose.msra.mxu0 0.0
  %2151 = vmatpush.xpose.msra.mxu0 0.0
  %2152 = vmatpush.xpose.msra.mxu0 0.0
  %2153 = vmatpush.xpose.msra.mxu0 0.0
  %2154 = vmatpush.xpose.msra.mxu0 0.0
  %2155 = vmatpush.xpose.msra.mxu0 0.0
  %2156 = vmatpush.xpose.msra.mxu0 0.0
  %2157 = vmatpush.xpose.msra.mxu0 %v2143
  %2158 = vmatpush.xpose.msra.mxu0 %v2140
  %2159 = vmatpush.xpose.msra.mxu0 %v2137
  %2160 = vmatpush.xpose.msra.mxu0 %v2134
  %2161 = vmatmul.f32.gmra.mxu0 %v2116
  %v2162 = vpop.f32.mrf.mxu0
  %v2163 = vadd.f32 0.0, %v2162
  %2164 = vmatmul.f32.gmra.mxu0 %v2119
  %v2165 = vpop.f32.mrf.mxu0
  %v2166 = vadd.f32 0.0, %v2165
  %2167 = vmatmul.f32.gmra.mxu0 %v2122
  %v2168 = vpop.f32.mrf.mxu0
  %v2169 = vadd.f32 0.0, %v2168
  %2170 = vmatmul.f32.gmra.mxu0 %v2125
  %v2171 = vpop.f32.mrf.mxu0
  %v2172 = vadd.f32 0.0, %v2171
  %2173 = vmatmul.f32.gmra.mxu0 %v2128
  %v2174 = vpop.f32.mrf.mxu0
  %v2175 = vadd.f32 0.0, %v2174
  %2176 = vmatmul.f32.gmra.mxu0 %v2131
  %v2177 = vpop.f32.mrf.mxu0
  %v2178 = vadd.f32 0.0, %v2177
  %2179 = vdwg.mxu0
  %v2180 = vadd.f32 %v1678, %v2163
  %v2181 = vadd.f32 %v1679, %v2166
  %v2182 = vadd.f32 %v1680, %v2169
  %v2183 = vadd.f32 %v1681, %v2172
  %v2184 = vadd.f32 %v1682, %v2175
  %v2185 = vadd.f32 %v1683, %v2178
  %v2186 = vadd.f32 %v26, %v2180
  %v2187 = vadd.f32 %v27, %v2181
  %v2188 = vadd.f32 %v28, %v2182
  %v2189 = vadd.f32 %v29, %v2183
  %v2190 = vadd.f32 %v30, %v2184
  %v2191 = vadd.f32 %v31, %v2185
  %s2192 = scalar_lea.vmem %s5, 1
  %v2193 = vld [vmem:[%s2192] sm:$0x1]
  %v2194 = vmul.f32 %v2186, %v2186
  %v2195 = vmul.f32 %v2187, %v2187
  %v2196 = vmul.f32 %v2188, %v2188
  %v2197 = vmul.f32 %v2189, %v2189
  %v2198 = vmul.f32 %v2190, %v2190
  %v2199 = vmul.f32 %v2191, %v2191
  %v2200 = vsel %vm58, %v2194, 0.0
  %2201 = vadd.xlane.f32.xlu0 %v2200
  %v2202 = vpop.xlane.xlu0 %2201
  %v2203 = vsel %vm58, %v2195, 0.0
  %2204 = vadd.xlane.f32.xlu0 %v2203
  %v2205 = vpop.xlane.xlu0 %2204
  %v2206 = vsel %vm58, %v2196, 0.0
  %2207 = vadd.xlane.f32.xlu0 %v2206
  %v2208 = vpop.xlane.xlu0 %2207
  %v2209 = vsel %vm58, %v2197, 0.0
  %2210 = vadd.xlane.f32.xlu0 %v2209
  %v2211 = vpop.xlane.xlu0 %2210
  %v2212 = vsel %vm58, %v2198, 0.0
  %2213 = vadd.xlane.f32.xlu0 %v2212
  %v2214 = vpop.xlane.xlu0 %2213
  %v2215 = vsel %vm58, %v2199, 0.0
  %2216 = vadd.xlane.f32.xlu0 %v2215
  %v2217 = vpop.xlane.xlu0 %2216
  %v2218 = vmul.f32 %v2202, %v83
  %v2219 = vmul.f32 %v2205, %v83
  %v2220 = vmul.f32 %v2208, %v83
  %v2221 = vmul.f32 %v2211, %v83
  %v2222 = vmul.f32 %v2214, %v83
  %v2223 = vmul.f32 %v2217, %v83
  %v2224 = vadd.f32 %v2218, 1e-06
  %v2225 = vadd.f32 %v2219, 1e-06
  %v2226 = vadd.f32 %v2220, 1e-06
  %v2227 = vadd.f32 %v2221, 1e-06
  %v2228 = vadd.f32 %v2222, 1e-06
  %v2229 = vadd.f32 %v2223, 1e-06
  %v2230 = vrsqrt.pop %v2224
  %v2231 = vmul.f32 %v2230, %v2224
  %v2232 = vmul.f32 %v2231, %v2230
  %v2233 = vmul.f32 0.5, %v2232
  %v2234 = vsub.f32 1.5, %v2233
  %v2235 = vmul.f32 %v2230, %v2234
  %vm2236 = vweird.f32 %v2224
  %vm2237 = vweird.f32 %v2230
  %vm2238 = vmor %vm2236, %vm2237
  %v2239 = vsel %vm2238, %v2230, %v2235
  %v2240 = vrsqrt.pop %v2225
  %v2241 = vmul.f32 %v2240, %v2225
  %v2242 = vmul.f32 %v2241, %v2240
  %v2243 = vmul.f32 0.5, %v2242
  %v2244 = vsub.f32 1.5, %v2243
  %v2245 = vmul.f32 %v2240, %v2244
  %vm2246 = vweird.f32 %v2225
  %vm2247 = vweird.f32 %v2240
  %vm2248 = vmor %vm2246, %vm2247
  %v2249 = vsel %vm2248, %v2240, %v2245
  %v2250 = vrsqrt.pop %v2226
  %v2251 = vmul.f32 %v2250, %v2226
  %v2252 = vmul.f32 %v2251, %v2250
  %v2253 = vmul.f32 0.5, %v2252
  %v2254 = vsub.f32 1.5, %v2253
  %v2255 = vmul.f32 %v2250, %v2254
  %vm2256 = vweird.f32 %v2226
  %vm2257 = vweird.f32 %v2250
  %vm2258 = vmor %vm2256, %vm2257
  %v2259 = vsel %vm2258, %v2250, %v2255
  %v2260 = vrsqrt.pop %v2227
  %v2261 = vmul.f32 %v2260, %v2227
  %v2262 = vmul.f32 %v2261, %v2260
  %v2263 = vmul.f32 0.5, %v2262
  %v2264 = vsub.f32 1.5, %v2263
  %v2265 = vmul.f32 %v2260, %v2264
  %vm2266 = vweird.f32 %v2227
  %vm2267 = vweird.f32 %v2260
  %vm2268 = vmor %vm2266, %vm2267
  %v2269 = vsel %vm2268, %v2260, %v2265
  %v2270 = vrsqrt.pop %v2228
  %v2271 = vmul.f32 %v2270, %v2228
  %v2272 = vmul.f32 %v2271, %v2270
  %v2273 = vmul.f32 0.5, %v2272
  %v2274 = vsub.f32 1.5, %v2273
  %v2275 = vmul.f32 %v2270, %v2274
  %vm2276 = vweird.f32 %v2228
  %vm2277 = vweird.f32 %v2270
  %vm2278 = vmor %vm2276, %vm2277
  %v2279 = vsel %vm2278, %v2270, %v2275
  %v2280 = vrsqrt.pop %v2229
  %v2281 = vmul.f32 %v2280, %v2229
  %v2282 = vmul.f32 %v2281, %v2280
  %v2283 = vmul.f32 0.5, %v2282
  %v2284 = vsub.f32 1.5, %v2283
  %v2285 = vmul.f32 %v2280, %v2284
  %vm2286 = vweird.f32 %v2229
  %vm2287 = vweird.f32 %v2280
  %vm2288 = vmor %vm2286, %vm2287
  %v2289 = vsel %vm2288, %v2280, %v2285
  %v2290 = vmul.f32 %v2186, %v2239
  %v2291 = vmul.f32 %v2187, %v2249
  %v2292 = vmul.f32 %v2188, %v2259
  %v2293 = vmul.f32 %v2189, %v2269
  %v2294 = vmul.f32 %v2190, %v2279
  %v2295 = vmul.f32 %v2191, %v2289
  %v2297 = vperm.slane %v2193, 0
  %v2299 = vmul.f32 %v2290, %v2297
  %v2300 = vmul.f32 %v2291, %v2297
  %v2301 = vmul.f32 %v2292, %v2297
  %v2302 = vmul.f32 %v2293, %v2297
  %v2303 = vmul.f32 %v2294, %v2297
  %v2304 = vmul.f32 %v2295, %v2297
  %v2305 = vld [vmem:[%s4] sm:$0xff]
  %v2306 = vld [vmem:[%s4 + $0x8] sm:$0xff]
  %v2307 = vld [vmem:[%s4 + $0x10] sm:$0xff]
  %v2308 = vld [vmem:[%s4 + $0x18] sm:$0xff]
  %v2310 = vsel %vm58, %v2299, 0
  %v2313 = vsel %vm58, %v2300, 0
  %v2316 = vsel %vm58, %v2301, 0
  %v2319 = vsel %vm58, %v2302, 0
  %v2322 = vsel %vm58, %v2303, 0
  %v2325 = vsel %vm58, %v2304, 0
  %2327 = vmatpush.msra.mxu0 0.0
  %2328 = vmatpush.msra.mxu0 0.0
  %2329 = vmatpush.msra.mxu0 0.0
  %2330 = vmatpush.msra.mxu0 0.0
  %2331 = vmatpush.msra.mxu0 0.0
  %2332 = vmatpush.msra.mxu0 0.0
  %2333 = vmatpush.msra.mxu0 0.0
  %2334 = vmatpush.msra.mxu0 0.0
  %2335 = vmatpush.msra.mxu0 0.0
  %2336 = vmatpush.msra.mxu0 0.0
  %2337 = vmatpush.msra.mxu0 0.0
  %2338 = vmatpush.msra.mxu0 0.0
  %2339 = vmatpush.msra.mxu0 %v2308
  %2340 = vmatpush.msra.mxu0 %v2307
  %2341 = vmatpush.msra.mxu0 %v2306
  %2342 = vmatpush.msra.mxu0 %v2305
  %2343 = vmatmul.f32.gmra.mxu0 %v2310
  %v2344 = vpop.f32.mrf.mxu0
  %v2345 = vadd.f32 0.0, %v2344
  %2346 = vmatmul.f32.gmra.mxu0 %v2313
  %v2347 = vpop.f32.mrf.mxu0
  %v2348 = vadd.f32 0.0, %v2347
  %2349 = vmatmul.f32.gmra.mxu0 %v2316
  %v2350 = vpop.f32.mrf.mxu0
  %v2351 = vadd.f32 0.0, %v2350
  %2352 = vmatmul.f32.gmra.mxu0 %v2319
  %v2353 = vpop.f32.mrf.mxu0
  %v2354 = vadd.f32 0.0, %v2353
  %2355 = vmatmul.f32.gmra.mxu0 %v2322
  %v2356 = vpop.f32.mrf.mxu0
  %v2357 = vadd.f32 0.0, %v2356
  %2358 = vmatmul.f32.gmra.mxu0 %v2325
  %v2359 = vpop.f32.mrf.mxu0
  %v2360 = vadd.f32 0.0, %v2359
  %2361 = vdwg.mxu0
  %s2362 = scalar_lea.vmem %s4, 32
  %v2363 = vld [vmem:[%s2362] sm:$0xff]
  %v2364 = vld [vmem:[%s2362 + $0x8] sm:$0xff]
  %v2365 = vld [vmem:[%s2362 + $0x10] sm:$0xff]
  %v2366 = vld [vmem:[%s2362 + $0x18] sm:$0xff]
  %2367 = vmatpush.msra.mxu0 0.0
  %2368 = vmatpush.msra.mxu0 0.0
  %2369 = vmatpush.msra.mxu0 0.0
  %2370 = vmatpush.msra.mxu0 0.0
  %2371 = vmatpush.msra.mxu0 0.0
  %2372 = vmatpush.msra.mxu0 0.0
  %2373 = vmatpush.msra.mxu0 0.0
  %2374 = vmatpush.msra.mxu0 0.0
  %2375 = vmatpush.msra.mxu0 0.0
  %2376 = vmatpush.msra.mxu0 0.0
  %2377 = vmatpush.msra.mxu0 0.0
  %2378 = vmatpush.msra.mxu0 0.0
  %2379 = vmatpush.msra.mxu0 %v2366
  %2380 = vmatpush.msra.mxu0 %v2365
  %2381 = vmatpush.msra.mxu0 %v2364
  %2382 = vmatpush.msra.mxu0 %v2363
  %2383 = vmatmul.f32.gmra.mxu0 %v2310
  %v2384 = vpop.f32.mrf.mxu0
  %v2385 = vadd.f32 0.0, %v2384
  %2386 = vmatmul.f32.gmra.mxu0 %v2313
  %v2387 = vpop.f32.mrf.mxu0
  %v2388 = vadd.f32 0.0, %v2387
  %2389 = vmatmul.f32.gmra.mxu0 %v2316
  %v2390 = vpop.f32.mrf.mxu0
  %v2391 = vadd.f32 0.0, %v2390
  %2392 = vmatmul.f32.gmra.mxu0 %v2319
  %v2393 = vpop.f32.mrf.mxu0
  %v2394 = vadd.f32 0.0, %v2393
  %2395 = vmatmul.f32.gmra.mxu0 %v2322
  %v2396 = vpop.f32.mrf.mxu0
  %v2397 = vadd.f32 0.0, %v2396
  %2398 = vmatmul.f32.gmra.mxu0 %v2325
  %v2399 = vpop.f32.mrf.mxu0
  %v2400 = vadd.f32 0.0, %v2399
  %2401 = vdwg.mxu0
  %v2402 = vxor.u32 %v2345, 2147483648
  %v2403 = vxor.u32 %v2348, 2147483648
  %v2404 = vxor.u32 %v2351, 2147483648
  %v2405 = vxor.u32 %v2354, 2147483648
  %v2406 = vxor.u32 %v2357, 2147483648
  %v2407 = vxor.u32 %v2360, 2147483648
  %v2408 = vmul.f32 %v2402, 1.442695
  %v2409 = vpow.pop %v2408
  %v2410 = vmul.f32 %v2403, 1.442695
  %v2411 = vpow.pop %v2410
  %v2412 = vmul.f32 %v2404, 1.442695
  %v2413 = vpow.pop %v2412
  %v2414 = vmul.f32 %v2405, 1.442695
  %v2415 = vpow.pop %v2414
  %v2416 = vmul.f32 %v2406, 1.442695
  %v2417 = vpow.pop %v2416
  %v2418 = vmul.f32 %v2407, 1.442695
  %v2419 = vpow.pop %v2418
  %v2420 = vadd.f32 %v2409, 1.0
  %v2421 = vadd.f32 %v2411, 1.0
  %v2422 = vadd.f32 %v2413, 1.0
  %v2423 = vadd.f32 %v2415, 1.0
  %v2424 = vadd.f32 %v2417, 1.0
  %v2425 = vadd.f32 %v2419, 1.0
  %v2426 = vrcp.pop %v2420
  %v2427 = vmul.f32 %v2420, %v2426
  %v2428 = vsub.f32 1.0, %v2427
  %v2429 = vmul.f32 %v2426, %v2428
  %v2430 = vadd.f32 %v2426, %v2429
  %vm2431 = vweird.f32 %v2420
  %vm2432 = vweird.f32 %v2426
  %vm2433 = vmor %vm2431, %vm2432
  %v2434 = vsel %vm2433, %v2426, %v2430
  %v2435 = vand.u32 2147483647, %v2420
  %vm2436 = vcmp.eq.f32.partialorder %v2435, 8.507059e+37
  %v2437 = vand.u32 %v2420, 2147483648
  %v2438 = vor.u32 1.1754944e-38, %v2437
  %v2439 = vsel %vm2436, %v2438, %v2434
  %v2440 = vmul.f32 1.0, %v2439
  %v2441 = vrcp.pop %v2421
  %v2442 = vmul.f32 %v2421, %v2441
  %v2443 = vsub.f32 1.0, %v2442
  %v2444 = vmul.f32 %v2441, %v2443
  %v2445 = vadd.f32 %v2441, %v2444
  %vm2446 = vweird.f32 %v2421
  %vm2447 = vweird.f32 %v2441
  %vm2448 = vmor %vm2446, %vm2447
  %v2449 = vsel %vm2448, %v2441, %v2445
  %v2450 = vand.u32 2147483647, %v2421
  %vm2451 = vcmp.eq.f32.partialorder %v2450, 8.507059e+37
  %v2452 = vand.u32 %v2421, 2147483648
  %v2453 = vor.u32 1.1754944e-38, %v2452
  %v2454 = vsel %vm2451, %v2453, %v2449
  %v2455 = vmul.f32 1.0, %v2454
  %v2456 = vrcp.pop %v2422
  %v2457 = vmul.f32 %v2422, %v2456
  %v2458 = vsub.f32 1.0, %v2457
  %v2459 = vmul.f32 %v2456, %v2458
  %v2460 = vadd.f32 %v2456, %v2459
  %vm2461 = vweird.f32 %v2422
  %vm2462 = vweird.f32 %v2456
  %vm2463 = vmor %vm2461, %vm2462
  %v2464 = vsel %vm2463, %v2456, %v2460
  %v2465 = vand.u32 2147483647, %v2422
  %vm2466 = vcmp.eq.f32.partialorder %v2465, 8.507059e+37
  %v2467 = vand.u32 %v2422, 2147483648
  %v2468 = vor.u32 1.1754944e-38, %v2467
  %v2469 = vsel %vm2466, %v2468, %v2464
  %v2470 = vmul.f32 1.0, %v2469
  %v2471 = vrcp.pop %v2423
  %v2472 = vmul.f32 %v2423, %v2471
  %v2473 = vsub.f32 1.0, %v2472
  %v2474 = vmul.f32 %v2471, %v2473
  %v2475 = vadd.f32 %v2471, %v2474
  %vm2476 = vweird.f32 %v2423
  %vm2477 = vweird.f32 %v2471
  %vm2478 = vmor %vm2476, %vm2477
  %v2479 = vsel %vm2478, %v2471, %v2475
  %v2480 = vand.u32 2147483647, %v2423
  %vm2481 = vcmp.eq.f32.partialorder %v2480, 8.507059e+37
  %v2482 = vand.u32 %v2423, 2147483648
  %v2483 = vor.u32 1.1754944e-38, %v2482
  %v2484 = vsel %vm2481, %v2483, %v2479
  %v2485 = vmul.f32 1.0, %v2484
  %v2486 = vrcp.pop %v2424
  %v2487 = vmul.f32 %v2424, %v2486
  %v2488 = vsub.f32 1.0, %v2487
  %v2489 = vmul.f32 %v2486, %v2488
  %v2490 = vadd.f32 %v2486, %v2489
  %vm2491 = vweird.f32 %v2424
  %vm2492 = vweird.f32 %v2486
  %vm2493 = vmor %vm2491, %vm2492
  %v2494 = vsel %vm2493, %v2486, %v2490
  %v2495 = vand.u32 2147483647, %v2424
  %vm2496 = vcmp.eq.f32.partialorder %v2495, 8.507059e+37
  %v2497 = vand.u32 %v2424, 2147483648
  %v2498 = vor.u32 1.1754944e-38, %v2497
  %v2499 = vsel %vm2496, %v2498, %v2494
  %v2500 = vmul.f32 1.0, %v2499
  %v2501 = vrcp.pop %v2425
  %v2502 = vmul.f32 %v2425, %v2501
  %v2503 = vsub.f32 1.0, %v2502
  %v2504 = vmul.f32 %v2501, %v2503
  %v2505 = vadd.f32 %v2501, %v2504
  %vm2506 = vweird.f32 %v2425
  %vm2507 = vweird.f32 %v2501
  %vm2508 = vmor %vm2506, %vm2507
  %v2509 = vsel %vm2508, %v2501, %v2505
  %v2510 = vand.u32 2147483647, %v2425
  %vm2511 = vcmp.eq.f32.partialorder %v2510, 8.507059e+37
  %v2512 = vand.u32 %v2425, 2147483648
  %v2513 = vor.u32 1.1754944e-38, %v2512
  %v2514 = vsel %vm2511, %v2513, %v2509
  %v2515 = vmul.f32 1.0, %v2514
  %v2516 = vmul.f32 %v2345, %v2440
  %v2517 = vmul.f32 %v2348, %v2455
  %v2518 = vmul.f32 %v2351, %v2470
  %v2519 = vmul.f32 %v2354, %v2485
  %v2520 = vmul.f32 %v2357, %v2500
  %v2521 = vmul.f32 %v2360, %v2515
  %v2522 = vmul.f32 %v2516, %v2385
  %v2523 = vmul.f32 %v2517, %v2388
  %v2524 = vmul.f32 %v2518, %v2391
  %v2525 = vmul.f32 %v2519, %v2394
  %v2526 = vmul.f32 %v2520, %v2397
  %v2527 = vmul.f32 %v2521, %v2400
  %s2528 = scalar_lea.vmem %s4, 64
  %v2529 = vld [vmem:[%s2528] sm:$0xff]
  %v2530 = vld [vmem:[%s2528 + $0x8] sm:$0xff]
  %v2531 = vld [vmem:[%s2528 + $0x10] sm:$0xff]
  %v2532 = vld [vmem:[%s2528 + $0x18] sm:$0xff]
  %vm2533 = vcmask 523264
  %v2535 = vsel %vm2533, %v2522, 0
  %v2538 = vsel %vm2533, %v2523, 0
  %v2541 = vsel %vm2533, %v2524, 0
  %v2544 = vsel %vm2533, %v2525, 0
  %v2547 = vsel %vm2533, %v2526, 0
  %v2550 = vsel %vm2533, %v2527, 0
  %v2553 = vsel %vm2533, %v2529, 0
  %v2556 = vsel %vm2533, %v2530, 0
  %v2559 = vsel %vm2533, %v2531, 0
  %v2562 = vsel %vm2533, %v2532, 0
  %2564 = vmatpush.xpose.msra.mxu0 0.0
  %2565 = vmatpush.xpose.msra.mxu0 0.0
  %2566 = vmatpush.xpose.msra.mxu0 0.0
  %2567 = vmatpush.xpose.msra.mxu0 0.0
  %2568 = vmatpush.xpose.msra.mxu0 0.0
  %2569 = vmatpush.xpose.msra.mxu0 0.0
  %2570 = vmatpush.xpose.msra.mxu0 0.0
  %2571 = vmatpush.xpose.msra.mxu0 0.0
  %2572 = vmatpush.xpose.msra.mxu0 0.0
  %2573 = vmatpush.xpose.msra.mxu0 0.0
  %2574 = vmatpush.xpose.msra.mxu0 0.0
  %2575 = vmatpush.xpose.msra.mxu0 0.0
  %2576 = vmatpush.xpose.msra.mxu0 %v2562
  %2577 = vmatpush.xpose.msra.mxu0 %v2559
  %2578 = vmatpush.xpose.msra.mxu0 %v2556
  %2579 = vmatpush.xpose.msra.mxu0 %v2553
  %2580 = vmatmul.f32.gmra.mxu0 %v2535
  %v2581 = vpop.f32.mrf.mxu0
  %v2582 = vadd.f32 0.0, %v2581
  %2583 = vmatmul.f32.gmra.mxu0 %v2538
  %v2584 = vpop.f32.mrf.mxu0
  %v2585 = vadd.f32 0.0, %v2584
  %2586 = vmatmul.f32.gmra.mxu0 %v2541
  %v2587 = vpop.f32.mrf.mxu0
  %v2588 = vadd.f32 0.0, %v2587
  %2589 = vmatmul.f32.gmra.mxu0 %v2544
  %v2590 = vpop.f32.mrf.mxu0
  %v2591 = vadd.f32 0.0, %v2590
  %2592 = vmatmul.f32.gmra.mxu0 %v2547
  %v2593 = vpop.f32.mrf.mxu0
  %v2594 = vadd.f32 0.0, %v2593
  %2595 = vmatmul.f32.gmra.mxu0 %v2550
  %v2596 = vpop.f32.mrf.mxu0
  %v2597 = vadd.f32 0.0, %v2596
  %2598 = vdwg.mxu0
  %v2599 = vadd.f32 %v2186, %v2582
  %v2600 = vadd.f32 %v2187, %v2585
  %v2601 = vadd.f32 %v2188, %v2588
  %v2602 = vadd.f32 %v2189, %v2591
  %v2603 = vadd.f32 %v2190, %v2594
  %v2604 = vadd.f32 %v2191, %v2597
  %s2605 = scalar_lea.vmem %s5, 2
  %v2606 = vld [vmem:[%s2605] sm:$0x1]
  %v2607 = vmul.f32 %v2599, %v2599
  %v2608 = vmul.f32 %v2600, %v2600
  %v2609 = vmul.f32 %v2601, %v2601
  %v2610 = vmul.f32 %v2602, %v2602
  %v2611 = vmul.f32 %v2603, %v2603
  %v2612 = vmul.f32 %v2604, %v2604
  %v2613 = vsel %vm58, %v2607, 0.0
  %2614 = vadd.xlane.f32.xlu0 %v2613
  %v2615 = vpop.xlane.xlu0 %2614
  %v2616 = vsel %vm58, %v2608, 0.0
  %2617 = vadd.xlane.f32.xlu0 %v2616
  %v2618 = vpop.xlane.xlu0 %2617
  %v2619 = vsel %vm58, %v2609, 0.0
  %2620 = vadd.xlane.f32.xlu0 %v2619
  %v2621 = vpop.xlane.xlu0 %2620
  %v2622 = vsel %vm58, %v2610, 0.0
  %2623 = vadd.xlane.f32.xlu0 %v2622
  %v2624 = vpop.xlane.xlu0 %2623
  %v2625 = vsel %vm58, %v2611, 0.0
  %2626 = vadd.xlane.f32.xlu0 %v2625
  %v2627 = vpop.xlane.xlu0 %2626
  %v2628 = vsel %vm58, %v2612, 0.0
  %2629 = vadd.xlane.f32.xlu0 %v2628
  %v2630 = vpop.xlane.xlu0 %2629
  %v2631 = vmul.f32 %v2615, %v83
  %v2632 = vmul.f32 %v2618, %v83
  %v2633 = vmul.f32 %v2621, %v83
  %v2634 = vmul.f32 %v2624, %v83
  %v2635 = vmul.f32 %v2627, %v83
  %v2636 = vmul.f32 %v2630, %v83
  %v2637 = vadd.f32 %v2631, 1e-06
  %v2638 = vadd.f32 %v2632, 1e-06
  %v2639 = vadd.f32 %v2633, 1e-06
  %v2640 = vadd.f32 %v2634, 1e-06
  %v2641 = vadd.f32 %v2635, 1e-06
  %v2642 = vadd.f32 %v2636, 1e-06
  %v2643 = vrsqrt.pop %v2637
  %v2644 = vmul.f32 %v2643, %v2637
  %v2645 = vmul.f32 %v2644, %v2643
  %v2646 = vmul.f32 0.5, %v2645
  %v2647 = vsub.f32 1.5, %v2646
  %v2648 = vmul.f32 %v2643, %v2647
  %vm2649 = vweird.f32 %v2637
  %vm2650 = vweird.f32 %v2643
  %vm2651 = vmor %vm2649, %vm2650
  %v2652 = vsel %vm2651, %v2643, %v2648
  %v2653 = vrsqrt.pop %v2638
  %v2654 = vmul.f32 %v2653, %v2638
  %v2655 = vmul.f32 %v2654, %v2653
  %v2656 = vmul.f32 0.5, %v2655
  %v2657 = vsub.f32 1.5, %v2656
  %v2658 = vmul.f32 %v2653, %v2657
  %vm2659 = vweird.f32 %v2638
  %vm2660 = vweird.f32 %v2653
  %vm2661 = vmor %vm2659, %vm2660
  %v2662 = vsel %vm2661, %v2653, %v2658
  %v2663 = vrsqrt.pop %v2639
  %v2664 = vmul.f32 %v2663, %v2639
  %v2665 = vmul.f32 %v2664, %v2663
  %v2666 = vmul.f32 0.5, %v2665
  %v2667 = vsub.f32 1.5, %v2666
  %v2668 = vmul.f32 %v2663, %v2667
  %vm2669 = vweird.f32 %v2639
  %vm2670 = vweird.f32 %v2663
  %vm2671 = vmor %vm2669, %vm2670
  %v2672 = vsel %vm2671, %v2663, %v2668
  %v2673 = vrsqrt.pop %v2640
  %v2674 = vmul.f32 %v2673, %v2640
  %v2675 = vmul.f32 %v2674, %v2673
  %v2676 = vmul.f32 0.5, %v2675
  %v2677 = vsub.f32 1.5, %v2676
  %v2678 = vmul.f32 %v2673, %v2677
  %vm2679 = vweird.f32 %v2640
  %vm2680 = vweird.f32 %v2673
  %vm2681 = vmor %vm2679, %vm2680
  %v2682 = vsel %vm2681, %v2673, %v2678
  %v2683 = vrsqrt.pop %v2641
  %v2684 = vmul.f32 %v2683, %v2641
  %v2685 = vmul.f32 %v2684, %v2683
  %v2686 = vmul.f32 0.5, %v2685
  %v2687 = vsub.f32 1.5, %v2686
  %v2688 = vmul.f32 %v2683, %v2687
  %vm2689 = vweird.f32 %v2641
  %vm2690 = vweird.f32 %v2683
  %vm2691 = vmor %vm2689, %vm2690
  %v2692 = vsel %vm2691, %v2683, %v2688
  %v2693 = vrsqrt.pop %v2642
  %v2694 = vmul.f32 %v2693, %v2642
  %v2695 = vmul.f32 %v2694, %v2693
  %v2696 = vmul.f32 0.5, %v2695
  %v2697 = vsub.f32 1.5, %v2696
  %v2698 = vmul.f32 %v2693, %v2697
  %vm2699 = vweird.f32 %v2642
  %vm2700 = vweird.f32 %v2693
  %vm2701 = vmor %vm2699, %vm2700
  %v2702 = vsel %vm2701, %v2693, %v2698
  %v2703 = vmul.f32 %v2599, %v2652
  %v2704 = vmul.f32 %v2600, %v2662
  %v2705 = vmul.f32 %v2601, %v2672
  %v2706 = vmul.f32 %v2602, %v2682
  %v2707 = vmul.f32 %v2603, %v2692
  %v2708 = vmul.f32 %v2604, %v2702
  %v2710 = vperm.slane %v2606, 0
  %v2712 = vmul.f32 %v2703, %v2710
  %v2713 = vmul.f32 %v2704, %v2710
  %v2714 = vmul.f32 %v2705, %v2710
  %v2715 = vmul.f32 %v2706, %v2710
  %v2716 = vmul.f32 %v2707, %v2710
  %v2717 = vmul.f32 %v2708, %v2710
  %s2718 = scalar_lea.vmem %s3, 768
  %v2719 = vld [vmem:[%s2718] sm:$0xff]
  %v2720 = vld [vmem:[%s2718 + $0x8] sm:$0xff]
  %v2721 = vld [vmem:[%s2718 + $0x10] sm:$0xff]
  %v2722 = vld [vmem:[%s2718 + $0x18] sm:$0xff]
  %v2724 = vsel %vm58, %v2712, 0
  %v2727 = vsel %vm58, %v2713, 0
  %v2730 = vsel %vm58, %v2714, 0
  %v2733 = vsel %vm58, %v2715, 0
  %v2736 = vsel %vm58, %v2716, 0
  %v2739 = vsel %vm58, %v2717, 0
  %2741 = vmatpush.msra.mxu0 0.0
  %2742 = vmatpush.msra.mxu0 0.0
  %2743 = vmatpush.msra.mxu0 0.0
  %2744 = vmatpush.msra.mxu0 0.0
  %2745 = vmatpush.msra.mxu0 0.0
  %2746 = vmatpush.msra.mxu0 0.0
  %2747 = vmatpush.msra.mxu0 0.0
  %2748 = vmatpush.msra.mxu0 0.0
  %2749 = vmatpush.msra.mxu0 0.0
  %2750 = vmatpush.msra.mxu0 0.0
  %2751 = vmatpush.msra.mxu0 0.0
  %2752 = vmatpush.msra.mxu0 0.0
  %2753 = vmatpush.msra.mxu0 %v2722
  %2754 = vmatpush.msra.mxu0 %v2721
  %2755 = vmatpush.msra.mxu0 %v2720
  %2756 = vmatpush.msra.mxu0 %v2719
  %2757 = vmatmul.f32.gmra.mxu0 %v2724
  %v2758 = vpop.f32.mrf.mxu0
  %v2759 = vadd.f32 0.0, %v2758
  %2760 = vmatmul.f32.gmra.mxu0 %v2727
  %v2761 = vpop.f32.mrf.mxu0
  %v2762 = vadd.f32 0.0, %v2761
  %2763 = vmatmul.f32.gmra.mxu0 %v2730
  %v2764 = vpop.f32.mrf.mxu0
  %v2765 = vadd.f32 0.0, %v2764
  %2766 = vmatmul.f32.gmra.mxu0 %v2733
  %v2767 = vpop.f32.mrf.mxu0
  %v2768 = vadd.f32 0.0, %v2767
  %2769 = vmatmul.f32.gmra.mxu0 %v2736
  %v2770 = vpop.f32.mrf.mxu0
  %v2771 = vadd.f32 0.0, %v2770
  %2772 = vmatmul.f32.gmra.mxu0 %v2739
  %v2773 = vpop.f32.mrf.mxu0
  %v2774 = vadd.f32 0.0, %v2773
  %2775 = vdwg.mxu0
  %s2776 = scalar_lea.vmem %s3, 800
  %v2777 = vld [vmem:[%s2776] sm:$0xff]
  %v2778 = vld [vmem:[%s2776 + $0x8] sm:$0xff]
  %v2779 = vld [vmem:[%s2776 + $0x10] sm:$0xff]
  %v2780 = vld [vmem:[%s2776 + $0x18] sm:$0xff]
  %2781 = vmatpush.msra.mxu0 0.0
  %2782 = vmatpush.msra.mxu0 0.0
  %2783 = vmatpush.msra.mxu0 0.0
  %2784 = vmatpush.msra.mxu0 0.0
  %2785 = vmatpush.msra.mxu0 0.0
  %2786 = vmatpush.msra.mxu0 0.0
  %2787 = vmatpush.msra.mxu0 0.0
  %2788 = vmatpush.msra.mxu0 0.0
  %2789 = vmatpush.msra.mxu0 0.0
  %2790 = vmatpush.msra.mxu0 0.0
  %2791 = vmatpush.msra.mxu0 0.0
  %2792 = vmatpush.msra.mxu0 0.0
  %2793 = vmatpush.msra.mxu0 %v2780
  %2794 = vmatpush.msra.mxu0 %v2779
  %2795 = vmatpush.msra.mxu0 %v2778
  %2796 = vmatpush.msra.mxu0 %v2777
  %2797 = vmatmul.f32.gmra.mxu0 %v2724
  %v2798 = vpop.f32.mrf.mxu0
  %v2799 = vadd.f32 0.0, %v2798
  %2800 = vmatmul.f32.gmra.mxu0 %v2727
  %v2801 = vpop.f32.mrf.mxu0
  %v2802 = vadd.f32 0.0, %v2801
  %2803 = vmatmul.f32.gmra.mxu0 %v2730
  %v2804 = vpop.f32.mrf.mxu0
  %v2805 = vadd.f32 0.0, %v2804
  %2806 = vmatmul.f32.gmra.mxu0 %v2733
  %v2807 = vpop.f32.mrf.mxu0
  %v2808 = vadd.f32 0.0, %v2807
  %2809 = vmatmul.f32.gmra.mxu0 %v2736
  %v2810 = vpop.f32.mrf.mxu0
  %v2811 = vadd.f32 0.0, %v2810
  %2812 = vmatmul.f32.gmra.mxu0 %v2739
  %v2813 = vpop.f32.mrf.mxu0
  %v2814 = vadd.f32 0.0, %v2813
  %2815 = vdwg.mxu0
  %s2816 = scalar_lea.vmem %s3, 832
  %v2817 = vld [vmem:[%s2816] sm:$0xff]
  %v2818 = vld [vmem:[%s2816 + $0x8] sm:$0xff]
  %v2819 = vld [vmem:[%s2816 + $0x10] sm:$0xff]
  %v2820 = vld [vmem:[%s2816 + $0x18] sm:$0xff]
  %2821 = vmatpush.msra.mxu0 0.0
  %2822 = vmatpush.msra.mxu0 0.0
  %2823 = vmatpush.msra.mxu0 0.0
  %2824 = vmatpush.msra.mxu0 0.0
  %2825 = vmatpush.msra.mxu0 0.0
  %2826 = vmatpush.msra.mxu0 0.0
  %2827 = vmatpush.msra.mxu0 0.0
  %2828 = vmatpush.msra.mxu0 0.0
  %2829 = vmatpush.msra.mxu0 0.0
  %2830 = vmatpush.msra.mxu0 0.0
  %2831 = vmatpush.msra.mxu0 0.0
  %2832 = vmatpush.msra.mxu0 0.0
  %2833 = vmatpush.msra.mxu0 %v2820
  %2834 = vmatpush.msra.mxu0 %v2819
  %2835 = vmatpush.msra.mxu0 %v2818
  %2836 = vmatpush.msra.mxu0 %v2817
  %2837 = vmatmul.f32.gmra.mxu0 %v2724
  %v2838 = vpop.f32.mrf.mxu0
  %v2839 = vadd.f32 0.0, %v2838
  %2840 = vmatmul.f32.gmra.mxu0 %v2727
  %v2841 = vpop.f32.mrf.mxu0
  %v2842 = vadd.f32 0.0, %v2841
  %2843 = vmatmul.f32.gmra.mxu0 %v2730
  %v2844 = vpop.f32.mrf.mxu0
  %v2845 = vadd.f32 0.0, %v2844
  %2846 = vmatmul.f32.gmra.mxu0 %v2733
  %v2847 = vpop.f32.mrf.mxu0
  %v2848 = vadd.f32 0.0, %v2847
  %2849 = vmatmul.f32.gmra.mxu0 %v2736
  %v2850 = vpop.f32.mrf.mxu0
  %v2851 = vadd.f32 0.0, %v2850
  %2852 = vmatmul.f32.gmra.mxu0 %v2739
  %v2853 = vpop.f32.mrf.mxu0
  %v2854 = vadd.f32 0.0, %v2853
  %2855 = vdwg.mxu0
  %s2856 = scalar_lea.vmem %s3, 864
  %v2857 = vld [vmem:[%s2856] sm:$0xff]
  %v2858 = vld [vmem:[%s2856 + $0x8] sm:$0xff]
  %v2859 = vld [vmem:[%s2856 + $0x10] sm:$0xff]
  %v2860 = vld [vmem:[%s2856 + $0x18] sm:$0xff]
  %2861 = vmatpush.msra.mxu0 0.0
  %2862 = vmatpush.msra.mxu0 0.0
  %2863 = vmatpush.msra.mxu0 0.0
  %2864 = vmatpush.msra.mxu0 0.0
  %2865 = vmatpush.msra.mxu0 0.0
  %2866 = vmatpush.msra.mxu0 0.0
  %2867 = vmatpush.msra.mxu0 0.0
  %2868 = vmatpush.msra.mxu0 0.0
  %2869 = vmatpush.msra.mxu0 0.0
  %2870 = vmatpush.msra.mxu0 0.0
  %2871 = vmatpush.msra.mxu0 0.0
  %2872 = vmatpush.msra.mxu0 0.0
  %2873 = vmatpush.msra.mxu0 %v2860
  %2874 = vmatpush.msra.mxu0 %v2859
  %2875 = vmatpush.msra.mxu0 %v2858
  %2876 = vmatpush.msra.mxu0 %v2857
  %2877 = vmatmul.f32.gmra.mxu0 %v2724
  %v2878 = vpop.f32.mrf.mxu0
  %v2879 = vadd.f32 0.0, %v2878
  %2880 = vmatmul.f32.gmra.mxu0 %v2727
  %v2881 = vpop.f32.mrf.mxu0
  %v2882 = vadd.f32 0.0, %v2881
  %2883 = vmatmul.f32.gmra.mxu0 %v2730
  %v2884 = vpop.f32.mrf.mxu0
  %v2885 = vadd.f32 0.0, %v2884
  %2886 = vmatmul.f32.gmra.mxu0 %v2733
  %v2887 = vpop.f32.mrf.mxu0
  %v2888 = vadd.f32 0.0, %v2887
  %2889 = vmatmul.f32.gmra.mxu0 %v2736
  %v2890 = vpop.f32.mrf.mxu0
  %v2891 = vadd.f32 0.0, %v2890
  %2892 = vmatmul.f32.gmra.mxu0 %v2739
  %v2893 = vpop.f32.mrf.mxu0
  %v2894 = vadd.f32 0.0, %v2893
  %2895 = vdwg.mxu0
  %s2896 = scalar_lea.vmem %s3, 896
  %v2897 = vld [vmem:[%s2896] sm:$0xff]
  %v2898 = vld [vmem:[%s2896 + $0x8] sm:$0xff]
  %v2899 = vld [vmem:[%s2896 + $0x10] sm:$0xff]
  %v2900 = vld [vmem:[%s2896 + $0x18] sm:$0xff]
  %2901 = vmatpush.msra.mxu0 0.0
  %2902 = vmatpush.msra.mxu0 0.0
  %2903 = vmatpush.msra.mxu0 0.0
  %2904 = vmatpush.msra.mxu0 0.0
  %2905 = vmatpush.msra.mxu0 0.0
  %2906 = vmatpush.msra.mxu0 0.0
  %2907 = vmatpush.msra.mxu0 0.0
  %2908 = vmatpush.msra.mxu0 0.0
  %2909 = vmatpush.msra.mxu0 0.0
  %2910 = vmatpush.msra.mxu0 0.0
  %2911 = vmatpush.msra.mxu0 0.0
  %2912 = vmatpush.msra.mxu0 0.0
  %2913 = vmatpush.msra.mxu0 %v2900
  %2914 = vmatpush.msra.mxu0 %v2899
  %2915 = vmatpush.msra.mxu0 %v2898
  %2916 = vmatpush.msra.mxu0 %v2897
  %2917 = vmatmul.f32.gmra.mxu0 %v2724
  %v2918 = vpop.f32.mrf.mxu0
  %v2919 = vadd.f32 0.0, %v2918
  %2920 = vmatmul.f32.gmra.mxu0 %v2727
  %v2921 = vpop.f32.mrf.mxu0
  %v2922 = vadd.f32 0.0, %v2921
  %2923 = vmatmul.f32.gmra.mxu0 %v2730
  %v2924 = vpop.f32.mrf.mxu0
  %v2925 = vadd.f32 0.0, %v2924
  %2926 = vmatmul.f32.gmra.mxu0 %v2733
  %v2927 = vpop.f32.mrf.mxu0
  %v2928 = vadd.f32 0.0, %v2927
  %2929 = vmatmul.f32.gmra.mxu0 %v2736
  %v2930 = vpop.f32.mrf.mxu0
  %v2931 = vadd.f32 0.0, %v2930
  %2932 = vmatmul.f32.gmra.mxu0 %v2739
  %v2933 = vpop.f32.mrf.mxu0
  %v2934 = vadd.f32 0.0, %v2933
  %2935 = vdwg.mxu0
  %v2936 = vmul.f32 %v2759, %v32
  %v2937 = vmul.f32 %v2762, %v33
  %v2938 = vmul.f32 %v2765, %v34
  %v2939 = vmul.f32 %v2768, %v35
  %v2940 = vmul.f32 %v2771, %v36
  %v2941 = vmul.f32 %v2774, %v37
  %v2942 = vmul.f32 %v2799, %v39
  %v2943 = vmul.f32 %v2802, %v40
  %v2944 = vmul.f32 %v2805, %v41
  %v2945 = vmul.f32 %v2808, %v42
  %v2946 = vmul.f32 %v2811, %v43
  %v2947 = vmul.f32 %v2814, %v44
  %v2948 = vadd.f32 %v2936, %v2942
  %v2949 = vadd.f32 %v2937, %v2943
  %v2950 = vadd.f32 %v2938, %v2944
  %v2951 = vadd.f32 %v2939, %v2945
  %v2952 = vadd.f32 %v2940, %v2946
  %v2953 = vadd.f32 %v2941, %v2947
  %v2954 = vmul.f32 %v2839, %v32
  %v2955 = vmul.f32 %v2842, %v33
  %v2956 = vmul.f32 %v2845, %v34
  %v2957 = vmul.f32 %v2848, %v35
  %v2958 = vmul.f32 %v2851, %v36
  %v2959 = vmul.f32 %v2854, %v37
  %v2960 = vmul.f32 %v2879, %v39
  %v2961 = vmul.f32 %v2882, %v40
  %v2962 = vmul.f32 %v2885, %v41
  %v2963 = vmul.f32 %v2888, %v42
  %v2964 = vmul.f32 %v2891, %v43
  %v2965 = vmul.f32 %v2894, %v44
  %v2966 = vadd.f32 %v2954, %v2960
  %v2967 = vadd.f32 %v2955, %v2961
  %v2968 = vadd.f32 %v2956, %v2962
  %v2969 = vadd.f32 %v2957, %v2963
  %v2970 = vadd.f32 %v2958, %v2964
  %v2971 = vadd.f32 %v2959, %v2965
  %v2973 = vsel %vm424, %v2948, 0
  %v2976 = vsel %vm424, %v2949, 0
  %v2979 = vsel %vm424, %v2950, 0
  %v2982 = vsel %vm424, %v2951, 0
  %v2985 = vsel %vm424, %v2952, 0
  %v2988 = vsel %vm424, %v2953, 0
  %v2991 = vsel %vm424, %v2966, 0
  %v2994 = vsel %vm424, %v2967, 0
  %v2997 = vsel %vm424, %v2968, 0
  %v3000 = vsel %vm424, %v2969, 0
  %v3003 = vsel %vm424, %v2970, 0
  %v3006 = vsel %vm424, %v2971, 0
  %3008 = vmatpush.xpose.msra.mxu0 0.0
  %3009 = vmatpush.xpose.msra.mxu0 0.0
  %3010 = vmatpush.xpose.msra.mxu0 0.0
  %3011 = vmatpush.xpose.msra.mxu0 0.0
  %3012 = vmatpush.xpose.msra.mxu0 0.0
  %3013 = vmatpush.xpose.msra.mxu0 0.0
  %3014 = vmatpush.xpose.msra.mxu0 0.0
  %3015 = vmatpush.xpose.msra.mxu0 0.0
  %3016 = vmatpush.xpose.msra.mxu0 0.0
  %3017 = vmatpush.xpose.msra.mxu0 0.0
  %3018 = vmatpush.xpose.msra.mxu0 %v3006
  %3019 = vmatpush.xpose.msra.mxu0 %v3003
  %3020 = vmatpush.xpose.msra.mxu0 %v3000
  %3021 = vmatpush.xpose.msra.mxu0 %v2997
  %3022 = vmatpush.xpose.msra.mxu0 %v2994
  %3023 = vmatpush.xpose.msra.mxu0 %v2991
  %3024 = vmatmul.f32.gmra.mxu0 %v2973
  %v3025 = vpop.f32.mrf.mxu0
  %v3026 = vadd.f32 %v45, %v3025
  %3027 = vmatmul.f32.gmra.mxu0 %v2976
  %v3028 = vpop.f32.mrf.mxu0
  %v3029 = vadd.f32 %v46, %v3028
  %3030 = vmatmul.f32.gmra.mxu0 %v2979
  %v3031 = vpop.f32.mrf.mxu0
  %v3032 = vadd.f32 %v47, %v3031
  %3033 = vmatmul.f32.gmra.mxu0 %v2982
  %v3034 = vpop.f32.mrf.mxu0
  %v3035 = vadd.f32 %v48, %v3034
  %3036 = vmatmul.f32.gmra.mxu0 %v2985
  %v3037 = vpop.f32.mrf.mxu0
  %v3038 = vadd.f32 %v49, %v3037
  %3039 = vmatmul.f32.gmra.mxu0 %v2988
  %v3040 = vpop.f32.mrf.mxu0
  %v3041 = vadd.f32 %v50, %v3040
  %3042 = vdwg.mxu0
  %v3043 = vsel %vm496, %v3026, -inf
  %3044 = vmax.xlane.f32.xlu0 %v3043
  %v3045 = vpop.xlane.xlu0 %3044
  %v3046 = vsel %vm496, %v3029, -inf
  %3047 = vmax.xlane.f32.xlu0 %v3046
  %v3048 = vpop.xlane.xlu0 %3047
  %v3049 = vsel %vm496, %v3032, -inf
  %3050 = vmax.xlane.f32.xlu0 %v3049
  %v3051 = vpop.xlane.xlu0 %3050
  %v3052 = vsel %vm496, %v3035, -inf
  %3053 = vmax.xlane.f32.xlu0 %v3052
  %v3054 = vpop.xlane.xlu0 %3053
  %v3055 = vsel %vm496, %v3038, -inf
  %3056 = vmax.xlane.f32.xlu0 %v3055
  %v3057 = vpop.xlane.xlu0 %3056
  %v3058 = vsel %vm496, %v3041, -inf
  %3059 = vmax.xlane.f32.xlu0 %v3058
  %v3060 = vpop.xlane.xlu0 %3059
  %v3061 = vsub.f32 %v3026, %v3045
  %v3062 = vsub.f32 %v3029, %v3048
  %v3063 = vsub.f32 %v3032, %v3051
  %v3064 = vsub.f32 %v3035, %v3054
  %v3065 = vsub.f32 %v3038, %v3057
  %v3066 = vsub.f32 %v3041, %v3060
  %v3067 = vmul.f32 %v3061, 1.442695
  %v3068 = vpow.pop %v3067
  %v3069 = vmul.f32 %v3062, 1.442695
  %v3070 = vpow.pop %v3069
  %v3071 = vmul.f32 %v3063, 1.442695
  %v3072 = vpow.pop %v3071
  %v3073 = vmul.f32 %v3064, 1.442695
  %v3074 = vpow.pop %v3073
  %v3075 = vmul.f32 %v3065, 1.442695
  %v3076 = vpow.pop %v3075
  %v3077 = vmul.f32 %v3066, 1.442695
  %v3078 = vpow.pop %v3077
  %v3079 = vsel %vm496, %v3068, 0.0
  %3080 = vadd.xlane.f32.xlu0 %v3079
  %v3081 = vpop.xlane.xlu0 %3080
  %v3082 = vsel %vm496, %v3070, 0.0
  %3083 = vadd.xlane.f32.xlu0 %v3082
  %v3084 = vpop.xlane.xlu0 %3083
  %v3085 = vsel %vm496, %v3072, 0.0
  %3086 = vadd.xlane.f32.xlu0 %v3085
  %v3087 = vpop.xlane.xlu0 %3086
  %v3088 = vsel %vm496, %v3074, 0.0
  %3089 = vadd.xlane.f32.xlu0 %v3088
  %v3090 = vpop.xlane.xlu0 %3089
  %v3091 = vsel %vm496, %v3076, 0.0
  %3092 = vadd.xlane.f32.xlu0 %v3091
  %v3093 = vpop.xlane.xlu0 %3092
  %v3094 = vsel %vm496, %v3078, 0.0
  %3095 = vadd.xlane.f32.xlu0 %v3094
  %v3096 = vpop.xlane.xlu0 %3095
  %v3097 = vrcp.pop %v3081
  %v3098 = vrcp.pop %v3084
  %v3099 = vrcp.pop %v3087
  %v3100 = vrcp.pop %v3090
  %v3101 = vrcp.pop %v3093
  %v3102 = vrcp.pop %v3096
  %v3103 = vmul.f32 %v3068, %v3097
  %v3104 = vmul.f32 %v3070, %v3098
  %v3105 = vmul.f32 %v3072, %v3099
  %v3106 = vmul.f32 %v3074, %v3100
  %v3107 = vmul.f32 %v3076, %v3101
  %v3108 = vmul.f32 %v3078, %v3102
  %v3110 = vsel %vm496, %v3103, 0
  %v3113 = vsel %vm496, %v3104, 0
  %v3116 = vsel %vm496, %v3105, 0
  %v3119 = vsel %vm496, %v3106, 0
  %v3122 = vsel %vm496, %v3107, 0
  %v3125 = vsel %vm496, %v3108, 0
  %3127 = vmatpush.msra.mxu0 0.0
  %3128 = vmatpush.msra.mxu0 0.0
  %3129 = vmatpush.msra.mxu0 0.0
  %3130 = vmatpush.msra.mxu0 0.0
  %3131 = vmatpush.msra.mxu0 0.0
  %3132 = vmatpush.msra.mxu0 0.0
  %3133 = vmatpush.msra.mxu0 0.0
  %3134 = vmatpush.msra.mxu0 0.0
  %3135 = vmatpush.msra.mxu0 0.0
  %3136 = vmatpush.msra.mxu0 0.0
  %3137 = vmatpush.msra.mxu0 %v2934
  %3138 = vmatpush.msra.mxu0 %v2931
  %3139 = vmatpush.msra.mxu0 %v2928
  %3140 = vmatpush.msra.mxu0 %v2925
  %3141 = vmatpush.msra.mxu0 %v2922
  %3142 = vmatpush.msra.mxu0 %v2919
  %3143 = vmatmul.f32.gmra.mxu0 %v3110
  %v3144 = vpop.f32.mrf.mxu0
  %v3145 = vadd.f32 0.0, %v3144
  %3146 = vmatmul.f32.gmra.mxu0 %v3113
  %v3147 = vpop.f32.mrf.mxu0
  %v3148 = vadd.f32 0.0, %v3147
  %3149 = vmatmul.f32.gmra.mxu0 %v3116
  %v3150 = vpop.f32.mrf.mxu0
  %v3151 = vadd.f32 0.0, %v3150
  %3152 = vmatmul.f32.gmra.mxu0 %v3119
  %v3153 = vpop.f32.mrf.mxu0
  %v3154 = vadd.f32 0.0, %v3153
  %3155 = vmatmul.f32.gmra.mxu0 %v3122
  %v3156 = vpop.f32.mrf.mxu0
  %v3157 = vadd.f32 0.0, %v3156
  %3158 = vmatmul.f32.gmra.mxu0 %v3125
  %v3159 = vpop.f32.mrf.mxu0
  %v3160 = vadd.f32 0.0, %v3159
  %3161 = vdwg.mxu0
  %s3162 = scalar_lea.vmem %s3, 928
  %v3163 = vld [vmem:[%s3162] sm:$0xff]
  %v3164 = vld [vmem:[%s3162 + $0x8] sm:$0xff]
  %v3165 = vld [vmem:[%s3162 + $0x10] sm:$0xff]
  %v3166 = vld [vmem:[%s3162 + $0x18] sm:$0xff]
  %s3167 = scalar_lea.vmem %s3, 960
  %v3168 = vld [vmem:[%s3167] sm:$0xff]
  %v3169 = vld [vmem:[%s3167 + $0x8] sm:$0xff]
  %v3170 = vld [vmem:[%s3167 + $0x10] sm:$0xff]
  %v3171 = vld [vmem:[%s3167 + $0x18] sm:$0xff]
  %3172 = vmatpush.msra.mxu0 0.0
  %3173 = vmatpush.msra.mxu0 0.0
  %3174 = vmatpush.msra.mxu0 0.0
  %3175 = vmatpush.msra.mxu0 0.0
  %3176 = vmatpush.msra.mxu0 0.0
  %3177 = vmatpush.msra.mxu0 0.0
  %3178 = vmatpush.msra.mxu0 0.0
  %3179 = vmatpush.msra.mxu0 0.0
  %3180 = vmatpush.msra.mxu0 0.0
  %3181 = vmatpush.msra.mxu0 0.0
  %3182 = vmatpush.msra.mxu0 0.0
  %3183 = vmatpush.msra.mxu0 0.0
  %3184 = vmatpush.msra.mxu0 %v3171
  %3185 = vmatpush.msra.mxu0 %v3170
  %3186 = vmatpush.msra.mxu0 %v3169
  %3187 = vmatpush.msra.mxu0 %v3168
  %3188 = vmatmul.f32.gmra.mxu0 %v2724
  %v3189 = vpop.f32.mrf.mxu0
  %v3190 = vadd.f32 0.0, %v3189
  %3191 = vmatmul.f32.gmra.mxu0 %v2727
  %v3192 = vpop.f32.mrf.mxu0
  %v3193 = vadd.f32 0.0, %v3192
  %3194 = vmatmul.f32.gmra.mxu0 %v2730
  %v3195 = vpop.f32.mrf.mxu0
  %v3196 = vadd.f32 0.0, %v3195
  %3197 = vmatmul.f32.gmra.mxu0 %v2733
  %v3198 = vpop.f32.mrf.mxu0
  %v3199 = vadd.f32 0.0, %v3198
  %3200 = vmatmul.f32.gmra.mxu0 %v2736
  %v3201 = vpop.f32.mrf.mxu0
  %v3202 = vadd.f32 0.0, %v3201
  %3203 = vmatmul.f32.gmra.mxu0 %v2739
  %v3204 = vpop.f32.mrf.mxu0
  %v3205 = vadd.f32 0.0, %v3204
  %3206 = vdwg.mxu0
  %s3207 = scalar_lea.vmem %s3, 992
  %v3208 = vld [vmem:[%s3207] sm:$0xff]
  %v3209 = vld [vmem:[%s3207 + $0x8] sm:$0xff]
  %v3210 = vld [vmem:[%s3207 + $0x10] sm:$0xff]
  %v3211 = vld [vmem:[%s3207 + $0x18] sm:$0xff]
  %3212 = vmatpush.msra.mxu0 0.0
  %3213 = vmatpush.msra.mxu0 0.0
  %3214 = vmatpush.msra.mxu0 0.0
  %3215 = vmatpush.msra.mxu0 0.0
  %3216 = vmatpush.msra.mxu0 0.0
  %3217 = vmatpush.msra.mxu0 0.0
  %3218 = vmatpush.msra.mxu0 0.0
  %3219 = vmatpush.msra.mxu0 0.0
  %3220 = vmatpush.msra.mxu0 0.0
  %3221 = vmatpush.msra.mxu0 0.0
  %3222 = vmatpush.msra.mxu0 0.0
  %3223 = vmatpush.msra.mxu0 0.0
  %3224 = vmatpush.msra.mxu0 %v3211
  %3225 = vmatpush.msra.mxu0 %v3210
  %3226 = vmatpush.msra.mxu0 %v3209
  %3227 = vmatpush.msra.mxu0 %v3208
  %3228 = vmatmul.f32.gmra.mxu0 %v2724
  %v3229 = vpop.f32.mrf.mxu0
  %v3230 = vadd.f32 0.0, %v3229
  %3231 = vmatmul.f32.gmra.mxu0 %v2727
  %v3232 = vpop.f32.mrf.mxu0
  %v3233 = vadd.f32 0.0, %v3232
  %3234 = vmatmul.f32.gmra.mxu0 %v2730
  %v3235 = vpop.f32.mrf.mxu0
  %v3236 = vadd.f32 0.0, %v3235
  %3237 = vmatmul.f32.gmra.mxu0 %v2733
  %v3238 = vpop.f32.mrf.mxu0
  %v3239 = vadd.f32 0.0, %v3238
  %3240 = vmatmul.f32.gmra.mxu0 %v2736
  %v3241 = vpop.f32.mrf.mxu0
  %v3242 = vadd.f32 0.0, %v3241
  %3243 = vmatmul.f32.gmra.mxu0 %v2739
  %v3244 = vpop.f32.mrf.mxu0
  %v3245 = vadd.f32 0.0, %v3244
  %3246 = vdwg.mxu0
  %s3247 = scalar_lea.vmem %s3, 1024
  %v3248 = vld [vmem:[%s3247] sm:$0xff]
  %v3249 = vld [vmem:[%s3247 + $0x8] sm:$0xff]
  %v3250 = vld [vmem:[%s3247 + $0x10] sm:$0xff]
  %v3251 = vld [vmem:[%s3247 + $0x18] sm:$0xff]
  %3252 = vmatpush.msra.mxu0 0.0
  %3253 = vmatpush.msra.mxu0 0.0
  %3254 = vmatpush.msra.mxu0 0.0
  %3255 = vmatpush.msra.mxu0 0.0
  %3256 = vmatpush.msra.mxu0 0.0
  %3257 = vmatpush.msra.mxu0 0.0
  %3258 = vmatpush.msra.mxu0 0.0
  %3259 = vmatpush.msra.mxu0 0.0
  %3260 = vmatpush.msra.mxu0 0.0
  %3261 = vmatpush.msra.mxu0 0.0
  %3262 = vmatpush.msra.mxu0 0.0
  %3263 = vmatpush.msra.mxu0 0.0
  %3264 = vmatpush.msra.mxu0 %v3251
  %3265 = vmatpush.msra.mxu0 %v3250
  %3266 = vmatpush.msra.mxu0 %v3249
  %3267 = vmatpush.msra.mxu0 %v3248
  %3268 = vmatmul.f32.gmra.mxu0 %v2724
  %v3269 = vpop.f32.mrf.mxu0
  %v3270 = vadd.f32 0.0, %v3269
  %3271 = vmatmul.f32.gmra.mxu0 %v2727
  %v3272 = vpop.f32.mrf.mxu0
  %v3273 = vadd.f32 0.0, %v3272
  %3274 = vmatmul.f32.gmra.mxu0 %v2730
  %v3275 = vpop.f32.mrf.mxu0
  %v3276 = vadd.f32 0.0, %v3275
  %3277 = vmatmul.f32.gmra.mxu0 %v2733
  %v3278 = vpop.f32.mrf.mxu0
  %v3279 = vadd.f32 0.0, %v3278
  %3280 = vmatmul.f32.gmra.mxu0 %v2736
  %v3281 = vpop.f32.mrf.mxu0
  %v3282 = vadd.f32 0.0, %v3281
  %3283 = vmatmul.f32.gmra.mxu0 %v2739
  %v3284 = vpop.f32.mrf.mxu0
  %v3285 = vadd.f32 0.0, %v3284
  %3286 = vdwg.mxu0
  %s3287 = scalar_lea.vmem %s3, 1056
  %v3288 = vld [vmem:[%s3287] sm:$0xff]
  %v3289 = vld [vmem:[%s3287 + $0x8] sm:$0xff]
  %v3290 = vld [vmem:[%s3287 + $0x10] sm:$0xff]
  %v3291 = vld [vmem:[%s3287 + $0x18] sm:$0xff]
  %3292 = vmatpush.msra.mxu0 0.0
  %3293 = vmatpush.msra.mxu0 0.0
  %3294 = vmatpush.msra.mxu0 0.0
  %3295 = vmatpush.msra.mxu0 0.0
  %3296 = vmatpush.msra.mxu0 0.0
  %3297 = vmatpush.msra.mxu0 0.0
  %3298 = vmatpush.msra.mxu0 0.0
  %3299 = vmatpush.msra.mxu0 0.0
  %3300 = vmatpush.msra.mxu0 0.0
  %3301 = vmatpush.msra.mxu0 0.0
  %3302 = vmatpush.msra.mxu0 0.0
  %3303 = vmatpush.msra.mxu0 0.0
  %3304 = vmatpush.msra.mxu0 %v3291
  %3305 = vmatpush.msra.mxu0 %v3290
  %3306 = vmatpush.msra.mxu0 %v3289
  %3307 = vmatpush.msra.mxu0 %v3288
  %3308 = vmatmul.f32.gmra.mxu0 %v2724
  %v3309 = vpop.f32.mrf.mxu0
  %v3310 = vadd.f32 0.0, %v3309
  %3311 = vmatmul.f32.gmra.mxu0 %v2727
  %v3312 = vpop.f32.mrf.mxu0
  %v3313 = vadd.f32 0.0, %v3312
  %3314 = vmatmul.f32.gmra.mxu0 %v2730
  %v3315 = vpop.f32.mrf.mxu0
  %v3316 = vadd.f32 0.0, %v3315
  %3317 = vmatmul.f32.gmra.mxu0 %v2733
  %v3318 = vpop.f32.mrf.mxu0
  %v3319 = vadd.f32 0.0, %v3318
  %3320 = vmatmul.f32.gmra.mxu0 %v2736
  %v3321 = vpop.f32.mrf.mxu0
  %v3322 = vadd.f32 0.0, %v3321
  %3323 = vmatmul.f32.gmra.mxu0 %v2739
  %v3324 = vpop.f32.mrf.mxu0
  %v3325 = vadd.f32 0.0, %v3324
  %3326 = vdwg.mxu0
  %s3327 = scalar_lea.vmem %s3, 1088
  %v3328 = vld [vmem:[%s3327] sm:$0xff]
  %v3329 = vld [vmem:[%s3327 + $0x8] sm:$0xff]
  %v3330 = vld [vmem:[%s3327 + $0x10] sm:$0xff]
  %v3331 = vld [vmem:[%s3327 + $0x18] sm:$0xff]
  %3332 = vmatpush.msra.mxu0 0.0
  %3333 = vmatpush.msra.mxu0 0.0
  %3334 = vmatpush.msra.mxu0 0.0
  %3335 = vmatpush.msra.mxu0 0.0
  %3336 = vmatpush.msra.mxu0 0.0
  %3337 = vmatpush.msra.mxu0 0.0
  %3338 = vmatpush.msra.mxu0 0.0
  %3339 = vmatpush.msra.mxu0 0.0
  %3340 = vmatpush.msra.mxu0 0.0
  %3341 = vmatpush.msra.mxu0 0.0
  %3342 = vmatpush.msra.mxu0 0.0
  %3343 = vmatpush.msra.mxu0 0.0
  %3344 = vmatpush.msra.mxu0 %v3331
  %3345 = vmatpush.msra.mxu0 %v3330
  %3346 = vmatpush.msra.mxu0 %v3329
  %3347 = vmatpush.msra.mxu0 %v3328
  %3348 = vmatmul.f32.gmra.mxu0 %v2724
  %v3349 = vpop.f32.mrf.mxu0
  %v3350 = vadd.f32 0.0, %v3349
  %3351 = vmatmul.f32.gmra.mxu0 %v2727
  %v3352 = vpop.f32.mrf.mxu0
  %v3353 = vadd.f32 0.0, %v3352
  %3354 = vmatmul.f32.gmra.mxu0 %v2730
  %v3355 = vpop.f32.mrf.mxu0
  %v3356 = vadd.f32 0.0, %v3355
  %3357 = vmatmul.f32.gmra.mxu0 %v2733
  %v3358 = vpop.f32.mrf.mxu0
  %v3359 = vadd.f32 0.0, %v3358
  %3360 = vmatmul.f32.gmra.mxu0 %v2736
  %v3361 = vpop.f32.mrf.mxu0
  %v3362 = vadd.f32 0.0, %v3361
  %3363 = vmatmul.f32.gmra.mxu0 %v2739
  %v3364 = vpop.f32.mrf.mxu0
  %v3365 = vadd.f32 0.0, %v3364
  %3366 = vdwg.mxu0
  %v3367 = vmul.f32 %v3190, %v32
  %v3368 = vmul.f32 %v3193, %v33
  %v3369 = vmul.f32 %v3196, %v34
  %v3370 = vmul.f32 %v3199, %v35
  %v3371 = vmul.f32 %v3202, %v36
  %v3372 = vmul.f32 %v3205, %v37
  %v3373 = vmul.f32 %v3230, %v39
  %v3374 = vmul.f32 %v3233, %v40
  %v3375 = vmul.f32 %v3236, %v41
  %v3376 = vmul.f32 %v3239, %v42
  %v3377 = vmul.f32 %v3242, %v43
  %v3378 = vmul.f32 %v3245, %v44
  %v3379 = vadd.f32 %v3367, %v3373
  %v3380 = vadd.f32 %v3368, %v3374
  %v3381 = vadd.f32 %v3369, %v3375
  %v3382 = vadd.f32 %v3370, %v3376
  %v3383 = vadd.f32 %v3371, %v3377
  %v3384 = vadd.f32 %v3372, %v3378
  %v3385 = vmul.f32 %v3270, %v32
  %v3386 = vmul.f32 %v3273, %v33
  %v3387 = vmul.f32 %v3276, %v34
  %v3388 = vmul.f32 %v3279, %v35
  %v3389 = vmul.f32 %v3282, %v36
  %v3390 = vmul.f32 %v3285, %v37
  %v3391 = vmul.f32 %v3310, %v39
  %v3392 = vmul.f32 %v3313, %v40
  %v3393 = vmul.f32 %v3316, %v41
  %v3394 = vmul.f32 %v3319, %v42
  %v3395 = vmul.f32 %v3322, %v43
  %v3396 = vmul.f32 %v3325, %v44
  %v3397 = vadd.f32 %v3385, %v3391
  %v3398 = vadd.f32 %v3386, %v3392
  %v3399 = vadd.f32 %v3387, %v3393
  %v3400 = vadd.f32 %v3388, %v3394
  %v3401 = vadd.f32 %v3389, %v3395
  %v3402 = vadd.f32 %v3390, %v3396
  %v3404 = vsel %vm424, %v3379, 0
  %v3407 = vsel %vm424, %v3380, 0
  %v3410 = vsel %vm424, %v3381, 0
  %v3413 = vsel %vm424, %v3382, 0
  %v3416 = vsel %vm424, %v3383, 0
  %v3419 = vsel %vm424, %v3384, 0
  %v3422 = vsel %vm424, %v3397, 0
  %v3425 = vsel %vm424, %v3398, 0
  %v3428 = vsel %vm424, %v3399, 0
  %v3431 = vsel %vm424, %v3400, 0
  %v3434 = vsel %vm424, %v3401, 0
  %v3437 = vsel %vm424, %v3402, 0
  %3439 = vmatpush.xpose.msra.mxu0 0.0
  %3440 = vmatpush.xpose.msra.mxu0 0.0
  %3441 = vmatpush.xpose.msra.mxu0 0.0
  %3442 = vmatpush.xpose.msra.mxu0 0.0
  %3443 = vmatpush.xpose.msra.mxu0 0.0
  %3444 = vmatpush.xpose.msra.mxu0 0.0
  %3445 = vmatpush.xpose.msra.mxu0 0.0
  %3446 = vmatpush.xpose.msra.mxu0 0.0
  %3447 = vmatpush.xpose.msra.mxu0 0.0
  %3448 = vmatpush.xpose.msra.mxu0 0.0
  %3449 = vmatpush.xpose.msra.mxu0 %v3437
  %3450 = vmatpush.xpose.msra.mxu0 %v3434
  %3451 = vmatpush.xpose.msra.mxu0 %v3431
  %3452 = vmatpush.xpose.msra.mxu0 %v3428
  %3453 = vmatpush.xpose.msra.mxu0 %v3425
  %3454 = vmatpush.xpose.msra.mxu0 %v3422
  %3455 = vmatmul.f32.gmra.mxu0 %v3404
  %v3456 = vpop.f32.mrf.mxu0
  %v3457 = vadd.f32 %v45, %v3456
  %3458 = vmatmul.f32.gmra.mxu0 %v3407
  %v3459 = vpop.f32.mrf.mxu0
  %v3460 = vadd.f32 %v46, %v3459
  %3461 = vmatmul.f32.gmra.mxu0 %v3410
  %v3462 = vpop.f32.mrf.mxu0
  %v3463 = vadd.f32 %v47, %v3462
  %3464 = vmatmul.f32.gmra.mxu0 %v3413
  %v3465 = vpop.f32.mrf.mxu0
  %v3466 = vadd.f32 %v48, %v3465
  %3467 = vmatmul.f32.gmra.mxu0 %v3416
  %v3468 = vpop.f32.mrf.mxu0
  %v3469 = vadd.f32 %v49, %v3468
  %3470 = vmatmul.f32.gmra.mxu0 %v3419
  %v3471 = vpop.f32.mrf.mxu0
  %v3472 = vadd.f32 %v50, %v3471
  %3473 = vdwg.mxu0
  %v3474 = vsel %vm496, %v3457, -inf
  %3475 = vmax.xlane.f32.xlu0 %v3474
  %v3476 = vpop.xlane.xlu0 %3475
  %v3477 = vsel %vm496, %v3460, -inf
  %3478 = vmax.xlane.f32.xlu0 %v3477
  %v3479 = vpop.xlane.xlu0 %3478
  %v3480 = vsel %vm496, %v3463, -inf
  %3481 = vmax.xlane.f32.xlu0 %v3480
  %v3482 = vpop.xlane.xlu0 %3481
  %v3483 = vsel %vm496, %v3466, -inf
  %3484 = vmax.xlane.f32.xlu0 %v3483
  %v3485 = vpop.xlane.xlu0 %3484
  %v3486 = vsel %vm496, %v3469, -inf
  %3487 = vmax.xlane.f32.xlu0 %v3486
  %v3488 = vpop.xlane.xlu0 %3487
  %v3489 = vsel %vm496, %v3472, -inf
  %3490 = vmax.xlane.f32.xlu0 %v3489
  %v3491 = vpop.xlane.xlu0 %3490
  %v3492 = vsub.f32 %v3457, %v3476
  %v3493 = vsub.f32 %v3460, %v3479
  %v3494 = vsub.f32 %v3463, %v3482
  %v3495 = vsub.f32 %v3466, %v3485
  %v3496 = vsub.f32 %v3469, %v3488
  %v3497 = vsub.f32 %v3472, %v3491
  %v3498 = vmul.f32 %v3492, 1.442695
  %v3499 = vpow.pop %v3498
  %v3500 = vmul.f32 %v3493, 1.442695
  %v3501 = vpow.pop %v3500
  %v3502 = vmul.f32 %v3494, 1.442695
  %v3503 = vpow.pop %v3502
  %v3504 = vmul.f32 %v3495, 1.442695
  %v3505 = vpow.pop %v3504
  %v3506 = vmul.f32 %v3496, 1.442695
  %v3507 = vpow.pop %v3506
  %v3508 = vmul.f32 %v3497, 1.442695
  %v3509 = vpow.pop %v3508
  %v3510 = vsel %vm496, %v3499, 0.0
  %3511 = vadd.xlane.f32.xlu0 %v3510
  %v3512 = vpop.xlane.xlu0 %3511
  %v3513 = vsel %vm496, %v3501, 0.0
  %3514 = vadd.xlane.f32.xlu0 %v3513
  %v3515 = vpop.xlane.xlu0 %3514
  %v3516 = vsel %vm496, %v3503, 0.0
  %3517 = vadd.xlane.f32.xlu0 %v3516
  %v3518 = vpop.xlane.xlu0 %3517
  %v3519 = vsel %vm496, %v3505, 0.0
  %3520 = vadd.xlane.f32.xlu0 %v3519
  %v3521 = vpop.xlane.xlu0 %3520
  %v3522 = vsel %vm496, %v3507, 0.0
  %3523 = vadd.xlane.f32.xlu0 %v3522
  %v3524 = vpop.xlane.xlu0 %3523
  %v3525 = vsel %vm496, %v3509, 0.0
  %3526 = vadd.xlane.f32.xlu0 %v3525
  %v3527 = vpop.xlane.xlu0 %3526
  %v3528 = vrcp.pop %v3512
  %v3529 = vrcp.pop %v3515
  %v3530 = vrcp.pop %v3518
  %v3531 = vrcp.pop %v3521
  %v3532 = vrcp.pop %v3524
  %v3533 = vrcp.pop %v3527
  %v3534 = vmul.f32 %v3499, %v3528
  %v3535 = vmul.f32 %v3501, %v3529
  %v3536 = vmul.f32 %v3503, %v3530
  %v3537 = vmul.f32 %v3505, %v3531
  %v3538 = vmul.f32 %v3507, %v3532
  %v3539 = vmul.f32 %v3509, %v3533
  %v3541 = vsel %vm496, %v3534, 0
  %v3544 = vsel %vm496, %v3535, 0
  %v3547 = vsel %vm496, %v3536, 0
  %v3550 = vsel %vm496, %v3537, 0
  %v3553 = vsel %vm496, %v3538, 0
  %v3556 = vsel %vm496, %v3539, 0
  %3558 = vmatpush.msra.mxu0 0.0
  %3559 = vmatpush.msra.mxu0 0.0
  %3560 = vmatpush.msra.mxu0 0.0
  %3561 = vmatpush.msra.mxu0 0.0
  %3562 = vmatpush.msra.mxu0 0.0
  %3563 = vmatpush.msra.mxu0 0.0
  %3564 = vmatpush.msra.mxu0 0.0
  %3565 = vmatpush.msra.mxu0 0.0
  %3566 = vmatpush.msra.mxu0 0.0
  %3567 = vmatpush.msra.mxu0 0.0
  %3568 = vmatpush.msra.mxu0 %v3365
  %3569 = vmatpush.msra.mxu0 %v3362
  %3570 = vmatpush.msra.mxu0 %v3359
  %3571 = vmatpush.msra.mxu0 %v3356
  %3572 = vmatpush.msra.mxu0 %v3353
  %3573 = vmatpush.msra.mxu0 %v3350
  %3574 = vmatmul.f32.gmra.mxu0 %v3541
  %v3575 = vpop.f32.mrf.mxu0
  %v3576 = vadd.f32 0.0, %v3575
  %3577 = vmatmul.f32.gmra.mxu0 %v3544
  %v3578 = vpop.f32.mrf.mxu0
  %v3579 = vadd.f32 0.0, %v3578
  %3580 = vmatmul.f32.gmra.mxu0 %v3547
  %v3581 = vpop.f32.mrf.mxu0
  %v3582 = vadd.f32 0.0, %v3581
  %3583 = vmatmul.f32.gmra.mxu0 %v3550
  %v3584 = vpop.f32.mrf.mxu0
  %v3585 = vadd.f32 0.0, %v3584
  %3586 = vmatmul.f32.gmra.mxu0 %v3553
  %v3587 = vpop.f32.mrf.mxu0
  %v3588 = vadd.f32 0.0, %v3587
  %3589 = vmatmul.f32.gmra.mxu0 %v3556
  %v3590 = vpop.f32.mrf.mxu0
  %v3591 = vadd.f32 0.0, %v3590
  %3592 = vdwg.mxu0
  %s3593 = scalar_lea.vmem %s3, 1120
  %v3594 = vld [vmem:[%s3593] sm:$0xff]
  %v3595 = vld [vmem:[%s3593 + $0x8] sm:$0xff]
  %v3596 = vld [vmem:[%s3593 + $0x10] sm:$0xff]
  %v3597 = vld [vmem:[%s3593 + $0x18] sm:$0xff]
  %v3599 = vsel %vm424, %v3576, 0
  %v3602 = vsel %vm424, %v3579, 0
  %v3605 = vsel %vm424, %v3582, 0
  %v3608 = vsel %vm424, %v3585, 0
  %v3611 = vsel %vm424, %v3588, 0
  %v3614 = vsel %vm424, %v3591, 0
  %v3617 = vsel %vm424, %v3594, 0
  %v3620 = vsel %vm424, %v3595, 0
  %v3623 = vsel %vm424, %v3596, 0
  %v3626 = vsel %vm424, %v3597, 0
  %3628 = vmatpush.xpose.msra.mxu0 0.0
  %3629 = vmatpush.xpose.msra.mxu0 0.0
  %3630 = vmatpush.xpose.msra.mxu0 0.0
  %3631 = vmatpush.xpose.msra.mxu0 0.0
  %3632 = vmatpush.xpose.msra.mxu0 0.0
  %3633 = vmatpush.xpose.msra.mxu0 0.0
  %3634 = vmatpush.xpose.msra.mxu0 0.0
  %3635 = vmatpush.xpose.msra.mxu0 0.0
  %3636 = vmatpush.xpose.msra.mxu0 0.0
  %3637 = vmatpush.xpose.msra.mxu0 0.0
  %3638 = vmatpush.xpose.msra.mxu0 0.0
  %3639 = vmatpush.xpose.msra.mxu0 0.0
  %3640 = vmatpush.xpose.msra.mxu0 %v3626
  %3641 = vmatpush.xpose.msra.mxu0 %v3623
  %3642 = vmatpush.xpose.msra.mxu0 %v3620
  %3643 = vmatpush.xpose.msra.mxu0 %v3617
  %3644 = vmatmul.f32.gmra.mxu0 %v3599
  %v3645 = vpop.f32.mrf.mxu0
  %v3646 = vadd.f32 0.0, %v3645
  %3647 = vmatmul.f32.gmra.mxu0 %v3602
  %v3648 = vpop.f32.mrf.mxu0
  %v3649 = vadd.f32 0.0, %v3648
  %3650 = vmatmul.f32.gmra.mxu0 %v3605
  %v3651 = vpop.f32.mrf.mxu0
  %v3652 = vadd.f32 0.0, %v3651
  %3653 = vmatmul.f32.gmra.mxu0 %v3608
  %v3654 = vpop.f32.mrf.mxu0
  %v3655 = vadd.f32 0.0, %v3654
  %3656 = vmatmul.f32.gmra.mxu0 %v3611
  %v3657 = vpop.f32.mrf.mxu0
  %v3658 = vadd.f32 0.0, %v3657
  %3659 = vmatmul.f32.gmra.mxu0 %v3614
  %v3660 = vpop.f32.mrf.mxu0
  %v3661 = vadd.f32 0.0, %v3660
  %3662 = vdwg.mxu0
  %v3664 = vsel %vm424, %v3145, 0
  %v3667 = vsel %vm424, %v3148, 0
  %v3670 = vsel %vm424, %v3151, 0
  %v3673 = vsel %vm424, %v3154, 0
  %v3676 = vsel %vm424, %v3157, 0
  %v3679 = vsel %vm424, %v3160, 0
  %v3682 = vsel %vm424, %v3163, 0
  %v3685 = vsel %vm424, %v3164, 0
  %v3688 = vsel %vm424, %v3165, 0
  %v3691 = vsel %vm424, %v3166, 0
  %3693 = vmatpush.xpose.msra.mxu0 0.0
  %3694 = vmatpush.xpose.msra.mxu0 0.0
  %3695 = vmatpush.xpose.msra.mxu0 0.0
  %3696 = vmatpush.xpose.msra.mxu0 0.0
  %3697 = vmatpush.xpose.msra.mxu0 0.0
  %3698 = vmatpush.xpose.msra.mxu0 0.0
  %3699 = vmatpush.xpose.msra.mxu0 0.0
  %3700 = vmatpush.xpose.msra.mxu0 0.0
  %3701 = vmatpush.xpose.msra.mxu0 0.0
  %3702 = vmatpush.xpose.msra.mxu0 0.0
  %3703 = vmatpush.xpose.msra.mxu0 0.0
  %3704 = vmatpush.xpose.msra.mxu0 0.0
  %3705 = vmatpush.xpose.msra.mxu0 %v3691
  %3706 = vmatpush.xpose.msra.mxu0 %v3688
  %3707 = vmatpush.xpose.msra.mxu0 %v3685
  %3708 = vmatpush.xpose.msra.mxu0 %v3682
  %3709 = vmatmul.f32.gmra.mxu0 %v3664
  %v3710 = vpop.f32.mrf.mxu0
  %v3711 = vadd.f32 %v3646, %v3710
  %3712 = vmatmul.f32.gmra.mxu0 %v3667
  %v3713 = vpop.f32.mrf.mxu0
  %v3714 = vadd.f32 %v3649, %v3713
  %3715 = vmatmul.f32.gmra.mxu0 %v3670
  %v3716 = vpop.f32.mrf.mxu0
  %v3717 = vadd.f32 %v3652, %v3716
  %3718 = vmatmul.f32.gmra.mxu0 %v3673
  %v3719 = vpop.f32.mrf.mxu0
  %v3720 = vadd.f32 %v3655, %v3719
  %3721 = vmatmul.f32.gmra.mxu0 %v3676
  %v3722 = vpop.f32.mrf.mxu0
  %v3723 = vadd.f32 %v3658, %v3722
  %3724 = vmatmul.f32.gmra.mxu0 %v3679
  %v3725 = vpop.f32.mrf.mxu0
  %v3726 = vadd.f32 %v3661, %v3725
  %3727 = vdwg.mxu0
  %s3728 = scalar_lea.vmem %s3, 1152
  %v3729 = vld [vmem:[%s3728] sm:$0xff]
  %v3730 = vld [vmem:[%s3728 + $0x8] sm:$0xff]
  %v3731 = vld [vmem:[%s3728 + $0x10] sm:$0xff]
  %v3732 = vld [vmem:[%s3728 + $0x18] sm:$0xff]
  %3733 = vmatpush.msra.mxu0 0.0
  %3734 = vmatpush.msra.mxu0 0.0
  %3735 = vmatpush.msra.mxu0 0.0
  %3736 = vmatpush.msra.mxu0 0.0
  %3737 = vmatpush.msra.mxu0 0.0
  %3738 = vmatpush.msra.mxu0 0.0
  %3739 = vmatpush.msra.mxu0 0.0
  %3740 = vmatpush.msra.mxu0 0.0
  %3741 = vmatpush.msra.mxu0 0.0
  %3742 = vmatpush.msra.mxu0 0.0
  %3743 = vmatpush.msra.mxu0 0.0
  %3744 = vmatpush.msra.mxu0 0.0
  %3745 = vmatpush.msra.mxu0 %v3732
  %3746 = vmatpush.msra.mxu0 %v3731
  %3747 = vmatpush.msra.mxu0 %v3730
  %3748 = vmatpush.msra.mxu0 %v3729
  %3749 = vmatmul.f32.gmra.mxu0 %v2724
  %v3750 = vpop.f32.mrf.mxu0
  %v3751 = vadd.f32 0.0, %v3750
  %3752 = vmatmul.f32.gmra.mxu0 %v2727
  %v3753 = vpop.f32.mrf.mxu0
  %v3754 = vadd.f32 0.0, %v3753
  %3755 = vmatmul.f32.gmra.mxu0 %v2730
  %v3756 = vpop.f32.mrf.mxu0
  %v3757 = vadd.f32 0.0, %v3756
  %3758 = vmatmul.f32.gmra.mxu0 %v2733
  %v3759 = vpop.f32.mrf.mxu0
  %v3760 = vadd.f32 0.0, %v3759
  %3761 = vmatmul.f32.gmra.mxu0 %v2736
  %v3762 = vpop.f32.mrf.mxu0
  %v3763 = vadd.f32 0.0, %v3762
  %3764 = vmatmul.f32.gmra.mxu0 %v2739
  %v3765 = vpop.f32.mrf.mxu0
  %v3766 = vadd.f32 0.0, %v3765
  %3767 = vdwg.mxu0
  %s3768 = scalar_lea.vmem %s3, 1184
  %v3769 = vld [vmem:[%s3768] sm:$0xff]
  %v3770 = vld [vmem:[%s3768 + $0x8] sm:$0xff]
  %v3771 = vld [vmem:[%s3768 + $0x10] sm:$0xff]
  %v3772 = vld [vmem:[%s3768 + $0x18] sm:$0xff]
  %3773 = vmatpush.msra.mxu0 0.0
  %3774 = vmatpush.msra.mxu0 0.0
  %3775 = vmatpush.msra.mxu0 0.0
  %3776 = vmatpush.msra.mxu0 0.0
  %3777 = vmatpush.msra.mxu0 0.0
  %3778 = vmatpush.msra.mxu0 0.0
  %3779 = vmatpush.msra.mxu0 0.0
  %3780 = vmatpush.msra.mxu0 0.0
  %3781 = vmatpush.msra.mxu0 0.0
  %3782 = vmatpush.msra.mxu0 0.0
  %3783 = vmatpush.msra.mxu0 0.0
  %3784 = vmatpush.msra.mxu0 0.0
  %3785 = vmatpush.msra.mxu0 %v3772
  %3786 = vmatpush.msra.mxu0 %v3771
  %3787 = vmatpush.msra.mxu0 %v3770
  %3788 = vmatpush.msra.mxu0 %v3769
  %3789 = vmatmul.f32.gmra.mxu0 %v2724
  %v3790 = vpop.f32.mrf.mxu0
  %v3791 = vadd.f32 0.0, %v3790
  %3792 = vmatmul.f32.gmra.mxu0 %v2727
  %v3793 = vpop.f32.mrf.mxu0
  %v3794 = vadd.f32 0.0, %v3793
  %3795 = vmatmul.f32.gmra.mxu0 %v2730
  %v3796 = vpop.f32.mrf.mxu0
  %v3797 = vadd.f32 0.0, %v3796
  %3798 = vmatmul.f32.gmra.mxu0 %v2733
  %v3799 = vpop.f32.mrf.mxu0
  %v3800 = vadd.f32 0.0, %v3799
  %3801 = vmatmul.f32.gmra.mxu0 %v2736
  %v3802 = vpop.f32.mrf.mxu0
  %v3803 = vadd.f32 0.0, %v3802
  %3804 = vmatmul.f32.gmra.mxu0 %v2739
  %v3805 = vpop.f32.mrf.mxu0
  %v3806 = vadd.f32 0.0, %v3805
  %3807 = vdwg.mxu0
  %s3808 = scalar_lea.vmem %s3, 1216
  %v3809 = vld [vmem:[%s3808] sm:$0xff]
  %v3810 = vld [vmem:[%s3808 + $0x8] sm:$0xff]
  %v3811 = vld [vmem:[%s3808 + $0x10] sm:$0xff]
  %v3812 = vld [vmem:[%s3808 + $0x18] sm:$0xff]
  %3813 = vmatpush.msra.mxu0 0.0
  %3814 = vmatpush.msra.mxu0 0.0
  %3815 = vmatpush.msra.mxu0 0.0
  %3816 = vmatpush.msra.mxu0 0.0
  %3817 = vmatpush.msra.mxu0 0.0
  %3818 = vmatpush.msra.mxu0 0.0
  %3819 = vmatpush.msra.mxu0 0.0
  %3820 = vmatpush.msra.mxu0 0.0
  %3821 = vmatpush.msra.mxu0 0.0
  %3822 = vmatpush.msra.mxu0 0.0
  %3823 = vmatpush.msra.mxu0 0.0
  %3824 = vmatpush.msra.mxu0 0.0
  %3825 = vmatpush.msra.mxu0 %v3812
  %3826 = vmatpush.msra.mxu0 %v3811
  %3827 = vmatpush.msra.mxu0 %v3810
  %3828 = vmatpush.msra.mxu0 %v3809
  %3829 = vmatmul.f32.gmra.mxu0 %v2724
  %v3830 = vpop.f32.mrf.mxu0
  %v3831 = vadd.f32 0.0, %v3830
  %3832 = vmatmul.f32.gmra.mxu0 %v2727
  %v3833 = vpop.f32.mrf.mxu0
  %v3834 = vadd.f32 0.0, %v3833
  %3835 = vmatmul.f32.gmra.mxu0 %v2730
  %v3836 = vpop.f32.mrf.mxu0
  %v3837 = vadd.f32 0.0, %v3836
  %3838 = vmatmul.f32.gmra.mxu0 %v2733
  %v3839 = vpop.f32.mrf.mxu0
  %v3840 = vadd.f32 0.0, %v3839
  %3841 = vmatmul.f32.gmra.mxu0 %v2736
  %v3842 = vpop.f32.mrf.mxu0
  %v3843 = vadd.f32 0.0, %v3842
  %3844 = vmatmul.f32.gmra.mxu0 %v2739
  %v3845 = vpop.f32.mrf.mxu0
  %v3846 = vadd.f32 0.0, %v3845
  %3847 = vdwg.mxu0
  %s3848 = scalar_lea.vmem %s3, 1248
  %v3849 = vld [vmem:[%s3848] sm:$0xff]
  %v3850 = vld [vmem:[%s3848 + $0x8] sm:$0xff]
  %v3851 = vld [vmem:[%s3848 + $0x10] sm:$0xff]
  %v3852 = vld [vmem:[%s3848 + $0x18] sm:$0xff]
  %3853 = vmatpush.msra.mxu0 0.0
  %3854 = vmatpush.msra.mxu0 0.0
  %3855 = vmatpush.msra.mxu0 0.0
  %3856 = vmatpush.msra.mxu0 0.0
  %3857 = vmatpush.msra.mxu0 0.0
  %3858 = vmatpush.msra.mxu0 0.0
  %3859 = vmatpush.msra.mxu0 0.0
  %3860 = vmatpush.msra.mxu0 0.0
  %3861 = vmatpush.msra.mxu0 0.0
  %3862 = vmatpush.msra.mxu0 0.0
  %3863 = vmatpush.msra.mxu0 0.0
  %3864 = vmatpush.msra.mxu0 0.0
  %3865 = vmatpush.msra.mxu0 %v3852
  %3866 = vmatpush.msra.mxu0 %v3851
  %3867 = vmatpush.msra.mxu0 %v3850
  %3868 = vmatpush.msra.mxu0 %v3849
  %3869 = vmatmul.f32.gmra.mxu0 %v2724
  %v3870 = vpop.f32.mrf.mxu0
  %v3871 = vadd.f32 0.0, %v3870
  %3872 = vmatmul.f32.gmra.mxu0 %v2727
  %v3873 = vpop.f32.mrf.mxu0
  %v3874 = vadd.f32 0.0, %v3873
  %3875 = vmatmul.f32.gmra.mxu0 %v2730
  %v3876 = vpop.f32.mrf.mxu0
  %v3877 = vadd.f32 0.0, %v3876
  %3878 = vmatmul.f32.gmra.mxu0 %v2733
  %v3879 = vpop.f32.mrf.mxu0
  %v3880 = vadd.f32 0.0, %v3879
  %3881 = vmatmul.f32.gmra.mxu0 %v2736
  %v3882 = vpop.f32.mrf.mxu0
  %v3883 = vadd.f32 0.0, %v3882
  %3884 = vmatmul.f32.gmra.mxu0 %v2739
  %v3885 = vpop.f32.mrf.mxu0
  %v3886 = vadd.f32 0.0, %v3885
  %3887 = vdwg.mxu0
  %s3888 = scalar_lea.vmem %s3, 1280
  %v3889 = vld [vmem:[%s3888] sm:$0xff]
  %v3890 = vld [vmem:[%s3888 + $0x8] sm:$0xff]
  %v3891 = vld [vmem:[%s3888 + $0x10] sm:$0xff]
  %v3892 = vld [vmem:[%s3888 + $0x18] sm:$0xff]
  %3893 = vmatpush.msra.mxu0 0.0
  %3894 = vmatpush.msra.mxu0 0.0
  %3895 = vmatpush.msra.mxu0 0.0
  %3896 = vmatpush.msra.mxu0 0.0
  %3897 = vmatpush.msra.mxu0 0.0
  %3898 = vmatpush.msra.mxu0 0.0
  %3899 = vmatpush.msra.mxu0 0.0
  %3900 = vmatpush.msra.mxu0 0.0
  %3901 = vmatpush.msra.mxu0 0.0
  %3902 = vmatpush.msra.mxu0 0.0
  %3903 = vmatpush.msra.mxu0 0.0
  %3904 = vmatpush.msra.mxu0 0.0
  %3905 = vmatpush.msra.mxu0 %v3892
  %3906 = vmatpush.msra.mxu0 %v3891
  %3907 = vmatpush.msra.mxu0 %v3890
  %3908 = vmatpush.msra.mxu0 %v3889
  %3909 = vmatmul.f32.gmra.mxu0 %v2724
  %v3910 = vpop.f32.mrf.mxu0
  %v3911 = vadd.f32 0.0, %v3910
  %3912 = vmatmul.f32.gmra.mxu0 %v2727
  %v3913 = vpop.f32.mrf.mxu0
  %v3914 = vadd.f32 0.0, %v3913
  %3915 = vmatmul.f32.gmra.mxu0 %v2730
  %v3916 = vpop.f32.mrf.mxu0
  %v3917 = vadd.f32 0.0, %v3916
  %3918 = vmatmul.f32.gmra.mxu0 %v2733
  %v3919 = vpop.f32.mrf.mxu0
  %v3920 = vadd.f32 0.0, %v3919
  %3921 = vmatmul.f32.gmra.mxu0 %v2736
  %v3922 = vpop.f32.mrf.mxu0
  %v3923 = vadd.f32 0.0, %v3922
  %3924 = vmatmul.f32.gmra.mxu0 %v2739
  %v3925 = vpop.f32.mrf.mxu0
  %v3926 = vadd.f32 0.0, %v3925
  %3927 = vdwg.mxu0
  %v3928 = vmul.f32 %v3751, %v32
  %v3929 = vmul.f32 %v3754, %v33
  %v3930 = vmul.f32 %v3757, %v34
  %v3931 = vmul.f32 %v3760, %v35
  %v3932 = vmul.f32 %v3763, %v36
  %v3933 = vmul.f32 %v3766, %v37
  %v3934 = vmul.f32 %v3791, %v39
  %v3935 = vmul.f32 %v3794, %v40
  %v3936 = vmul.f32 %v3797, %v41
  %v3937 = vmul.f32 %v3800, %v42
  %v3938 = vmul.f32 %v3803, %v43
  %v3939 = vmul.f32 %v3806, %v44
  %v3940 = vadd.f32 %v3928, %v3934
  %v3941 = vadd.f32 %v3929, %v3935
  %v3942 = vadd.f32 %v3930, %v3936
  %v3943 = vadd.f32 %v3931, %v3937
  %v3944 = vadd.f32 %v3932, %v3938
  %v3945 = vadd.f32 %v3933, %v3939
  %v3946 = vmul.f32 %v3831, %v32
  %v3947 = vmul.f32 %v3834, %v33
  %v3948 = vmul.f32 %v3837, %v34
  %v3949 = vmul.f32 %v3840, %v35
  %v3950 = vmul.f32 %v3843, %v36
  %v3951 = vmul.f32 %v3846, %v37
  %v3952 = vmul.f32 %v3871, %v39
  %v3953 = vmul.f32 %v3874, %v40
  %v3954 = vmul.f32 %v3877, %v41
  %v3955 = vmul.f32 %v3880, %v42
  %v3956 = vmul.f32 %v3883, %v43
  %v3957 = vmul.f32 %v3886, %v44
  %v3958 = vadd.f32 %v3946, %v3952
  %v3959 = vadd.f32 %v3947, %v3953
  %v3960 = vadd.f32 %v3948, %v3954
  %v3961 = vadd.f32 %v3949, %v3955
  %v3962 = vadd.f32 %v3950, %v3956
  %v3963 = vadd.f32 %v3951, %v3957
  %v3965 = vsel %vm424, %v3940, 0
  %v3968 = vsel %vm424, %v3941, 0
  %v3971 = vsel %vm424, %v3942, 0
  %v3974 = vsel %vm424, %v3943, 0
  %v3977 = vsel %vm424, %v3944, 0
  %v3980 = vsel %vm424, %v3945, 0
  %v3983 = vsel %vm424, %v3958, 0
  %v3986 = vsel %vm424, %v3959, 0
  %v3989 = vsel %vm424, %v3960, 0
  %v3992 = vsel %vm424, %v3961, 0
  %v3995 = vsel %vm424, %v3962, 0
  %v3998 = vsel %vm424, %v3963, 0
  %4000 = vmatpush.xpose.msra.mxu0 0.0
  %4001 = vmatpush.xpose.msra.mxu0 0.0
  %4002 = vmatpush.xpose.msra.mxu0 0.0
  %4003 = vmatpush.xpose.msra.mxu0 0.0
  %4004 = vmatpush.xpose.msra.mxu0 0.0
  %4005 = vmatpush.xpose.msra.mxu0 0.0
  %4006 = vmatpush.xpose.msra.mxu0 0.0
  %4007 = vmatpush.xpose.msra.mxu0 0.0
  %4008 = vmatpush.xpose.msra.mxu0 0.0
  %4009 = vmatpush.xpose.msra.mxu0 0.0
  %4010 = vmatpush.xpose.msra.mxu0 %v3998
  %4011 = vmatpush.xpose.msra.mxu0 %v3995
  %4012 = vmatpush.xpose.msra.mxu0 %v3992
  %4013 = vmatpush.xpose.msra.mxu0 %v3989
  %4014 = vmatpush.xpose.msra.mxu0 %v3986
  %4015 = vmatpush.xpose.msra.mxu0 %v3983
  %4016 = vmatmul.f32.gmra.mxu0 %v3965
  %v4017 = vpop.f32.mrf.mxu0
  %v4018 = vadd.f32 %v45, %v4017
  %4019 = vmatmul.f32.gmra.mxu0 %v3968
  %v4020 = vpop.f32.mrf.mxu0
  %v4021 = vadd.f32 %v46, %v4020
  %4022 = vmatmul.f32.gmra.mxu0 %v3971
  %v4023 = vpop.f32.mrf.mxu0
  %v4024 = vadd.f32 %v47, %v4023
  %4025 = vmatmul.f32.gmra.mxu0 %v3974
  %v4026 = vpop.f32.mrf.mxu0
  %v4027 = vadd.f32 %v48, %v4026
  %4028 = vmatmul.f32.gmra.mxu0 %v3977
  %v4029 = vpop.f32.mrf.mxu0
  %v4030 = vadd.f32 %v49, %v4029
  %4031 = vmatmul.f32.gmra.mxu0 %v3980
  %v4032 = vpop.f32.mrf.mxu0
  %v4033 = vadd.f32 %v50, %v4032
  %4034 = vdwg.mxu0
  %v4035 = vsel %vm496, %v4018, -inf
  %4036 = vmax.xlane.f32.xlu0 %v4035
  %v4037 = vpop.xlane.xlu0 %4036
  %v4038 = vsel %vm496, %v4021, -inf
  %4039 = vmax.xlane.f32.xlu0 %v4038
  %v4040 = vpop.xlane.xlu0 %4039
  %v4041 = vsel %vm496, %v4024, -inf
  %4042 = vmax.xlane.f32.xlu0 %v4041
  %v4043 = vpop.xlane.xlu0 %4042
  %v4044 = vsel %vm496, %v4027, -inf
  %4045 = vmax.xlane.f32.xlu0 %v4044
  %v4046 = vpop.xlane.xlu0 %4045
  %v4047 = vsel %vm496, %v4030, -inf
  %4048 = vmax.xlane.f32.xlu0 %v4047
  %v4049 = vpop.xlane.xlu0 %4048
  %v4050 = vsel %vm496, %v4033, -inf
  %4051 = vmax.xlane.f32.xlu0 %v4050
  %v4052 = vpop.xlane.xlu0 %4051
  %v4053 = vsub.f32 %v4018, %v4037
  %v4054 = vsub.f32 %v4021, %v4040
  %v4055 = vsub.f32 %v4024, %v4043
  %v4056 = vsub.f32 %v4027, %v4046
  %v4057 = vsub.f32 %v4030, %v4049
  %v4058 = vsub.f32 %v4033, %v4052
  %v4059 = vmul.f32 %v4053, 1.442695
  %v4060 = vpow.pop %v4059
  %v4061 = vmul.f32 %v4054, 1.442695
  %v4062 = vpow.pop %v4061
  %v4063 = vmul.f32 %v4055, 1.442695
  %v4064 = vpow.pop %v4063
  %v4065 = vmul.f32 %v4056, 1.442695
  %v4066 = vpow.pop %v4065
  %v4067 = vmul.f32 %v4057, 1.442695
  %v4068 = vpow.pop %v4067
  %v4069 = vmul.f32 %v4058, 1.442695
  %v4070 = vpow.pop %v4069
  %v4071 = vsel %vm496, %v4060, 0.0
  %4072 = vadd.xlane.f32.xlu0 %v4071
  %v4073 = vpop.xlane.xlu0 %4072
  %v4074 = vsel %vm496, %v4062, 0.0
  %4075 = vadd.xlane.f32.xlu0 %v4074
  %v4076 = vpop.xlane.xlu0 %4075
  %v4077 = vsel %vm496, %v4064, 0.0
  %4078 = vadd.xlane.f32.xlu0 %v4077
  %v4079 = vpop.xlane.xlu0 %4078
  %v4080 = vsel %vm496, %v4066, 0.0
  %4081 = vadd.xlane.f32.xlu0 %v4080
  %v4082 = vpop.xlane.xlu0 %4081
  %v4083 = vsel %vm496, %v4068, 0.0
  %4084 = vadd.xlane.f32.xlu0 %v4083
  %v4085 = vpop.xlane.xlu0 %4084
  %v4086 = vsel %vm496, %v4070, 0.0
  %4087 = vadd.xlane.f32.xlu0 %v4086
  %v4088 = vpop.xlane.xlu0 %4087
  %v4089 = vrcp.pop %v4073
  %v4090 = vrcp.pop %v4076
  %v4091 = vrcp.pop %v4079
  %v4092 = vrcp.pop %v4082
  %v4093 = vrcp.pop %v4085
  %v4094 = vrcp.pop %v4088
  %v4095 = vmul.f32 %v4060, %v4089
  %v4096 = vmul.f32 %v4062, %v4090
  %v4097 = vmul.f32 %v4064, %v4091
  %v4098 = vmul.f32 %v4066, %v4092
  %v4099 = vmul.f32 %v4068, %v4093
  %v4100 = vmul.f32 %v4070, %v4094
  %v4102 = vsel %vm496, %v4095, 0
  %v4105 = vsel %vm496, %v4096, 0
  %v4108 = vsel %vm496, %v4097, 0
  %v4111 = vsel %vm496, %v4098, 0
  %v4114 = vsel %vm496, %v4099, 0
  %v4117 = vsel %vm496, %v4100, 0
  %4119 = vmatpush.msra.mxu0 0.0
  %4120 = vmatpush.msra.mxu0 0.0
  %4121 = vmatpush.msra.mxu0 0.0
  %4122 = vmatpush.msra.mxu0 0.0
  %4123 = vmatpush.msra.mxu0 0.0
  %4124 = vmatpush.msra.mxu0 0.0
  %4125 = vmatpush.msra.mxu0 0.0
  %4126 = vmatpush.msra.mxu0 0.0
  %4127 = vmatpush.msra.mxu0 0.0
  %4128 = vmatpush.msra.mxu0 0.0
  %4129 = vmatpush.msra.mxu0 %v3926
  %4130 = vmatpush.msra.mxu0 %v3923
  %4131 = vmatpush.msra.mxu0 %v3920
  %4132 = vmatpush.msra.mxu0 %v3917
  %4133 = vmatpush.msra.mxu0 %v3914
  %4134 = vmatpush.msra.mxu0 %v3911
  %4135 = vmatmul.f32.gmra.mxu0 %v4102
  %v4136 = vpop.f32.mrf.mxu0
  %v4137 = vadd.f32 0.0, %v4136
  %4138 = vmatmul.f32.gmra.mxu0 %v4105
  %v4139 = vpop.f32.mrf.mxu0
  %v4140 = vadd.f32 0.0, %v4139
  %4141 = vmatmul.f32.gmra.mxu0 %v4108
  %v4142 = vpop.f32.mrf.mxu0
  %v4143 = vadd.f32 0.0, %v4142
  %4144 = vmatmul.f32.gmra.mxu0 %v4111
  %v4145 = vpop.f32.mrf.mxu0
  %v4146 = vadd.f32 0.0, %v4145
  %4147 = vmatmul.f32.gmra.mxu0 %v4114
  %v4148 = vpop.f32.mrf.mxu0
  %v4149 = vadd.f32 0.0, %v4148
  %4150 = vmatmul.f32.gmra.mxu0 %v4117
  %v4151 = vpop.f32.mrf.mxu0
  %v4152 = vadd.f32 0.0, %v4151
  %4153 = vdwg.mxu0
  %s4154 = scalar_lea.vmem %s3, 1312
  %v4155 = vld [vmem:[%s4154] sm:$0xff]
  %v4156 = vld [vmem:[%s4154 + $0x8] sm:$0xff]
  %v4157 = vld [vmem:[%s4154 + $0x10] sm:$0xff]
  %v4158 = vld [vmem:[%s4154 + $0x18] sm:$0xff]
  %v4160 = vsel %vm424, %v4137, 0
  %v4163 = vsel %vm424, %v4140, 0
  %v4166 = vsel %vm424, %v4143, 0
  %v4169 = vsel %vm424, %v4146, 0
  %v4172 = vsel %vm424, %v4149, 0
  %v4175 = vsel %vm424, %v4152, 0
  %v4178 = vsel %vm424, %v4155, 0
  %v4181 = vsel %vm424, %v4156, 0
  %v4184 = vsel %vm424, %v4157, 0
  %v4187 = vsel %vm424, %v4158, 0
  %4189 = vmatpush.xpose.msra.mxu0 0.0
  %4190 = vmatpush.xpose.msra.mxu0 0.0
  %4191 = vmatpush.xpose.msra.mxu0 0.0
  %4192 = vmatpush.xpose.msra.mxu0 0.0
  %4193 = vmatpush.xpose.msra.mxu0 0.0
  %4194 = vmatpush.xpose.msra.mxu0 0.0
  %4195 = vmatpush.xpose.msra.mxu0 0.0
  %4196 = vmatpush.xpose.msra.mxu0 0.0
  %4197 = vmatpush.xpose.msra.mxu0 0.0
  %4198 = vmatpush.xpose.msra.mxu0 0.0
  %4199 = vmatpush.xpose.msra.mxu0 0.0
  %4200 = vmatpush.xpose.msra.mxu0 0.0
  %4201 = vmatpush.xpose.msra.mxu0 %v4187
  %4202 = vmatpush.xpose.msra.mxu0 %v4184
  %4203 = vmatpush.xpose.msra.mxu0 %v4181
  %4204 = vmatpush.xpose.msra.mxu0 %v4178
  %4205 = vmatmul.f32.gmra.mxu0 %v4160
  %v4206 = vpop.f32.mrf.mxu0
  %v4207 = vadd.f32 0.0, %v4206
  %4208 = vmatmul.f32.gmra.mxu0 %v4163
  %v4209 = vpop.f32.mrf.mxu0
  %v4210 = vadd.f32 0.0, %v4209
  %4211 = vmatmul.f32.gmra.mxu0 %v4166
  %v4212 = vpop.f32.mrf.mxu0
  %v4213 = vadd.f32 0.0, %v4212
  %4214 = vmatmul.f32.gmra.mxu0 %v4169
  %v4215 = vpop.f32.mrf.mxu0
  %v4216 = vadd.f32 0.0, %v4215
  %4217 = vmatmul.f32.gmra.mxu0 %v4172
  %v4218 = vpop.f32.mrf.mxu0
  %v4219 = vadd.f32 0.0, %v4218
  %4220 = vmatmul.f32.gmra.mxu0 %v4175
  %v4221 = vpop.f32.mrf.mxu0
  %v4222 = vadd.f32 0.0, %v4221
  %4223 = vdwg.mxu0
  %v4224 = vadd.f32 %v3711, %v4207
  %v4225 = vadd.f32 %v3714, %v4210
  %v4226 = vadd.f32 %v3717, %v4213
  %v4227 = vadd.f32 %v3720, %v4216
  %v4228 = vadd.f32 %v3723, %v4219
  %v4229 = vadd.f32 %v3726, %v4222
  %s4230 = scalar_lea.vmem %s3, 1344
  %v4231 = vld [vmem:[%s4230] sm:$0xff]
  %v4232 = vld [vmem:[%s4230 + $0x8] sm:$0xff]
  %v4233 = vld [vmem:[%s4230 + $0x10] sm:$0xff]
  %v4234 = vld [vmem:[%s4230 + $0x18] sm:$0xff]
  %4235 = vmatpush.msra.mxu0 0.0
  %4236 = vmatpush.msra.mxu0 0.0
  %4237 = vmatpush.msra.mxu0 0.0
  %4238 = vmatpush.msra.mxu0 0.0
  %4239 = vmatpush.msra.mxu0 0.0
  %4240 = vmatpush.msra.mxu0 0.0
  %4241 = vmatpush.msra.mxu0 0.0
  %4242 = vmatpush.msra.mxu0 0.0
  %4243 = vmatpush.msra.mxu0 0.0
  %4244 = vmatpush.msra.mxu0 0.0
  %4245 = vmatpush.msra.mxu0 0.0
  %4246 = vmatpush.msra.mxu0 0.0
  %4247 = vmatpush.msra.mxu0 %v4234
  %4248 = vmatpush.msra.mxu0 %v4233
  %4249 = vmatpush.msra.mxu0 %v4232
  %4250 = vmatpush.msra.mxu0 %v4231
  %4251 = vmatmul.f32.gmra.mxu0 %v2724
  %v4252 = vpop.f32.mrf.mxu0
  %v4253 = vadd.f32 0.0, %v4252
  %4254 = vmatmul.f32.gmra.mxu0 %v2727
  %v4255 = vpop.f32.mrf.mxu0
  %v4256 = vadd.f32 0.0, %v4255
  %4257 = vmatmul.f32.gmra.mxu0 %v2730
  %v4258 = vpop.f32.mrf.mxu0
  %v4259 = vadd.f32 0.0, %v4258
  %4260 = vmatmul.f32.gmra.mxu0 %v2733
  %v4261 = vpop.f32.mrf.mxu0
  %v4262 = vadd.f32 0.0, %v4261
  %4263 = vmatmul.f32.gmra.mxu0 %v2736
  %v4264 = vpop.f32.mrf.mxu0
  %v4265 = vadd.f32 0.0, %v4264
  %4266 = vmatmul.f32.gmra.mxu0 %v2739
  %v4267 = vpop.f32.mrf.mxu0
  %v4268 = vadd.f32 0.0, %v4267
  %4269 = vdwg.mxu0
  %s4270 = scalar_lea.vmem %s3, 1376
  %v4271 = vld [vmem:[%s4270] sm:$0xff]
  %v4272 = vld [vmem:[%s4270 + $0x8] sm:$0xff]
  %v4273 = vld [vmem:[%s4270 + $0x10] sm:$0xff]
  %v4274 = vld [vmem:[%s4270 + $0x18] sm:$0xff]
  %4275 = vmatpush.msra.mxu0 0.0
  %4276 = vmatpush.msra.mxu0 0.0
  %4277 = vmatpush.msra.mxu0 0.0
  %4278 = vmatpush.msra.mxu0 0.0
  %4279 = vmatpush.msra.mxu0 0.0
  %4280 = vmatpush.msra.mxu0 0.0
  %4281 = vmatpush.msra.mxu0 0.0
  %4282 = vmatpush.msra.mxu0 0.0
  %4283 = vmatpush.msra.mxu0 0.0
  %4284 = vmatpush.msra.mxu0 0.0
  %4285 = vmatpush.msra.mxu0 0.0
  %4286 = vmatpush.msra.mxu0 0.0
  %4287 = vmatpush.msra.mxu0 %v4274
  %4288 = vmatpush.msra.mxu0 %v4273
  %4289 = vmatpush.msra.mxu0 %v4272
  %4290 = vmatpush.msra.mxu0 %v4271
  %4291 = vmatmul.f32.gmra.mxu0 %v2724
  %v4292 = vpop.f32.mrf.mxu0
  %v4293 = vadd.f32 0.0, %v4292
  %4294 = vmatmul.f32.gmra.mxu0 %v2727
  %v4295 = vpop.f32.mrf.mxu0
  %v4296 = vadd.f32 0.0, %v4295
  %4297 = vmatmul.f32.gmra.mxu0 %v2730
  %v4298 = vpop.f32.mrf.mxu0
  %v4299 = vadd.f32 0.0, %v4298
  %4300 = vmatmul.f32.gmra.mxu0 %v2733
  %v4301 = vpop.f32.mrf.mxu0
  %v4302 = vadd.f32 0.0, %v4301
  %4303 = vmatmul.f32.gmra.mxu0 %v2736
  %v4304 = vpop.f32.mrf.mxu0
  %v4305 = vadd.f32 0.0, %v4304
  %4306 = vmatmul.f32.gmra.mxu0 %v2739
  %v4307 = vpop.f32.mrf.mxu0
  %v4308 = vadd.f32 0.0, %v4307
  %4309 = vdwg.mxu0
  %s4310 = scalar_lea.vmem %s3, 1408
  %v4311 = vld [vmem:[%s4310] sm:$0xff]
  %v4312 = vld [vmem:[%s4310 + $0x8] sm:$0xff]
  %v4313 = vld [vmem:[%s4310 + $0x10] sm:$0xff]
  %v4314 = vld [vmem:[%s4310 + $0x18] sm:$0xff]
  %4315 = vmatpush.msra.mxu0 0.0
  %4316 = vmatpush.msra.mxu0 0.0
  %4317 = vmatpush.msra.mxu0 0.0
  %4318 = vmatpush.msra.mxu0 0.0
  %4319 = vmatpush.msra.mxu0 0.0
  %4320 = vmatpush.msra.mxu0 0.0
  %4321 = vmatpush.msra.mxu0 0.0
  %4322 = vmatpush.msra.mxu0 0.0
  %4323 = vmatpush.msra.mxu0 0.0
  %4324 = vmatpush.msra.mxu0 0.0
  %4325 = vmatpush.msra.mxu0 0.0
  %4326 = vmatpush.msra.mxu0 0.0
  %4327 = vmatpush.msra.mxu0 %v4314
  %4328 = vmatpush.msra.mxu0 %v4313
  %4329 = vmatpush.msra.mxu0 %v4312
  %4330 = vmatpush.msra.mxu0 %v4311
  %4331 = vmatmul.f32.gmra.mxu0 %v2724
  %v4332 = vpop.f32.mrf.mxu0
  %v4333 = vadd.f32 0.0, %v4332
  %4334 = vmatmul.f32.gmra.mxu0 %v2727
  %v4335 = vpop.f32.mrf.mxu0
  %v4336 = vadd.f32 0.0, %v4335
  %4337 = vmatmul.f32.gmra.mxu0 %v2730
  %v4338 = vpop.f32.mrf.mxu0
  %v4339 = vadd.f32 0.0, %v4338
  %4340 = vmatmul.f32.gmra.mxu0 %v2733
  %v4341 = vpop.f32.mrf.mxu0
  %v4342 = vadd.f32 0.0, %v4341
  %4343 = vmatmul.f32.gmra.mxu0 %v2736
  %v4344 = vpop.f32.mrf.mxu0
  %v4345 = vadd.f32 0.0, %v4344
  %4346 = vmatmul.f32.gmra.mxu0 %v2739
  %v4347 = vpop.f32.mrf.mxu0
  %v4348 = vadd.f32 0.0, %v4347
  %4349 = vdwg.mxu0
  %s4350 = scalar_lea.vmem %s3, 1440
  %v4351 = vld [vmem:[%s4350] sm:$0xff]
  %v4352 = vld [vmem:[%s4350 + $0x8] sm:$0xff]
  %v4353 = vld [vmem:[%s4350 + $0x10] sm:$0xff]
  %v4354 = vld [vmem:[%s4350 + $0x18] sm:$0xff]
  %4355 = vmatpush.msra.mxu0 0.0
  %4356 = vmatpush.msra.mxu0 0.0
  %4357 = vmatpush.msra.mxu0 0.0
  %4358 = vmatpush.msra.mxu0 0.0
  %4359 = vmatpush.msra.mxu0 0.0
  %4360 = vmatpush.msra.mxu0 0.0
  %4361 = vmatpush.msra.mxu0 0.0
  %4362 = vmatpush.msra.mxu0 0.0
  %4363 = vmatpush.msra.mxu0 0.0
  %4364 = vmatpush.msra.mxu0 0.0
  %4365 = vmatpush.msra.mxu0 0.0
  %4366 = vmatpush.msra.mxu0 0.0
  %4367 = vmatpush.msra.mxu0 %v4354
  %4368 = vmatpush.msra.mxu0 %v4353
  %4369 = vmatpush.msra.mxu0 %v4352
  %4370 = vmatpush.msra.mxu0 %v4351
  %4371 = vmatmul.f32.gmra.mxu0 %v2724
  %v4372 = vpop.f32.mrf.mxu0
  %v4373 = vadd.f32 0.0, %v4372
  %4374 = vmatmul.f32.gmra.mxu0 %v2727
  %v4375 = vpop.f32.mrf.mxu0
  %v4376 = vadd.f32 0.0, %v4375
  %4377 = vmatmul.f32.gmra.mxu0 %v2730
  %v4378 = vpop.f32.mrf.mxu0
  %v4379 = vadd.f32 0.0, %v4378
  %4380 = vmatmul.f32.gmra.mxu0 %v2733
  %v4381 = vpop.f32.mrf.mxu0
  %v4382 = vadd.f32 0.0, %v4381
  %4383 = vmatmul.f32.gmra.mxu0 %v2736
  %v4384 = vpop.f32.mrf.mxu0
  %v4385 = vadd.f32 0.0, %v4384
  %4386 = vmatmul.f32.gmra.mxu0 %v2739
  %v4387 = vpop.f32.mrf.mxu0
  %v4388 = vadd.f32 0.0, %v4387
  %4389 = vdwg.mxu0
  %s4390 = scalar_lea.vmem %s3, 1472
  %v4391 = vld [vmem:[%s4390] sm:$0xff]
  %v4392 = vld [vmem:[%s4390 + $0x8] sm:$0xff]
  %v4393 = vld [vmem:[%s4390 + $0x10] sm:$0xff]
  %v4394 = vld [vmem:[%s4390 + $0x18] sm:$0xff]
  %4395 = vmatpush.msra.mxu0 0.0
  %4396 = vmatpush.msra.mxu0 0.0
  %4397 = vmatpush.msra.mxu0 0.0
  %4398 = vmatpush.msra.mxu0 0.0
  %4399 = vmatpush.msra.mxu0 0.0
  %4400 = vmatpush.msra.mxu0 0.0
  %4401 = vmatpush.msra.mxu0 0.0
  %4402 = vmatpush.msra.mxu0 0.0
  %4403 = vmatpush.msra.mxu0 0.0
  %4404 = vmatpush.msra.mxu0 0.0
  %4405 = vmatpush.msra.mxu0 0.0
  %4406 = vmatpush.msra.mxu0 0.0
  %4407 = vmatpush.msra.mxu0 %v4394
  %4408 = vmatpush.msra.mxu0 %v4393
  %4409 = vmatpush.msra.mxu0 %v4392
  %4410 = vmatpush.msra.mxu0 %v4391
  %4411 = vmatmul.f32.gmra.mxu0 %v2724
  %v4412 = vpop.f32.mrf.mxu0
  %v4413 = vadd.f32 0.0, %v4412
  %4414 = vmatmul.f32.gmra.mxu0 %v2727
  %v4415 = vpop.f32.mrf.mxu0
  %v4416 = vadd.f32 0.0, %v4415
  %4417 = vmatmul.f32.gmra.mxu0 %v2730
  %v4418 = vpop.f32.mrf.mxu0
  %v4419 = vadd.f32 0.0, %v4418
  %4420 = vmatmul.f32.gmra.mxu0 %v2733
  %v4421 = vpop.f32.mrf.mxu0
  %v4422 = vadd.f32 0.0, %v4421
  %4423 = vmatmul.f32.gmra.mxu0 %v2736
  %v4424 = vpop.f32.mrf.mxu0
  %v4425 = vadd.f32 0.0, %v4424
  %4426 = vmatmul.f32.gmra.mxu0 %v2739
  %v4427 = vpop.f32.mrf.mxu0
  %v4428 = vadd.f32 0.0, %v4427
  %4429 = vdwg.mxu0
  %v4430 = vmul.f32 %v4253, %v32
  %v4431 = vmul.f32 %v4256, %v33
  %v4432 = vmul.f32 %v4259, %v34
  %v4433 = vmul.f32 %v4262, %v35
  %v4434 = vmul.f32 %v4265, %v36
  %v4435 = vmul.f32 %v4268, %v37
  %v4436 = vmul.f32 %v4293, %v39
  %v4437 = vmul.f32 %v4296, %v40
  %v4438 = vmul.f32 %v4299, %v41
  %v4439 = vmul.f32 %v4302, %v42
  %v4440 = vmul.f32 %v4305, %v43
  %v4441 = vmul.f32 %v4308, %v44
  %v4442 = vadd.f32 %v4430, %v4436
  %v4443 = vadd.f32 %v4431, %v4437
  %v4444 = vadd.f32 %v4432, %v4438
  %v4445 = vadd.f32 %v4433, %v4439
  %v4446 = vadd.f32 %v4434, %v4440
  %v4447 = vadd.f32 %v4435, %v4441
  %v4448 = vmul.f32 %v4333, %v32
  %v4449 = vmul.f32 %v4336, %v33
  %v4450 = vmul.f32 %v4339, %v34
  %v4451 = vmul.f32 %v4342, %v35
  %v4452 = vmul.f32 %v4345, %v36
  %v4453 = vmul.f32 %v4348, %v37
  %v4454 = vmul.f32 %v4373, %v39
  %v4455 = vmul.f32 %v4376, %v40
  %v4456 = vmul.f32 %v4379, %v41
  %v4457 = vmul.f32 %v4382, %v42
  %v4458 = vmul.f32 %v4385, %v43
  %v4459 = vmul.f32 %v4388, %v44
  %v4460 = vadd.f32 %v4448, %v4454
  %v4461 = vadd.f32 %v4449, %v4455
  %v4462 = vadd.f32 %v4450, %v4456
  %v4463 = vadd.f32 %v4451, %v4457
  %v4464 = vadd.f32 %v4452, %v4458
  %v4465 = vadd.f32 %v4453, %v4459
  %v4467 = vsel %vm424, %v4442, 0
  %v4470 = vsel %vm424, %v4443, 0
  %v4473 = vsel %vm424, %v4444, 0
  %v4476 = vsel %vm424, %v4445, 0
  %v4479 = vsel %vm424, %v4446, 0
  %v4482 = vsel %vm424, %v4447, 0
  %v4485 = vsel %vm424, %v4460, 0
  %v4488 = vsel %vm424, %v4461, 0
  %v4491 = vsel %vm424, %v4462, 0
  %v4494 = vsel %vm424, %v4463, 0
  %v4497 = vsel %vm424, %v4464, 0
  %v4500 = vsel %vm424, %v4465, 0
  %4502 = vmatpush.xpose.msra.mxu0 0.0
  %4503 = vmatpush.xpose.msra.mxu0 0.0
  %4504 = vmatpush.xpose.msra.mxu0 0.0
  %4505 = vmatpush.xpose.msra.mxu0 0.0
  %4506 = vmatpush.xpose.msra.mxu0 0.0
  %4507 = vmatpush.xpose.msra.mxu0 0.0
  %4508 = vmatpush.xpose.msra.mxu0 0.0
  %4509 = vmatpush.xpose.msra.mxu0 0.0
  %4510 = vmatpush.xpose.msra.mxu0 0.0
  %4511 = vmatpush.xpose.msra.mxu0 0.0
  %4512 = vmatpush.xpose.msra.mxu0 %v4500
  %4513 = vmatpush.xpose.msra.mxu0 %v4497
  %4514 = vmatpush.xpose.msra.mxu0 %v4494
  %4515 = vmatpush.xpose.msra.mxu0 %v4491
  %4516 = vmatpush.xpose.msra.mxu0 %v4488
  %4517 = vmatpush.xpose.msra.mxu0 %v4485
  %4518 = vmatmul.f32.gmra.mxu0 %v4467
  %v4519 = vpop.f32.mrf.mxu0
  %v4520 = vadd.f32 %v45, %v4519
  %4521 = vmatmul.f32.gmra.mxu0 %v4470
  %v4522 = vpop.f32.mrf.mxu0
  %v4523 = vadd.f32 %v46, %v4522
  %4524 = vmatmul.f32.gmra.mxu0 %v4473
  %v4525 = vpop.f32.mrf.mxu0
  %v4526 = vadd.f32 %v47, %v4525
  %4527 = vmatmul.f32.gmra.mxu0 %v4476
  %v4528 = vpop.f32.mrf.mxu0
  %v4529 = vadd.f32 %v48, %v4528
  %4530 = vmatmul.f32.gmra.mxu0 %v4479
  %v4531 = vpop.f32.mrf.mxu0
  %v4532 = vadd.f32 %v49, %v4531
  %4533 = vmatmul.f32.gmra.mxu0 %v4482
  %v4534 = vpop.f32.mrf.mxu0
  %v4535 = vadd.f32 %v50, %v4534
  %4536 = vdwg.mxu0
  %v4537 = vsel %vm496, %v4520, -inf
  %4538 = vmax.xlane.f32.xlu0 %v4537
  %v4539 = vpop.xlane.xlu0 %4538
  %v4540 = vsel %vm496, %v4523, -inf
  %4541 = vmax.xlane.f32.xlu0 %v4540
  %v4542 = vpop.xlane.xlu0 %4541
  %v4543 = vsel %vm496, %v4526, -inf
  %4544 = vmax.xlane.f32.xlu0 %v4543
  %v4545 = vpop.xlane.xlu0 %4544
  %v4546 = vsel %vm496, %v4529, -inf
  %4547 = vmax.xlane.f32.xlu0 %v4546
  %v4548 = vpop.xlane.xlu0 %4547
  %v4549 = vsel %vm496, %v4532, -inf
  %4550 = vmax.xlane.f32.xlu0 %v4549
  %v4551 = vpop.xlane.xlu0 %4550
  %v4552 = vsel %vm496, %v4535, -inf
  %4553 = vmax.xlane.f32.xlu0 %v4552
  %v4554 = vpop.xlane.xlu0 %4553
  %v4555 = vsub.f32 %v4520, %v4539
  %v4556 = vsub.f32 %v4523, %v4542
  %v4557 = vsub.f32 %v4526, %v4545
  %v4558 = vsub.f32 %v4529, %v4548
  %v4559 = vsub.f32 %v4532, %v4551
  %v4560 = vsub.f32 %v4535, %v4554
  %v4561 = vmul.f32 %v4555, 1.442695
  %v4562 = vpow.pop %v4561
  %v4563 = vmul.f32 %v4556, 1.442695
  %v4564 = vpow.pop %v4563
  %v4565 = vmul.f32 %v4557, 1.442695
  %v4566 = vpow.pop %v4565
  %v4567 = vmul.f32 %v4558, 1.442695
  %v4568 = vpow.pop %v4567
  %v4569 = vmul.f32 %v4559, 1.442695
  %v4570 = vpow.pop %v4569
  %v4571 = vmul.f32 %v4560, 1.442695
  %v4572 = vpow.pop %v4571
  %v4573 = vsel %vm496, %v4562, 0.0
  %4574 = vadd.xlane.f32.xlu0 %v4573
  %v4575 = vpop.xlane.xlu0 %4574
  %v4576 = vsel %vm496, %v4564, 0.0
  %4577 = vadd.xlane.f32.xlu0 %v4576
  %v4578 = vpop.xlane.xlu0 %4577
  %v4579 = vsel %vm496, %v4566, 0.0
  %4580 = vadd.xlane.f32.xlu0 %v4579
  %v4581 = vpop.xlane.xlu0 %4580
  %v4582 = vsel %vm496, %v4568, 0.0
  %4583 = vadd.xlane.f32.xlu0 %v4582
  %v4584 = vpop.xlane.xlu0 %4583
  %v4585 = vsel %vm496, %v4570, 0.0
  %4586 = vadd.xlane.f32.xlu0 %v4585
  %v4587 = vpop.xlane.xlu0 %4586
  %v4588 = vsel %vm496, %v4572, 0.0
  %4589 = vadd.xlane.f32.xlu0 %v4588
  %v4590 = vpop.xlane.xlu0 %4589
  %v4591 = vrcp.pop %v4575
  %v4592 = vrcp.pop %v4578
  %v4593 = vrcp.pop %v4581
  %v4594 = vrcp.pop %v4584
  %v4595 = vrcp.pop %v4587
  %v4596 = vrcp.pop %v4590
  %v4597 = vmul.f32 %v4562, %v4591
  %v4598 = vmul.f32 %v4564, %v4592
  %v4599 = vmul.f32 %v4566, %v4593
  %v4600 = vmul.f32 %v4568, %v4594
  %v4601 = vmul.f32 %v4570, %v4595
  %v4602 = vmul.f32 %v4572, %v4596
  %v4604 = vsel %vm496, %v4597, 0
  %v4607 = vsel %vm496, %v4598, 0
  %v4610 = vsel %vm496, %v4599, 0
  %v4613 = vsel %vm496, %v4600, 0
  %v4616 = vsel %vm496, %v4601, 0
  %v4619 = vsel %vm496, %v4602, 0
  %4621 = vmatpush.msra.mxu0 0.0
  %4622 = vmatpush.msra.mxu0 0.0
  %4623 = vmatpush.msra.mxu0 0.0
  %4624 = vmatpush.msra.mxu0 0.0
  %4625 = vmatpush.msra.mxu0 0.0
  %4626 = vmatpush.msra.mxu0 0.0
  %4627 = vmatpush.msra.mxu0 0.0
  %4628 = vmatpush.msra.mxu0 0.0
  %4629 = vmatpush.msra.mxu0 0.0
  %4630 = vmatpush.msra.mxu0 0.0
  %4631 = vmatpush.msra.mxu0 %v4428
  %4632 = vmatpush.msra.mxu0 %v4425
  %4633 = vmatpush.msra.mxu0 %v4422
  %4634 = vmatpush.msra.mxu0 %v4419
  %4635 = vmatpush.msra.mxu0 %v4416
  %4636 = vmatpush.msra.mxu0 %v4413
  %4637 = vmatmul.f32.gmra.mxu0 %v4604
  %v4638 = vpop.f32.mrf.mxu0
  %v4639 = vadd.f32 0.0, %v4638
  %4640 = vmatmul.f32.gmra.mxu0 %v4607
  %v4641 = vpop.f32.mrf.mxu0
  %v4642 = vadd.f32 0.0, %v4641
  %4643 = vmatmul.f32.gmra.mxu0 %v4610
  %v4644 = vpop.f32.mrf.mxu0
  %v4645 = vadd.f32 0.0, %v4644
  %4646 = vmatmul.f32.gmra.mxu0 %v4613
  %v4647 = vpop.f32.mrf.mxu0
  %v4648 = vadd.f32 0.0, %v4647
  %4649 = vmatmul.f32.gmra.mxu0 %v4616
  %v4650 = vpop.f32.mrf.mxu0
  %v4651 = vadd.f32 0.0, %v4650
  %4652 = vmatmul.f32.gmra.mxu0 %v4619
  %v4653 = vpop.f32.mrf.mxu0
  %v4654 = vadd.f32 0.0, %v4653
  %4655 = vdwg.mxu0
  %s4656 = scalar_lea.vmem %s3, 1504
  %v4657 = vld [vmem:[%s4656] sm:$0xff]
  %v4658 = vld [vmem:[%s4656 + $0x8] sm:$0xff]
  %v4659 = vld [vmem:[%s4656 + $0x10] sm:$0xff]
  %v4660 = vld [vmem:[%s4656 + $0x18] sm:$0xff]
  %v4662 = vsel %vm424, %v4639, 0
  %v4665 = vsel %vm424, %v4642, 0
  %v4668 = vsel %vm424, %v4645, 0
  %v4671 = vsel %vm424, %v4648, 0
  %v4674 = vsel %vm424, %v4651, 0
  %v4677 = vsel %vm424, %v4654, 0
  %v4680 = vsel %vm424, %v4657, 0
  %v4683 = vsel %vm424, %v4658, 0
  %v4686 = vsel %vm424, %v4659, 0
  %v4689 = vsel %vm424, %v4660, 0
  %4691 = vmatpush.xpose.msra.mxu0 0.0
  %4692 = vmatpush.xpose.msra.mxu0 0.0
  %4693 = vmatpush.xpose.msra.mxu0 0.0
  %4694 = vmatpush.xpose.msra.mxu0 0.0
  %4695 = vmatpush.xpose.msra.mxu0 0.0
  %4696 = vmatpush.xpose.msra.mxu0 0.0
  %4697 = vmatpush.xpose.msra.mxu0 0.0
  %4698 = vmatpush.xpose.msra.mxu0 0.0
  %4699 = vmatpush.xpose.msra.mxu0 0.0
  %4700 = vmatpush.xpose.msra.mxu0 0.0
  %4701 = vmatpush.xpose.msra.mxu0 0.0
  %4702 = vmatpush.xpose.msra.mxu0 0.0
  %4703 = vmatpush.xpose.msra.mxu0 %v4689
  %4704 = vmatpush.xpose.msra.mxu0 %v4686
  %4705 = vmatpush.xpose.msra.mxu0 %v4683
  %4706 = vmatpush.xpose.msra.mxu0 %v4680
  %4707 = vmatmul.f32.gmra.mxu0 %v4662
  %v4708 = vpop.f32.mrf.mxu0
  %v4709 = vadd.f32 0.0, %v4708
  %4710 = vmatmul.f32.gmra.mxu0 %v4665
  %v4711 = vpop.f32.mrf.mxu0
  %v4712 = vadd.f32 0.0, %v4711
  %4713 = vmatmul.f32.gmra.mxu0 %v4668
  %v4714 = vpop.f32.mrf.mxu0
  %v4715 = vadd.f32 0.0, %v4714
  %4716 = vmatmul.f32.gmra.mxu0 %v4671
  %v4717 = vpop.f32.mrf.mxu0
  %v4718 = vadd.f32 0.0, %v4717
  %4719 = vmatmul.f32.gmra.mxu0 %v4674
  %v4720 = vpop.f32.mrf.mxu0
  %v4721 = vadd.f32 0.0, %v4720
  %4722 = vmatmul.f32.gmra.mxu0 %v4677
  %v4723 = vpop.f32.mrf.mxu0
  %v4724 = vadd.f32 0.0, %v4723
  %4725 = vdwg.mxu0
  %v4726 = vadd.f32 %v4224, %v4709
  %v4727 = vadd.f32 %v4225, %v4712
  %v4728 = vadd.f32 %v4226, %v4715
  %v4729 = vadd.f32 %v4227, %v4718
  %v4730 = vadd.f32 %v4228, %v4721
  %v4731 = vadd.f32 %v4229, %v4724
  %v4732 = vadd.f32 %v2599, %v4726
  %v4733 = vadd.f32 %v2600, %v4727
  %v4734 = vadd.f32 %v2601, %v4728
  %v4735 = vadd.f32 %v2602, %v4729
  %v4736 = vadd.f32 %v2603, %v4730
  %v4737 = vadd.f32 %v2604, %v4731
  %s4738 = scalar_lea.vmem %s5, 3
  %v4739 = vld [vmem:[%s4738] sm:$0x1]
  %v4740 = vmul.f32 %v4732, %v4732
  %v4741 = vmul.f32 %v4733, %v4733
  %v4742 = vmul.f32 %v4734, %v4734
  %v4743 = vmul.f32 %v4735, %v4735
  %v4744 = vmul.f32 %v4736, %v4736
  %v4745 = vmul.f32 %v4737, %v4737
  %v4746 = vsel %vm58, %v4740, 0.0
  %4747 = vadd.xlane.f32.xlu0 %v4746
  %v4748 = vpop.xlane.xlu0 %4747
  %v4749 = vsel %vm58, %v4741, 0.0
  %4750 = vadd.xlane.f32.xlu0 %v4749
  %v4751 = vpop.xlane.xlu0 %4750
  %v4752 = vsel %vm58, %v4742, 0.0
  %4753 = vadd.xlane.f32.xlu0 %v4752
  %v4754 = vpop.xlane.xlu0 %4753
  %v4755 = vsel %vm58, %v4743, 0.0
  %4756 = vadd.xlane.f32.xlu0 %v4755
  %v4757 = vpop.xlane.xlu0 %4756
  %v4758 = vsel %vm58, %v4744, 0.0
  %4759 = vadd.xlane.f32.xlu0 %v4758
  %v4760 = vpop.xlane.xlu0 %4759
  %v4761 = vsel %vm58, %v4745, 0.0
  %4762 = vadd.xlane.f32.xlu0 %v4761
  %v4763 = vpop.xlane.xlu0 %4762
  %v4764 = vmul.f32 %v4748, %v83
  %v4765 = vmul.f32 %v4751, %v83
  %v4766 = vmul.f32 %v4754, %v83
  %v4767 = vmul.f32 %v4757, %v83
  %v4768 = vmul.f32 %v4760, %v83
  %v4769 = vmul.f32 %v4763, %v83
  %v4770 = vadd.f32 %v4764, 1e-06
  %v4771 = vadd.f32 %v4765, 1e-06
  %v4772 = vadd.f32 %v4766, 1e-06
  %v4773 = vadd.f32 %v4767, 1e-06
  %v4774 = vadd.f32 %v4768, 1e-06
  %v4775 = vadd.f32 %v4769, 1e-06
  %v4776 = vrsqrt.pop %v4770
  %v4777 = vmul.f32 %v4776, %v4770
  %v4778 = vmul.f32 %v4777, %v4776
  %v4779 = vmul.f32 0.5, %v4778
  %v4780 = vsub.f32 1.5, %v4779
  %v4781 = vmul.f32 %v4776, %v4780
  %vm4782 = vweird.f32 %v4770
  %vm4783 = vweird.f32 %v4776
  %vm4784 = vmor %vm4782, %vm4783
  %v4785 = vsel %vm4784, %v4776, %v4781
  %v4786 = vrsqrt.pop %v4771
  %v4787 = vmul.f32 %v4786, %v4771
  %v4788 = vmul.f32 %v4787, %v4786
  %v4789 = vmul.f32 0.5, %v4788
  %v4790 = vsub.f32 1.5, %v4789
  %v4791 = vmul.f32 %v4786, %v4790
  %vm4792 = vweird.f32 %v4771
  %vm4793 = vweird.f32 %v4786
  %vm4794 = vmor %vm4792, %vm4793
  %v4795 = vsel %vm4794, %v4786, %v4791
  %v4796 = vrsqrt.pop %v4772
  %v4797 = vmul.f32 %v4796, %v4772
  %v4798 = vmul.f32 %v4797, %v4796
  %v4799 = vmul.f32 0.5, %v4798
  %v4800 = vsub.f32 1.5, %v4799
  %v4801 = vmul.f32 %v4796, %v4800
  %vm4802 = vweird.f32 %v4772
  %vm4803 = vweird.f32 %v4796
  %vm4804 = vmor %vm4802, %vm4803
  %v4805 = vsel %vm4804, %v4796, %v4801
  %v4806 = vrsqrt.pop %v4773
  %v4807 = vmul.f32 %v4806, %v4773
  %v4808 = vmul.f32 %v4807, %v4806
  %v4809 = vmul.f32 0.5, %v4808
  %v4810 = vsub.f32 1.5, %v4809
  %v4811 = vmul.f32 %v4806, %v4810
  %vm4812 = vweird.f32 %v4773
  %vm4813 = vweird.f32 %v4806
  %vm4814 = vmor %vm4812, %vm4813
  %v4815 = vsel %vm4814, %v4806, %v4811
  %v4816 = vrsqrt.pop %v4774
  %v4817 = vmul.f32 %v4816, %v4774
  %v4818 = vmul.f32 %v4817, %v4816
  %v4819 = vmul.f32 0.5, %v4818
  %v4820 = vsub.f32 1.5, %v4819
  %v4821 = vmul.f32 %v4816, %v4820
  %vm4822 = vweird.f32 %v4774
  %vm4823 = vweird.f32 %v4816
  %vm4824 = vmor %vm4822, %vm4823
  %v4825 = vsel %vm4824, %v4816, %v4821
  %v4826 = vrsqrt.pop %v4775
  %v4827 = vmul.f32 %v4826, %v4775
  %v4828 = vmul.f32 %v4827, %v4826
  %v4829 = vmul.f32 0.5, %v4828
  %v4830 = vsub.f32 1.5, %v4829
  %v4831 = vmul.f32 %v4826, %v4830
  %vm4832 = vweird.f32 %v4775
  %vm4833 = vweird.f32 %v4826
  %vm4834 = vmor %vm4832, %vm4833
  %v4835 = vsel %vm4834, %v4826, %v4831
  %v4836 = vmul.f32 %v4732, %v4785
  %v4837 = vmul.f32 %v4733, %v4795
  %v4838 = vmul.f32 %v4734, %v4805
  %v4839 = vmul.f32 %v4735, %v4815
  %v4840 = vmul.f32 %v4736, %v4825
  %v4841 = vmul.f32 %v4737, %v4835
  %v4843 = vperm.slane %v4739, 0
  %v4845 = vmul.f32 %v4836, %v4843
  %v4846 = vmul.f32 %v4837, %v4843
  %v4847 = vmul.f32 %v4838, %v4843
  %v4848 = vmul.f32 %v4839, %v4843
  %v4849 = vmul.f32 %v4840, %v4843
  %v4850 = vmul.f32 %v4841, %v4843
  %s4851 = scalar_lea.vmem %s4, 96
  %v4852 = vld [vmem:[%s4851] sm:$0xff]
  %v4853 = vld [vmem:[%s4851 + $0x8] sm:$0xff]
  %v4854 = vld [vmem:[%s4851 + $0x10] sm:$0xff]
  %v4855 = vld [vmem:[%s4851 + $0x18] sm:$0xff]
  %v4857 = vsel %vm58, %v4845, 0
  %v4860 = vsel %vm58, %v4846, 0
  %v4863 = vsel %vm58, %v4847, 0
  %v4866 = vsel %vm58, %v4848, 0
  %v4869 = vsel %vm58, %v4849, 0
  %v4872 = vsel %vm58, %v4850, 0
  %4874 = vmatpush.msra.mxu0 0.0
  %4875 = vmatpush.msra.mxu0 0.0
  %4876 = vmatpush.msra.mxu0 0.0
  %4877 = vmatpush.msra.mxu0 0.0
  %4878 = vmatpush.msra.mxu0 0.0
  %4879 = vmatpush.msra.mxu0 0.0
  %4880 = vmatpush.msra.mxu0 0.0
  %4881 = vmatpush.msra.mxu0 0.0
  %4882 = vmatpush.msra.mxu0 0.0
  %4883 = vmatpush.msra.mxu0 0.0
  %4884 = vmatpush.msra.mxu0 0.0
  %4885 = vmatpush.msra.mxu0 0.0
  %4886 = vmatpush.msra.mxu0 %v4855
  %4887 = vmatpush.msra.mxu0 %v4854
  %4888 = vmatpush.msra.mxu0 %v4853
  %4889 = vmatpush.msra.mxu0 %v4852
  %4890 = vmatmul.f32.gmra.mxu0 %v4857
  %v4891 = vpop.f32.mrf.mxu0
  %v4892 = vadd.f32 0.0, %v4891
  %4893 = vmatmul.f32.gmra.mxu0 %v4860
  %v4894 = vpop.f32.mrf.mxu0
  %v4895 = vadd.f32 0.0, %v4894
  %4896 = vmatmul.f32.gmra.mxu0 %v4863
  %v4897 = vpop.f32.mrf.mxu0
  %v4898 = vadd.f32 0.0, %v4897
  %4899 = vmatmul.f32.gmra.mxu0 %v4866
  %v4900 = vpop.f32.mrf.mxu0
  %v4901 = vadd.f32 0.0, %v4900
  %4902 = vmatmul.f32.gmra.mxu0 %v4869
  %v4903 = vpop.f32.mrf.mxu0
  %v4904 = vadd.f32 0.0, %v4903
  %4905 = vmatmul.f32.gmra.mxu0 %v4872
  %v4906 = vpop.f32.mrf.mxu0
  %v4907 = vadd.f32 0.0, %v4906
  %4908 = vdwg.mxu0
  %s4909 = scalar_lea.vmem %s4, 128
  %v4910 = vld [vmem:[%s4909] sm:$0xff]
  %v4911 = vld [vmem:[%s4909 + $0x8] sm:$0xff]
  %v4912 = vld [vmem:[%s4909 + $0x10] sm:$0xff]
  %v4913 = vld [vmem:[%s4909 + $0x18] sm:$0xff]
  %4914 = vmatpush.msra.mxu0 0.0
  %4915 = vmatpush.msra.mxu0 0.0
  %4916 = vmatpush.msra.mxu0 0.0
  %4917 = vmatpush.msra.mxu0 0.0
  %4918 = vmatpush.msra.mxu0 0.0
  %4919 = vmatpush.msra.mxu0 0.0
  %4920 = vmatpush.msra.mxu0 0.0
  %4921 = vmatpush.msra.mxu0 0.0
  %4922 = vmatpush.msra.mxu0 0.0
  %4923 = vmatpush.msra.mxu0 0.0
  %4924 = vmatpush.msra.mxu0 0.0
  %4925 = vmatpush.msra.mxu0 0.0
  %4926 = vmatpush.msra.mxu0 %v4913
  %4927 = vmatpush.msra.mxu0 %v4912
  %4928 = vmatpush.msra.mxu0 %v4911
  %4929 = vmatpush.msra.mxu0 %v4910
  %4930 = vmatmul.f32.gmra.mxu0 %v4857
  %v4931 = vpop.f32.mrf.mxu0
  %v4932 = vadd.f32 0.0, %v4931
  %4933 = vmatmul.f32.gmra.mxu0 %v4860
  %v4934 = vpop.f32.mrf.mxu0
  %v4935 = vadd.f32 0.0, %v4934
  %4936 = vmatmul.f32.gmra.mxu0 %v4863
  %v4937 = vpop.f32.mrf.mxu0
  %v4938 = vadd.f32 0.0, %v4937
  %4939 = vmatmul.f32.gmra.mxu0 %v4866
  %v4940 = vpop.f32.mrf.mxu0
  %v4941 = vadd.f32 0.0, %v4940
  %4942 = vmatmul.f32.gmra.mxu0 %v4869
  %v4943 = vpop.f32.mrf.mxu0
  %v4944 = vadd.f32 0.0, %v4943
  %4945 = vmatmul.f32.gmra.mxu0 %v4872
  %v4946 = vpop.f32.mrf.mxu0
  %v4947 = vadd.f32 0.0, %v4946
  %4948 = vdwg.mxu0
  %v4949 = vxor.u32 %v4892, 2147483648
  %v4950 = vxor.u32 %v4895, 2147483648
  %v4951 = vxor.u32 %v4898, 2147483648
  %v4952 = vxor.u32 %v4901, 2147483648
  %v4953 = vxor.u32 %v4904, 2147483648
  %v4954 = vxor.u32 %v4907, 2147483648
  %v4955 = vmul.f32 %v4949, 1.442695
  %v4956 = vpow.pop %v4955
  %v4957 = vmul.f32 %v4950, 1.442695
  %v4958 = vpow.pop %v4957
  %v4959 = vmul.f32 %v4951, 1.442695
  %v4960 = vpow.pop %v4959
  %v4961 = vmul.f32 %v4952, 1.442695
  %v4962 = vpow.pop %v4961
  %v4963 = vmul.f32 %v4953, 1.442695
  %v4964 = vpow.pop %v4963
  %v4965 = vmul.f32 %v4954, 1.442695
  %v4966 = vpow.pop %v4965
  %v4967 = vadd.f32 %v4956, 1.0
  %v4968 = vadd.f32 %v4958, 1.0
  %v4969 = vadd.f32 %v4960, 1.0
  %v4970 = vadd.f32 %v4962, 1.0
  %v4971 = vadd.f32 %v4964, 1.0
  %v4972 = vadd.f32 %v4966, 1.0
  %v4973 = vrcp.pop %v4967
  %v4974 = vmul.f32 %v4967, %v4973
  %v4975 = vsub.f32 1.0, %v4974
  %v4976 = vmul.f32 %v4973, %v4975
  %v4977 = vadd.f32 %v4973, %v4976
  %vm4978 = vweird.f32 %v4967
  %vm4979 = vweird.f32 %v4973
  %vm4980 = vmor %vm4978, %vm4979
  %v4981 = vsel %vm4980, %v4973, %v4977
  %v4982 = vand.u32 2147483647, %v4967
  %vm4983 = vcmp.eq.f32.partialorder %v4982, 8.507059e+37
  %v4984 = vand.u32 %v4967, 2147483648
  %v4985 = vor.u32 1.1754944e-38, %v4984
  %v4986 = vsel %vm4983, %v4985, %v4981
  %v4987 = vmul.f32 1.0, %v4986
  %v4988 = vrcp.pop %v4968
  %v4989 = vmul.f32 %v4968, %v4988
  %v4990 = vsub.f32 1.0, %v4989
  %v4991 = vmul.f32 %v4988, %v4990
  %v4992 = vadd.f32 %v4988, %v4991
  %vm4993 = vweird.f32 %v4968
  %vm4994 = vweird.f32 %v4988
  %vm4995 = vmor %vm4993, %vm4994
  %v4996 = vsel %vm4995, %v4988, %v4992
  %v4997 = vand.u32 2147483647, %v4968
  %vm4998 = vcmp.eq.f32.partialorder %v4997, 8.507059e+37
  %v4999 = vand.u32 %v4968, 2147483648
  %v5000 = vor.u32 1.1754944e-38, %v4999
  %v5001 = vsel %vm4998, %v5000, %v4996
  %v5002 = vmul.f32 1.0, %v5001
  %v5003 = vrcp.pop %v4969
  %v5004 = vmul.f32 %v4969, %v5003
  %v5005 = vsub.f32 1.0, %v5004
  %v5006 = vmul.f32 %v5003, %v5005
  %v5007 = vadd.f32 %v5003, %v5006
  %vm5008 = vweird.f32 %v4969
  %vm5009 = vweird.f32 %v5003
  %vm5010 = vmor %vm5008, %vm5009
  %v5011 = vsel %vm5010, %v5003, %v5007
  %v5012 = vand.u32 2147483647, %v4969
  %vm5013 = vcmp.eq.f32.partialorder %v5012, 8.507059e+37
  %v5014 = vand.u32 %v4969, 2147483648
  %v5015 = vor.u32 1.1754944e-38, %v5014
  %v5016 = vsel %vm5013, %v5015, %v5011
  %v5017 = vmul.f32 1.0, %v5016
  %v5018 = vrcp.pop %v4970
  %v5019 = vmul.f32 %v4970, %v5018
  %v5020 = vsub.f32 1.0, %v5019
  %v5021 = vmul.f32 %v5018, %v5020
  %v5022 = vadd.f32 %v5018, %v5021
  %vm5023 = vweird.f32 %v4970
  %vm5024 = vweird.f32 %v5018
  %vm5025 = vmor %vm5023, %vm5024
  %v5026 = vsel %vm5025, %v5018, %v5022
  %v5027 = vand.u32 2147483647, %v4970
  %vm5028 = vcmp.eq.f32.partialorder %v5027, 8.507059e+37
  %v5029 = vand.u32 %v4970, 2147483648
  %v5030 = vor.u32 1.1754944e-38, %v5029
  %v5031 = vsel %vm5028, %v5030, %v5026
  %v5032 = vmul.f32 1.0, %v5031
  %v5033 = vrcp.pop %v4971
  %v5034 = vmul.f32 %v4971, %v5033
  %v5035 = vsub.f32 1.0, %v5034
  %v5036 = vmul.f32 %v5033, %v5035
  %v5037 = vadd.f32 %v5033, %v5036
  %vm5038 = vweird.f32 %v4971
  %vm5039 = vweird.f32 %v5033
  %vm5040 = vmor %vm5038, %vm5039
  %v5041 = vsel %vm5040, %v5033, %v5037
  %v5042 = vand.u32 2147483647, %v4971
  %vm5043 = vcmp.eq.f32.partialorder %v5042, 8.507059e+37
  %v5044 = vand.u32 %v4971, 2147483648
  %v5045 = vor.u32 1.1754944e-38, %v5044
  %v5046 = vsel %vm5043, %v5045, %v5041
  %v5047 = vmul.f32 1.0, %v5046
  %v5048 = vrcp.pop %v4972
  %v5049 = vmul.f32 %v4972, %v5048
  %v5050 = vsub.f32 1.0, %v5049
  %v5051 = vmul.f32 %v5048, %v5050
  %v5052 = vadd.f32 %v5048, %v5051
  %vm5053 = vweird.f32 %v4972
  %vm5054 = vweird.f32 %v5048
  %vm5055 = vmor %vm5053, %vm5054
  %v5056 = vsel %vm5055, %v5048, %v5052
  %v5057 = vand.u32 2147483647, %v4972
  %vm5058 = vcmp.eq.f32.partialorder %v5057, 8.507059e+37
  %v5059 = vand.u32 %v4972, 2147483648
  %v5060 = vor.u32 1.1754944e-38, %v5059
  %v5061 = vsel %vm5058, %v5060, %v5056
  %v5062 = vmul.f32 1.0, %v5061
  %v5063 = vmul.f32 %v4892, %v4987
  %v5064 = vmul.f32 %v4895, %v5002
  %v5065 = vmul.f32 %v4898, %v5017
  %v5066 = vmul.f32 %v4901, %v5032
  %v5067 = vmul.f32 %v4904, %v5047
  %v5068 = vmul.f32 %v4907, %v5062
  %v5069 = vmul.f32 %v5063, %v4932
  %v5070 = vmul.f32 %v5064, %v4935
  %v5071 = vmul.f32 %v5065, %v4938
  %v5072 = vmul.f32 %v5066, %v4941
  %v5073 = vmul.f32 %v5067, %v4944
  %v5074 = vmul.f32 %v5068, %v4947
  %s5075 = scalar_lea.vmem %s4, 160
  %v5076 = vld [vmem:[%s5075] sm:$0xff]
  %v5077 = vld [vmem:[%s5075 + $0x8] sm:$0xff]
  %v5078 = vld [vmem:[%s5075 + $0x10] sm:$0xff]
  %v5079 = vld [vmem:[%s5075 + $0x18] sm:$0xff]
  %v5081 = vsel %vm2533, %v5069, 0
  %v5084 = vsel %vm2533, %v5070, 0
  %v5087 = vsel %vm2533, %v5071, 0
  %v5090 = vsel %vm2533, %v5072, 0
  %v5093 = vsel %vm2533, %v5073, 0
  %v5096 = vsel %vm2533, %v5074, 0
  %v5099 = vsel %vm2533, %v5076, 0
  %v5102 = vsel %vm2533, %v5077, 0
  %v5105 = vsel %vm2533, %v5078, 0
  %v5108 = vsel %vm2533, %v5079, 0
  %5110 = vmatpush.xpose.msra.mxu0 0.0
  %5111 = vmatpush.xpose.msra.mxu0 0.0
  %5112 = vmatpush.xpose.msra.mxu0 0.0
  %5113 = vmatpush.xpose.msra.mxu0 0.0
  %5114 = vmatpush.xpose.msra.mxu0 0.0
  %5115 = vmatpush.xpose.msra.mxu0 0.0
  %5116 = vmatpush.xpose.msra.mxu0 0.0
  %5117 = vmatpush.xpose.msra.mxu0 0.0
  %5118 = vmatpush.xpose.msra.mxu0 0.0
  %5119 = vmatpush.xpose.msra.mxu0 0.0
  %5120 = vmatpush.xpose.msra.mxu0 0.0
  %5121 = vmatpush.xpose.msra.mxu0 0.0
  %5122 = vmatpush.xpose.msra.mxu0 %v5108
  %5123 = vmatpush.xpose.msra.mxu0 %v5105
  %5124 = vmatpush.xpose.msra.mxu0 %v5102
  %5125 = vmatpush.xpose.msra.mxu0 %v5099
  %5126 = vmatmul.f32.gmra.mxu0 %v5081
  %v5127 = vpop.f32.mrf.mxu0
  %v5128 = vadd.f32 0.0, %v5127
  %5129 = vmatmul.f32.gmra.mxu0 %v5084
  %v5130 = vpop.f32.mrf.mxu0
  %v5131 = vadd.f32 0.0, %v5130
  %5132 = vmatmul.f32.gmra.mxu0 %v5087
  %v5133 = vpop.f32.mrf.mxu0
  %v5134 = vadd.f32 0.0, %v5133
  %5135 = vmatmul.f32.gmra.mxu0 %v5090
  %v5136 = vpop.f32.mrf.mxu0
  %v5137 = vadd.f32 0.0, %v5136
  %5138 = vmatmul.f32.gmra.mxu0 %v5093
  %v5139 = vpop.f32.mrf.mxu0
  %v5140 = vadd.f32 0.0, %v5139
  %5141 = vmatmul.f32.gmra.mxu0 %v5096
  %v5142 = vpop.f32.mrf.mxu0
  %v5143 = vadd.f32 0.0, %v5142
  %5144 = vdwg.mxu0
  %v5145 = vadd.f32 %v4732, %v5128
  %v5146 = vadd.f32 %v4733, %v5131
  %v5147 = vadd.f32 %v4734, %v5134
  %v5148 = vadd.f32 %v4735, %v5137
  %v5149 = vadd.f32 %v4736, %v5140
  %v5150 = vadd.f32 %v4737, %v5143
  %s5151 = scalar_lea.vmem %s5, 4
  %v5152 = vld [vmem:[%s5151] sm:$0x1]
  %v5153 = vmul.f32 %v5145, %v5145
  %v5154 = vmul.f32 %v5146, %v5146
  %v5155 = vmul.f32 %v5147, %v5147
  %v5156 = vmul.f32 %v5148, %v5148
  %v5157 = vmul.f32 %v5149, %v5149
  %v5158 = vmul.f32 %v5150, %v5150
  %v5159 = vsel %vm58, %v5153, 0.0
  %5160 = vadd.xlane.f32.xlu0 %v5159
  %v5161 = vpop.xlane.xlu0 %5160
  %v5162 = vsel %vm58, %v5154, 0.0
  %5163 = vadd.xlane.f32.xlu0 %v5162
  %v5164 = vpop.xlane.xlu0 %5163
  %v5165 = vsel %vm58, %v5155, 0.0
  %5166 = vadd.xlane.f32.xlu0 %v5165
  %v5167 = vpop.xlane.xlu0 %5166
  %v5168 = vsel %vm58, %v5156, 0.0
  %5169 = vadd.xlane.f32.xlu0 %v5168
  %v5170 = vpop.xlane.xlu0 %5169
  %v5171 = vsel %vm58, %v5157, 0.0
  %5172 = vadd.xlane.f32.xlu0 %v5171
  %v5173 = vpop.xlane.xlu0 %5172
  %v5174 = vsel %vm58, %v5158, 0.0
  %5175 = vadd.xlane.f32.xlu0 %v5174
  %v5176 = vpop.xlane.xlu0 %5175
  %v5177 = vmul.f32 %v5161, %v83
  %v5178 = vmul.f32 %v5164, %v83
  %v5179 = vmul.f32 %v5167, %v83
  %v5180 = vmul.f32 %v5170, %v83
  %v5181 = vmul.f32 %v5173, %v83
  %v5182 = vmul.f32 %v5176, %v83
  %v5183 = vadd.f32 %v5177, 1e-06
  %v5184 = vadd.f32 %v5178, 1e-06
  %v5185 = vadd.f32 %v5179, 1e-06
  %v5186 = vadd.f32 %v5180, 1e-06
  %v5187 = vadd.f32 %v5181, 1e-06
  %v5188 = vadd.f32 %v5182, 1e-06
  %v5189 = vrsqrt.pop %v5183
  %v5190 = vmul.f32 %v5189, %v5183
  %v5191 = vmul.f32 %v5190, %v5189
  %v5192 = vmul.f32 0.5, %v5191
  %v5193 = vsub.f32 1.5, %v5192
  %v5194 = vmul.f32 %v5189, %v5193
  %vm5195 = vweird.f32 %v5183
  %vm5196 = vweird.f32 %v5189
  %vm5197 = vmor %vm5195, %vm5196
  %v5198 = vsel %vm5197, %v5189, %v5194
  %v5199 = vrsqrt.pop %v5184
  %v5200 = vmul.f32 %v5199, %v5184
  %v5201 = vmul.f32 %v5200, %v5199
  %v5202 = vmul.f32 0.5, %v5201
  %v5203 = vsub.f32 1.5, %v5202
  %v5204 = vmul.f32 %v5199, %v5203
  %vm5205 = vweird.f32 %v5184
  %vm5206 = vweird.f32 %v5199
  %vm5207 = vmor %vm5205, %vm5206
  %v5208 = vsel %vm5207, %v5199, %v5204
  %v5209 = vrsqrt.pop %v5185
  %v5210 = vmul.f32 %v5209, %v5185
  %v5211 = vmul.f32 %v5210, %v5209
  %v5212 = vmul.f32 0.5, %v5211
  %v5213 = vsub.f32 1.5, %v5212
  %v5214 = vmul.f32 %v5209, %v5213
  %vm5215 = vweird.f32 %v5185
  %vm5216 = vweird.f32 %v5209
  %vm5217 = vmor %vm5215, %vm5216
  %v5218 = vsel %vm5217, %v5209, %v5214
  %v5219 = vrsqrt.pop %v5186
  %v5220 = vmul.f32 %v5219, %v5186
  %v5221 = vmul.f32 %v5220, %v5219
  %v5222 = vmul.f32 0.5, %v5221
  %v5223 = vsub.f32 1.5, %v5222
  %v5224 = vmul.f32 %v5219, %v5223
  %vm5225 = vweird.f32 %v5186
  %vm5226 = vweird.f32 %v5219
  %vm5227 = vmor %vm5225, %vm5226
  %v5228 = vsel %vm5227, %v5219, %v5224
  %v5229 = vrsqrt.pop %v5187
  %v5230 = vmul.f32 %v5229, %v5187
  %v5231 = vmul.f32 %v5230, %v5229
  %v5232 = vmul.f32 0.5, %v5231
  %v5233 = vsub.f32 1.5, %v5232
  %v5234 = vmul.f32 %v5229, %v5233
  %vm5235 = vweird.f32 %v5187
  %vm5236 = vweird.f32 %v5229
  %vm5237 = vmor %vm5235, %vm5236
  %v5238 = vsel %vm5237, %v5229, %v5234
  %v5239 = vrsqrt.pop %v5188
  %v5240 = vmul.f32 %v5239, %v5188
  %v5241 = vmul.f32 %v5240, %v5239
  %v5242 = vmul.f32 0.5, %v5241
  %v5243 = vsub.f32 1.5, %v5242
  %v5244 = vmul.f32 %v5239, %v5243
  %vm5245 = vweird.f32 %v5188
  %vm5246 = vweird.f32 %v5239
  %vm5247 = vmor %vm5245, %vm5246
  %v5248 = vsel %vm5247, %v5239, %v5244
  %v5249 = vmul.f32 %v5145, %v5198
  %v5250 = vmul.f32 %v5146, %v5208
  %v5251 = vmul.f32 %v5147, %v5218
  %v5252 = vmul.f32 %v5148, %v5228
  %v5253 = vmul.f32 %v5149, %v5238
  %v5254 = vmul.f32 %v5150, %v5248
  %v5256 = vperm.slane %v5152, 0
  %v5258 = vmul.f32 %v5249, %v5256
  %v5259 = vmul.f32 %v5250, %v5256
  %v5260 = vmul.f32 %v5251, %v5256
  %v5261 = vmul.f32 %v5252, %v5256
  %v5262 = vmul.f32 %v5253, %v5256
  %v5263 = vmul.f32 %v5254, %v5256
  %v5264 = vld [vmem:[%s6] sm:$0xff]
  %v5265 = vld [vmem:[%s6 + $0x8] sm:$0xff]
  %v5266 = vld [vmem:[%s6 + $0x10] sm:$0xff]
  %v5267 = vld [vmem:[%s6 + $0x18] sm:$0xff]
  %v5268 = vld [vmem:[%s6 + $0x20] sm:$0x1]
  %v5269 = vperm.slane %v5268, 0
  %v5271 = vsel %vm58, %v5258, 0
  %v5274 = vsel %vm58, %v5259, 0
  %v5277 = vsel %vm58, %v5260, 0
  %v5280 = vsel %vm58, %v5261, 0
  %v5283 = vsel %vm58, %v5262, 0
  %v5286 = vsel %vm58, %v5263, 0
  %5288 = vmatpush.msra.mxu0 0.0
  %5289 = vmatpush.msra.mxu0 0.0
  %5290 = vmatpush.msra.mxu0 0.0
  %5291 = vmatpush.msra.mxu0 0.0
  %5292 = vmatpush.msra.mxu0 0.0
  %5293 = vmatpush.msra.mxu0 0.0
  %5294 = vmatpush.msra.mxu0 0.0
  %5295 = vmatpush.msra.mxu0 0.0
  %5296 = vmatpush.msra.mxu0 0.0
  %5297 = vmatpush.msra.mxu0 0.0
  %5298 = vmatpush.msra.mxu0 0.0
  %5299 = vmatpush.msra.mxu0 0.0
  %5300 = vmatpush.msra.mxu0 %v5267
  %5301 = vmatpush.msra.mxu0 %v5266
  %5302 = vmatpush.msra.mxu0 %v5265
  %5303 = vmatpush.msra.mxu0 %v5264
  %5304 = vmatmul.f32.gmra.mxu0 %v5271
  %v5305 = vpop.f32.mrf.mxu0
  %v5306 = vadd.f32 %v5269, %v5305
  %5307 = vmatmul.f32.gmra.mxu0 %v5274
  %v5308 = vpop.f32.mrf.mxu0
  %v5309 = vadd.f32 %v5269, %v5308
  %5310 = vmatmul.f32.gmra.mxu0 %v5277
  %v5311 = vpop.f32.mrf.mxu0
  %v5312 = vadd.f32 %v5269, %v5311
  %5313 = vmatmul.f32.gmra.mxu0 %v5280
  %v5314 = vpop.f32.mrf.mxu0
  %v5315 = vadd.f32 %v5269, %v5314
  %5316 = vmatmul.f32.gmra.mxu0 %v5283
  %v5317 = vpop.f32.mrf.mxu0
  %v5318 = vadd.f32 %v5269, %v5317
  %5319 = vmatmul.f32.gmra.mxu0 %v5286
  %v5320 = vpop.f32.mrf.mxu0
  %v5321 = vadd.f32 %v5269, %v5320
  %5322 = vdwg.mxu0
  %5323 = vst [vmem:[%s7] sm:$0xff] %v5306
  %5324 = vst [vmem:[%s7 + $0x8] sm:$0xff] %v5309
  %5325 = vst [vmem:[%s7 + $0x10] sm:$0xff] %v5312
  %5326 = vst [vmem:[%s7 + $0x18] sm:$0xff] %v5315
  %5327 = vst [vmem:[%s7 + $0x20] sm:$0xff] %v5318
  %5328 = vst [vmem:[%s7 + $0x28] sm:$0xff] %v5321
  // Predicated region
  $region30: #{link_decoder_forward.1} parent=0 // pred_check
    _
  $region31: #{link_decoder_forward.1} parent=0 // pred_check_branch
    %5330 = sbr.rel (0) target = $region33
  $region32: #{link_decoder_forward.1} parent=0 // pred_region
    _
  $region33: #{link_decoder_forward.1} parent=0 // pred_fallthru
    _
  // Predicated region
  $region34: #{link_decoder_forward.1} parent=0 // pred_check
    _
  $region35: #{link_decoder_forward.1} parent=0 // pred_check_branch
    %5332 = sbr.rel (0) target = $region37
  $region36: #{link_decoder_forward.1} parent=0 // pred_region
    _
  $region37: #{link_decoder_forward.1} parent=0 // pred_fallthru
    _

</llo_original>
